<compile_context>
chip_gen: v5e
topology: v5e:2x2
jax: 0.10.0
libtpu: 0.0.40
codegen_flags: <defaults>
</compile_context>

<pallas_src>
import jax
import jax.numpy as jnp
import numpy as np
from jax import lax
from jax.experimental import pallas as pl
from jax.experimental.pallas import tpu as pltpu

EPS = 1e-5
_PREC = lax.Precision.HIGHEST  # keep f32 MXU contractions (PyTorch f32 parity)


def _conv_bn_relu(rows, s_cat, band_cat, pmat, gamma, beta):
    """3x3 SAME conv + train-mode BN + ReLU on a lane-dense row-slab layout.

    rows     : (NH, K) f32 -- one image row per slab row, W*C packed in lanes.
    s_cat    : (2*NH, NH)  -- [S_up; S_dn] 0/1 row-shift matrices; the image
                              top/bottom zero padding is folded in.
    band_cat : (3*K, L)    -- banded weights for the taps [center, up, down];
                              horizontal taps + zero padding along W folded in.
    pmat     : (L, L)      -- channel-gather matrix, entries 1/(N*H*W) where
                              lane channels match, 0 elsewhere.
    gamma/beta : (1, L)    -- per-channel affine, replicated across W.
    """
    nh = rows.shape[0]
    # Vertical taps via one tiny MXU matmul (no roll / iota / select):
    #   shifted[:nh] = image row h-1 (zero at h == 0)
    #   shifted[nh:] = image row h+1 (zero at h == H-1)
    shifted = jnp.dot(s_cat, rows, preferred_element_type=jnp.float32,
                      precision=_PREC)
    # One fused conv matmul: K-concatenate the three taps (lane-aligned chunks).
    lhs = jnp.concatenate([rows, shifted[:nh], shifted[nh:]], axis=1)
    acc = jnp.dot(lhs, band_cat, preferred_element_type=jnp.float32,
                  precision=_PREC)

    # One-pass BatchNorm statistics: per-lane sum & sum-of-squares (XLU column
    # reduces), then ONE tiny MXU matmul gathers over the W lane groups and
    # re-broadcasts per-channel mean / E[x^2] across all 128 lanes.
    # NOTE: E[x^2]-mean^2 is fine in f32 at these sizes; prefer a centered
    # second pass if scaling to N*H*W ~ 1e6 or if bf16 operands are introduced.
    ssum = jnp.sum(acc, axis=0, keepdims=True)
    ssq = jnp.sum(acc * acc, axis=0, keepdims=True)
    stats = jnp.dot(jnp.concatenate([ssum, ssq], axis=0), pmat,
                    preferred_element_type=jnp.float32, precision=_PREC)
    mean = stats[0:1, :]
    var = jnp.maximum(stats[1:2, :] - mean * mean, 0.0)  # biased (train-mode)

    # Fold BN affine into per-lane scale/shift on (1, L) vregs so the big slab
    # only sees 2 VPU ops/element plus the ReLU max.
    scale = gamma * lax.rsqrt(var + EPS)
    shift = beta - mean * scale
    return jnp.maximum(acc * scale + shift, 0.0)


def double_conv_kernel(x_ref, s_ref, band1_ref, band2_ref, pmat_ref,
                       g1_ref, b1_ref, g2_ref, b2_ref, o_ref):
    s_cat = s_ref[...]
    pmat = pmat_ref[...]
    y1 = _conv_bn_relu(x_ref[...], s_cat, band1_ref[...], pmat,
                       g1_ref[...], b1_ref[...])
    o_ref[...] = _conv_bn_relu(y1, s_cat, band2_ref[...], pmat,
                               g2_ref[...], b2_ref[...])


def _band_weights_cat(w_hwio, W):
    """Fold the 3 horizontal taps and padding=1 along W into banded
    (W*Cin, W*Cout) matrices, stacked along K in the LHS tap order
    [center (dh=1), up (dh=0), down (dh=2)]."""
    kh, kw, cin, cout = w_hwio.shape
    bands = []
    for dh in range(kh):
        b = jnp.zeros((W * cin, W * cout), jnp.float32)
        for dw in range(kw):
            # d[p, w] = 1 iff input column p == output column w + dw - 1;
            # out-of-range taps drop out => zero padding along W.
            d = jnp.eye(W, k=-(dw - 1), dtype=jnp.float32)
            b = b + jnp.einsum("pw,io->piwo", d, w_hwio[dh, dw]).reshape(
                W * cin, W * cout)
        bands.append(b)
    return jnp.concatenate([bands[1], bands[0], bands[2]], axis=0)  # (3K, L)


def conv_network(x_nchw, w1_oihw, g1, b1, w2_oihw, g2, b2):
    """PyTorch-layout wrapper: NCHW input, OIHW conv weights, NCHW output."""
    N, Cin, H, W = x_nchw.shape
    Cout = w1_oihw.shape[0]
    NH = N * H
    L = W * Cout

    # Pad Cin so stage-1 activations fill a full 128-lane vreg (W*Cin_pad=128)
    # and the fused conv-1 K chunks are lane-aligned (zero pad => zero effect).
    cin_pad = max(Cin, -(-128 // W))
    x_p = jnp.pad(x_nchw, ((0, 0), (0, cin_pad - Cin), (0, 0), (0, 0)))
    w1_p = jnp.pad(w1_oihw, ((0, 0), (0, cin_pad - Cin), (0, 0), (0, 0)))

    # Lane-dense activation layout: (N*H, W*Cin_pad) row slabs.
    x_rows = jnp.transpose(x_p, (0, 2, 3, 1)).reshape(NH, W * cin_pad)

    band1 = _band_weights_cat(jnp.transpose(w1_p, (2, 3, 1, 0)), W)    # (3*128, L)
    band2 = _band_weights_cat(jnp.transpose(w2_oihw, (2, 3, 1, 0)), W)  # (3*L, L)

    # Row-shift matrices for the vertical taps; image top/bottom zeros built in
    # (this also kills any cross-image contamination between batch elements).
    r = jnp.arange(NH)
    s_up = (r[:, None] - 1 == r[None, :]) & (r[:, None] % H != 0)
    s_dn = (r[:, None] + 1 == r[None, :]) & (r[:, None] % H != H - 1)
    s_cat = jnp.concatenate([s_up, s_dn], axis=0).astype(jnp.float32)  # (2NH, NH)

    # Channel-gather matrix for BN stats: averages over (N, H, W) and
    # re-broadcasts the per-channel result across the W lane groups.
    lane = jnp.arange(L)
    pmat = ((lane[:, None] % Cout) == (lane[None, :] % Cout)).astype(
        jnp.float32) / float(N * H * W)

    rep = lambda v: jnp.tile(v, W).reshape(1, L)  # per-channel -> per-lane

    vmem = pl.BlockSpec(memory_space=pltpu.MemorySpace.VMEM)
    out = pl.pallas_call(
        double_conv_kernel,
        out_shape=jax.ShapeDtypeStruct((NH, L), jnp.float32),
        in_specs=[vmem] * 9,
        out_specs=vmem,
    )(x_rows, s_cat, band1, band2, pmat, rep(g1), rep(b1), rep(g2), rep(b2))

    # TODO(synk): at real UNet sizes, add a row-slab grid ("parallel" over N*H
    # with the bands/pmat resident via constant index_maps), split BN into a
    # stats pass + normalize pass, W-tile the block-tridiagonal band matmul,
    # cast dot operands to bf16 on v6e/v7x, and set vmem_limit_bytes; at toy
    # sizes everything fits in VMEM so the gridless design is used.
    return jnp.transpose(out.reshape(N, H, W, Cout), (0, 3, 1, 2))


def ref_forward(x_nchw, w1_oihw, g1, b1, w2_oihw, g2, b2):
    """Pure-JAX reference (NCHW / OIHW, train-mode BN) for correctness check."""
    def conv(x, w):
        return lax.conv_general_dilated(
            x, w, window_strides=(1, 1), padding=((1, 1), (1, 1)),
            dimension_numbers=("NCHW", "OIHW", "NCHW"), precision=_PREC)

    def bn_relu(y, g, b):
        mean = jnp.mean(y, axis=(0, 2, 3), keepdims=True)
        var = jnp.mean((y - mean) ** 2, axis=(0, 2, 3), keepdims=True)
        yn = (y - mean) * lax.rsqrt(var + EPS)
        return jnp.maximum(yn * g.reshape(1, -1, 1, 1) + b.reshape(1, -1, 1, 1),
                           0.0)

    y = bn_relu(conv(x_nchw, w1_oihw), g1, b1)
    return bn_relu(conv(y, w2_oihw), g2, b2)


if __name__ == "__main__":
    N, H, W = 2, 16, 16
    Cin, Cout = 4, 8

    key = jax.random.PRNGKey(0)
    kx, k1, k2 = jax.random.split(key, 3)

    # PyTorch-style NCHW input, OIHW conv weights (no bias), BN gamma=1/beta=0.
    x = jax.random.normal(kx, (N, Cin, H, W), jnp.float32)
    bound1 = float(1.0 / np.sqrt(Cin * 9))
    bound2 = float(1.0 / np.sqrt(Cout * 9))
    w1 = jax.random.uniform(k1, (Cout, Cin, 3, 3), jnp.float32, -bound1, bound1)
    w2 = jax.random.uniform(k2, (Cout, Cout, 3, 3), jnp.float32, -bound2, bound2)
    g1 = jnp.ones((Cout,), jnp.float32)
    b1 = jnp.zeros((Cout,), jnp.float32)
    g2 = jnp.ones((Cout,), jnp.float32)
    b2 = jnp.zeros((Cout,), jnp.float32)

    out = jax.block_until_ready(conv_network(x, w1, g1, b1, w2, g2, b2))
    ref = ref_forward(x, w1, g1, b1, w2, g2, b2)
    np.testing.assert_allclose(np.asarray(out), np.asarray(ref),
                               rtol=2e-4, atol=2e-4)
    print("KERNEL_OK")
</pallas_src>

<mosaic_0001>
module attributes {stable_mosaic.version = 11 : i64} {
  func.func @double_conv_kernel(%arg0: memref<32x128xf32, #tpu.memory_space<vmem>>, %arg1: memref<64x32xf32, #tpu.memory_space<vmem>>, %arg2: memref<384x128xf32, #tpu.memory_space<vmem>>, %arg3: memref<384x128xf32, #tpu.memory_space<vmem>>, %arg4: memref<128x128xf32, #tpu.memory_space<vmem>>, %arg5: memref<1x128xf32, #tpu.memory_space<vmem>>, %arg6: memref<1x128xf32, #tpu.memory_space<vmem>>, %arg7: memref<1x128xf32, #tpu.memory_space<vmem>>, %arg8: memref<1x128xf32, #tpu.memory_space<vmem>>, %arg9: memref<32x128xf32, #tpu.memory_space<vmem>>) attributes {dimension_semantics = [], scalar_prefetch = 0 : i64, scratch_operands = 0 : i64, tpu.core_type = #tpu.core_type<tc>} {
    %c0 = arith.constant 0 : index
    %c0_0 = arith.constant 0 : index
    %0 = vector.load %arg1[%c0, %c0_0] : memref<64x32xf32, #tpu.memory_space<vmem>>, vector<64x32xf32>
    %c0_1 = arith.constant 0 : index
    %c0_2 = arith.constant 0 : index
    %1 = vector.load %arg4[%c0_1, %c0_2] : memref<128x128xf32, #tpu.memory_space<vmem>>, vector<128x128xf32>
    %c0_3 = arith.constant 0 : index
    %c0_4 = arith.constant 0 : index
    %2 = vector.load %arg0[%c0_3, %c0_4] : memref<32x128xf32, #tpu.memory_space<vmem>>, vector<32x128xf32>
    %c0_5 = arith.constant 0 : index
    %c0_6 = arith.constant 0 : index
    %3 = vector.load %arg2[%c0_5, %c0_6] : memref<384x128xf32, #tpu.memory_space<vmem>>, vector<384x128xf32>
    %c0_7 = arith.constant 0 : index
    %c0_8 = arith.constant 0 : index
    %4 = vector.load %arg5[%c0_7, %c0_8] : memref<1x128xf32, #tpu.memory_space<vmem>>, vector<1x128xf32>
    %c0_9 = arith.constant 0 : index
    %c0_10 = arith.constant 0 : index
    %5 = vector.load %arg6[%c0_9, %c0_10] : memref<1x128xf32, #tpu.memory_space<vmem>>, vector<1x128xf32>
    %cst = arith.constant dense<0.000000e+00> : vector<64x128xf32>
    %6 = tpu.matmul %0, %2, %cst {dimension_numbers = #tpu.dot_dimension_numbers<[1], [0], [0], [1], [0, 0, 1, 1], [], []>, precision = #tpu.contract_precision<fp32>} : vector<64x32xf32>, vector<32x128xf32>, vector<64x128xf32> -> vector<64x128xf32>
    %7 = vector.extract_strided_slice %6 {offsets = [0, 0], sizes = [32, 128], strides = [1, 1]} : vector<64x128xf32> to vector<32x128xf32>
    %8 = vector.extract_strided_slice %6 {offsets = [32, 0], sizes = [32, 128], strides = [1, 1]} : vector<64x128xf32> to vector<32x128xf32>
    %9 = tpu.concatenate %2, %7, %8 in 1 : vector<32x128xf32>, vector<32x128xf32>, vector<32x128xf32> -> vector<32x384xf32>
    %cst_11 = arith.constant dense<0.000000e+00> : vector<32x128xf32>
    %10 = tpu.matmul %9, %3, %cst_11 {dimension_numbers = #tpu.dot_dimension_numbers<[1], [0], [0], [1], [0, 0, 1, 1], [], []>, precision = #tpu.contract_precision<fp32>} : vector<32x384xf32>, vector<384x128xf32>, vector<32x128xf32> -> vector<32x128xf32>
    %cst_12 = arith.constant dense<0.000000e+00> : vector<128xf32>
    %11 = vector.multi_reduction <add>, %10, %cst_12 [0] : vector<32x128xf32> to vector<128xf32>
    %12 = vector.shape_cast %11 : vector<128xf32> to vector<1x128xf32>
    %13 = arith.mulf %10, %10 : vector<32x128xf32>
    %cst_13 = arith.constant dense<0.000000e+00> : vector<128xf32>
    %14 = vector.multi_reduction <add>, %13, %cst_13 [0] : vector<32x128xf32> to vector<128xf32>
    %15 = vector.shape_cast %14 : vector<128xf32> to vector<1x128xf32>
    %16 = tpu.concatenate %12, %15 in 0 : vector<1x128xf32>, vector<1x128xf32> -> vector<2x128xf32>
    %cst_14 = arith.constant dense<0.000000e+00> : vector<2x128xf32>
    %17 = tpu.matmul %16, %1, %cst_14 {dimension_numbers = #tpu.dot_dimension_numbers<[1], [0], [0], [1], [0, 0, 1, 1], [], []>, precision = #tpu.contract_precision<fp32>} : vector<2x128xf32>, vector<128x128xf32>, vector<2x128xf32> -> vector<2x128xf32>
    %18 = vector.extract_strided_slice %17 {offsets = [0, 0], sizes = [1, 128], strides = [1, 1]} : vector<2x128xf32> to vector<1x128xf32>
    %19 = vector.extract_strided_slice %17 {offsets = [1, 0], sizes = [1, 128], strides = [1, 1]} : vector<2x128xf32> to vector<1x128xf32>
    %20 = arith.mulf %18, %18 : vector<1x128xf32>
    %21 = arith.subf %19, %20 : vector<1x128xf32>
    %cst_15 = arith.constant 0.000000e+00 : f32
    %22 = vector.broadcast %cst_15 : f32 to vector<1x128xf32>
    %23 = arith.maximumf %21, %22 : vector<1x128xf32>
    %cst_16 = arith.constant 9.99999974E-6 : f32
    %24 = vector.broadcast %cst_16 : f32 to vector<1x128xf32>
    %25 = arith.addf %23, %24 : vector<1x128xf32>
    %26 = math.rsqrt %25 : vector<1x128xf32>
    %27 = arith.mulf %4, %26 : vector<1x128xf32>
    %28 = arith.mulf %18, %27 : vector<1x128xf32>
    %29 = arith.subf %5, %28 : vector<1x128xf32>
    %30 = vector.broadcast %27 : vector<1x128xf32> to vector<32x128xf32>
    %31 = arith.mulf %10, %30 : vector<32x128xf32>
    %32 = vector.broadcast %29 : vector<1x128xf32> to vector<32x128xf32>
    %33 = arith.addf %31, %32 : vector<32x128xf32>
    %cst_17 = arith.constant 0.000000e+00 : f32
    %34 = vector.broadcast %cst_17 : f32 to vector<32x128xf32>
    %35 = arith.maximumf %33, %34 : vector<32x128xf32>
    %c0_18 = arith.constant 0 : index
    %c0_19 = arith.constant 0 : index
    %36 = vector.load %arg3[%c0_18, %c0_19] : memref<384x128xf32, #tpu.memory_space<vmem>>, vector<384x128xf32>
    %c0_20 = arith.constant 0 : index
    %c0_21 = arith.constant 0 : index
    %37 = vector.load %arg7[%c0_20, %c0_21] : memref<1x128xf32, #tpu.memory_space<vmem>>, vector<1x128xf32>
    %c0_22 = arith.constant 0 : index
    %c0_23 = arith.constant 0 : index
    %38 = vector.load %arg8[%c0_22, %c0_23] : memref<1x128xf32, #tpu.memory_space<vmem>>, vector<1x128xf32>
    %cst_24 = arith.constant dense<0.000000e+00> : vector<64x128xf32>
    %39 = tpu.matmul %0, %35, %cst_24 {dimension_numbers = #tpu.dot_dimension_numbers<[1], [0], [0], [1], [0, 0, 1, 1], [], []>, precision = #tpu.contract_precision<fp32>} : vector<64x32xf32>, vector<32x128xf32>, vector<64x128xf32> -> vector<64x128xf32>
    %40 = vector.extract_strided_slice %39 {offsets = [0, 0], sizes = [32, 128], strides = [1, 1]} : vector<64x128xf32> to vector<32x128xf32>
    %41 = vector.extract_strided_slice %39 {offsets = [32, 0], sizes = [32, 128], strides = [1, 1]} : vector<64x128xf32> to vector<32x128xf32>
    %42 = tpu.concatenate %35, %40, %41 in 1 : vector<32x128xf32>, vector<32x128xf32>, vector<32x128xf32> -> vector<32x384xf32>
    %cst_25 = arith.constant dense<0.000000e+00> : vector<32x128xf32>
    %43 = tpu.matmul %42, %36, %cst_25 {dimension_numbers = #tpu.dot_dimension_numbers<[1], [0], [0], [1], [0, 0, 1, 1], [], []>, precision = #tpu.contract_precision<fp32>} : vector<32x384xf32>, vector<384x128xf32>, vector<32x128xf32> -> vector<32x128xf32>
    %cst_26 = arith.constant dense<0.000000e+00> : vector<128xf32>
    %44 = vector.multi_reduction <add>, %43, %cst_26 [0] : vector<32x128xf32> to vector<128xf32>
    %45 = vector.shape_cast %44 : vector<128xf32> to vector<1x128xf32>
    %46 = arith.mulf %43, %43 : vector<32x128xf32>
    %cst_27 = arith.constant dense<0.000000e+00> : vector<128xf32>
    %47 = vector.multi_reduction <add>, %46, %cst_27 [0] : vector<32x128xf32> to vector<128xf32>
    %48 = vector.shape_cast %47 : vector<128xf32> to vector<1x128xf32>
    %49 = tpu.concatenate %45, %48 in 0 : vector<1x128xf32>, vector<1x128xf32> -> vector<2x128xf32>
    %cst_28 = arith.constant dense<0.000000e+00> : vector<2x128xf32>
    %50 = tpu.matmul %49, %1, %cst_28 {dimension_numbers = #tpu.dot_dimension_numbers<[1], [0], [0], [1], [0, 0, 1, 1], [], []>, precision = #tpu.contract_precision<fp32>} : vector<2x128xf32>, vector<128x128xf32>, vector<2x128xf32> -> vector<2x128xf32>
    %51 = vector.extract_strided_slice %50 {offsets = [0, 0], sizes = [1, 128], strides = [1, 1]} : vector<2x128xf32> to vector<1x128xf32>
    %52 = vector.extract_strided_slice %50 {offsets = [1, 0], sizes = [1, 128], strides = [1, 1]} : vector<2x128xf32> to vector<1x128xf32>
    %53 = arith.mulf %51, %51 : vector<1x128xf32>
    %54 = arith.subf %52, %53 : vector<1x128xf32>
    %cst_29 = arith.constant 0.000000e+00 : f32
    %55 = vector.broadcast %cst_29 : f32 to vector<1x128xf32>
    %56 = arith.maximumf %54, %55 : vector<1x128xf32>
    %cst_30 = arith.constant 9.99999974E-6 : f32
    %57 = vector.broadcast %cst_30 : f32 to vector<1x128xf32>
    %58 = arith.addf %56, %57 : vector<1x128xf32>
    %59 = math.rsqrt %58 : vector<1x128xf32>
    %60 = arith.mulf %37, %59 : vector<1x128xf32>
    %61 = arith.mulf %51, %60 : vector<1x128xf32>
    %62 = arith.subf %38, %61 : vector<1x128xf32>
    %63 = vector.broadcast %60 : vector<1x128xf32> to vector<32x128xf32>
    %64 = arith.mulf %43, %63 : vector<32x128xf32>
    %65 = vector.broadcast %62 : vector<1x128xf32> to vector<32x128xf32>
    %66 = arith.addf %64, %65 : vector<32x128xf32>
    %cst_31 = arith.constant 0.000000e+00 : f32
    %67 = vector.broadcast %cst_31 : f32 to vector<32x128xf32>
    %68 = arith.maximumf %66, %67 : vector<32x128xf32>
    %c0_32 = arith.constant 0 : index
    %c0_33 = arith.constant 0 : index
    %69 = vector.load %arg9[%c0_32, %c0_33] : memref<32x128xf32, #tpu.memory_space<vmem>>, vector<32x128xf32>
    tpu.vector_store %arg9[%c0_32, %c0_33], %68 {strides = array<i32>} : memref<32x128xf32, #tpu.memory_space<vmem>>, vector<32x128xf32>,
    return
  }
}

</mosaic_0001>

<llo_original>
// kernel: tpu_custom_call.1
$region0: #{tpu_custom_call.1}
  #allocation0 [shape = 'u32[]', space=smem, size = 0x4, offset = 0x4, fixed_abs, tag = 'smem constant byte address 0x4 - core index']
  #allocation1 [shape = 'u32[72,128]{1,0:T(1,128)}', space=vmem, size = 0x9000, scoped, tag = 'internal scratch']
  %s0 = inlined_call_operand.vmem [shape: f32[32,128], index: 0, kind: input, shape index: {}]
  %s1 = inlined_call_operand.vmem [shape: f32[64,32], index: 1, kind: input, shape index: {}]
  %s2 = inlined_call_operand.hbm [shape: f32[384,128], index: 2, kind: input, shape index: {}]
  %s3 = inlined_call_operand.hbm [shape: f32[384,128], index: 3, kind: input, shape index: {}]
  %s4 = inlined_call_operand.hbm [shape: f32[128,128], index: 4, kind: input, shape index: {}]
  %s5 = inlined_call_operand.vmem [shape: f32[1,128], index: 5, kind: input, shape index: {}]
  %s6 = inlined_call_operand.vmem [shape: f32[1,128], index: 6, kind: input, shape index: {}]
  %s7 = inlined_call_operand.vmem [shape: f32[1,128], index: 7, kind: input, shape index: {}]
  %s8 = inlined_call_operand.vmem [shape: f32[1,128], index: 8, kind: input, shape index: {}]
  %s9 = inlined_call_operand.hbm [shape: f32[32,128], index: 9, kind: output, shape index: {}]
  %s10 = sld [smem:[#allocation0]]
  $region58: #{tpu_custom_call.1} parent=0
    _
  %s12 = ssub.s32 1, %s10
  %s13 = scalar_select 0, %s12, %s10
  $region1: #{tpu_custom_call.1} parent=0
    #allocation2 [shape = 'u8[196608]{0}', space=vmem, size = 0x30000, scoped, tag = 'input window, operand 2, single buffered']
    #allocation3 [shape = 's32[1]{0}', space=sflag, size = 0x4, scoped, tag = 'scoped memory for tpu_custom_call.1']
    #allocation4 [shape = 's32[1]{0}', space=sflag, size = 0x4, scoped, tag = 'scoped memory for tpu_custom_call.1']
    #allocation5 [shape = 'u8[196608]{0}', space=vmem, size = 0x30000, scoped, tag = 'input window, operand 3, single buffered']
    #allocation6 [shape = 's32[1]{0}', space=sflag, size = 0x4, scoped, tag = 'scoped memory for tpu_custom_call.1']
    #allocation7 [shape = 'u8[65536]{0}', space=vmem, size = 0x10000, scoped, tag = 'input window, operand 4, single buffered']
    #allocation8 [shape = 'u8[16384]{0}', space=vmem, size = 0x4000, scoped, tag = 'output window, operand 0, single buffered']
    %14 = vsyncpa [#allocation3], 0
    %15 = vsyncpa [#allocation6], 0
    %16 = vsyncpa [#allocation4], 0
    // Predicated region
    $region2: #{tpu_custom_call.1} parent=1 // pred_check
      _
    $region3: #{tpu_custom_call.1} parent=1 // pred_check_branch
      %18 = sbr.rel (0) target = $region5
    $region4: #{tpu_custom_call.1} parent=1 // pred_region
      _
    $region5: #{tpu_custom_call.1} parent=1 // pred_fallthru
      _
    // Predicated region
    $region6: #{tpu_custom_call.1} parent=1 // pred_check
      _
    $region7: #{tpu_custom_call.1} parent=1 // pred_check_branch
      %20 = sbr.rel (0) target = $region9
    $region8: #{tpu_custom_call.1} parent=1 // pred_region
      _
    $region9: #{tpu_custom_call.1} parent=1 // pred_fallthru
      _
    // Predicated region
    $region10: #{tpu_custom_call.1} parent=1 // pred_check
      _
    $region11: #{tpu_custom_call.1} parent=1 // pred_check_branch
      %22 = sbr.rel (0) target = $region13
    $region12: #{tpu_custom_call.1} parent=1 // pred_region
      %24 = vsyncadd [#allocation3], 0
      %s25 = sshll.u32 %s2, 4
      %s26 = int_to_ptr.hbm [resolvable:$true] %s25
      %s27 = sshll.u32 [#allocation2], 4
      %s28 = int_to_ptr.vmem [resolvable:$true] %s27
      %33 = dma.hbm_to_vmem [thread:$0]  %s26, 6144, %s28, [#allocation3], 128, 128, 8
    $region13: #{tpu_custom_call.1} parent=1 // pred_fallthru
      _
    // Predicated region
    $region14: #{tpu_custom_call.1} parent=1 // pred_check
      _
    $region15: #{tpu_custom_call.1} parent=1 // pred_check_branch
      %35 = sbr.rel (0) target = $region17
    $region16: #{tpu_custom_call.1} parent=1 // pred_region
      %37 = vsyncadd [#allocation6], 0
      %s38 = sshll.u32 %s3, 4
      %s39 = int_to_ptr.hbm [resolvable:$true] %s38
      %s40 = sshll.u32 [#allocation5], 4
      %s41 = int_to_ptr.vmem [resolvable:$true] %s40
      %46 = dma.hbm_to_vmem [thread:$0]  %s39, 6144, %s41, [#allocation6], 128, 128, 8
    $region17: #{tpu_custom_call.1} parent=1 // pred_fallthru
      _
    // Predicated region
    $region18: #{tpu_custom_call.1} parent=1 // pred_check
      _
    $region19: #{tpu_custom_call.1} parent=1 // pred_check_branch
      %48 = sbr.rel (0) target = $region21
    $region20: #{tpu_custom_call.1} parent=1 // pred_region
      %50 = vsyncadd [#allocation6], 0
      %s51 = sshll.u32 %s4, 4
      %s52 = int_to_ptr.hbm [resolvable:$true] %s51
      %s53 = sshll.u32 [#allocation7], 4
      %s54 = int_to_ptr.vmem [resolvable:$true] %s53
      %59 = dma.hbm_to_vmem [thread:$0]  %s52, 2048, %s54, [#allocation6], 128, 128, 8
    $region21: #{tpu_custom_call.1} parent=1 // pred_fallthru
      _
    // Predicated region
    $region22: #{tpu_custom_call.1} parent=1 // pred_check
      _
    $region23: #{tpu_custom_call.1} parent=1 // pred_check_branch
      %61 = sbr.rel (0) target = $region25
    $region24: #{tpu_custom_call.1} parent=1 // pred_region
      _
    $region25: #{tpu_custom_call.1} parent=1 // pred_fallthru
      _
    // Predicated region
    $region26: #{tpu_custom_call.1} parent=1 // pred_check
      _
    $region27: #{tpu_custom_call.1} parent=1 // pred_check_branch
      %63 = sbr.rel (0) target = $region29
    $region28: #{tpu_custom_call.1} parent=1 // pred_region
      _
    $region29: #{tpu_custom_call.1} parent=1 // pred_fallthru
      _
    // Predicated region
    $region30: #{tpu_custom_call.1} parent=1 // pred_check
      _
    $region31: #{tpu_custom_call.1} parent=1 // pred_check_branch
      %65 = sbr.rel (0) target = $region33
    $region32: #{tpu_custom_call.1} parent=1 // pred_region
      _
    $region33: #{tpu_custom_call.1} parent=1 // pred_fallthru
      _
    // Predicated region
    $region34: #{tpu_custom_call.1} parent=1 // pred_check
      _
    $region35: #{tpu_custom_call.1} parent=1 // pred_check_branch
      %67 = sbr.rel (0) target = $region37
    $region36: #{tpu_custom_call.1} parent=1 // pred_region
      _
    $region37: #{tpu_custom_call.1} parent=1 // pred_fallthru
      _
    // Predicated region
    $region38: #{tpu_custom_call.1} parent=1 // pred_check
      _
    $region39: #{tpu_custom_call.1} parent=1 // pred_check_branch
      %69 = sbr.rel (0) target = $region41
    $region40: #{tpu_custom_call.1} parent=1 // pred_region
      %71 = dma.done [#allocation3], 6144
    $region41: #{tpu_custom_call.1} parent=1 // pred_fallthru
      _
    // Predicated region
    $region42: #{tpu_custom_call.1} parent=1 // pred_check
      _
    $region43: #{tpu_custom_call.1} parent=1 // pred_check_branch
      %73 = sbr.rel (0) target = $region45
    $region44: #{tpu_custom_call.1} parent=1 // pred_region
      %75 = dma.done [#allocation6], 6144
    $region45: #{tpu_custom_call.1} parent=1 // pred_fallthru
      _
    // Predicated region
    $region46: #{tpu_custom_call.1} parent=1 // pred_check
      _
    $region47: #{tpu_custom_call.1} parent=1 // pred_check_branch
      %77 = sbr.rel (0) target = $region49
    $region48: #{tpu_custom_call.1} parent=1 // pred_region
      %79 = dma.done [#allocation6], 2048
    $region49: #{tpu_custom_call.1} parent=1 // pred_fallthru
      _
    %v80 = vld [vmem:[%s1] sm:$0xff]
    %v81 = vld [vmem:[%s1 + $0x8] sm:$0xff]
    %v82 = vld [vmem:[%s1 + $0x10] sm:$0xff]
    %v83 = vld [vmem:[%s1 + $0x18] sm:$0xff]
    %v84 = vld [vmem:[%s1 + $0x20] sm:$0xff]
    %v85 = vld [vmem:[%s1 + $0x28] sm:$0xff]
    %v86 = vld [vmem:[%s1 + $0x30] sm:$0xff]
    %v87 = vld [vmem:[%s1 + $0x38] sm:$0xff]
    %v88 = vld [vmem:[#allocation7] sm:$0xff]
    %v89 = vld [vmem:[#allocation7 + $0x8] sm:$0xff]
    %v90 = vld [vmem:[#allocation7 + $0x10] sm:$0xff]
    %v91 = vld [vmem:[#allocation7 + $0x18] sm:$0xff]
    %v92 = vld [vmem:[#allocation7 + $0x20] sm:$0xff]
    %v93 = vld [vmem:[#allocation7 + $0x28] sm:$0xff]
    %v94 = vld [vmem:[#allocation7 + $0x30] sm:$0xff]
    %v95 = vld [vmem:[#allocation7 + $0x38] sm:$0xff]
    %v96 = vld [vmem:[#allocation7 + $0x40] sm:$0xff]
    %v97 = vld [vmem:[#allocation7 + $0x48] sm:$0xff]
    %v98 = vld [vmem:[#allocation7 + $0x50] sm:$0xff]
    %v99 = vld [vmem:[#allocation7 + $0x58] sm:$0xff]
    %v100 = vld [vmem:[#allocation7 + $0x60] sm:$0xff]
    %v101 = vld [vmem:[#allocation7 + $0x68] sm:$0xff]
    %v102 = vld [vmem:[#allocation7 + $0x70] sm:$0xff]
    %v103 = vld [vmem:[#allocation7 + $0x78] sm:$0xff]
    %v104 = vld [vmem:[%s0] sm:$0xff]
    %v105 = vld [vmem:[%s0 + $0x8] sm:$0xff]
    %v106 = vld [vmem:[%s0 + $0x10] sm:$0xff]
    %v107 = vld [vmem:[%s0 + $0x18] sm:$0xff]
    %v108 = vld [vmem:[#allocation2] sm:$0xff]
    %v109 = vld [vmem:[#allocation2 + $0x8] sm:$0xff]
    %v110 = vld [vmem:[#allocation2 + $0x10] sm:$0xff]
    %v111 = vld [vmem:[#allocation2 + $0x18] sm:$0xff]
    %v112 = vld [vmem:[#allocation2 + $0x20] sm:$0xff]
    %v113 = vld [vmem:[#allocation2 + $0x28] sm:$0xff]
    %v114 = vld [vmem:[#allocation2 + $0x30] sm:$0xff]
    %v115 = vld [vmem:[#allocation2 + $0x38] sm:$0xff]
    %v116 = vld [vmem:[#allocation2 + $0x40] sm:$0xff]
    %v117 = vld [vmem:[#allocation2 + $0x48] sm:$0xff]
    %v118 = vld [vmem:[#allocation2 + $0x50] sm:$0xff]
    %v119 = vld [vmem:[#allocation2 + $0x58] sm:$0xff]
    %v120 = vld [vmem:[#allocation2 + $0x60] sm:$0xff]
    %v121 = vld [vmem:[#allocation2 + $0x68] sm:$0xff]
    %v122 = vld [vmem:[#allocation2 + $0x70] sm:$0xff]
    %v123 = vld [vmem:[#allocation2 + $0x78] sm:$0xff]
    %v124 = vld [vmem:[#allocation2 + $0x80] sm:$0xff]
    %v125 = vld [vmem:[#allocation2 + $0x88] sm:$0xff]
    %v126 = vld [vmem:[#allocation2 + $0x90] sm:$0xff]
    %v127 = vld [vmem:[#allocation2 + $0x98] sm:$0xff]
    %v128 = vld [vmem:[#allocation2 + $0xa0] sm:$0xff]
    %v129 = vld [vmem:[#allocation2 + $0xa8] sm:$0xff]
    %v130 = vld [vmem:[#allocation2 + $0xb0] sm:$0xff]
    %v131 = vld [vmem:[#allocation2 + $0xb8] sm:$0xff]
    %v132 = vld [vmem:[#allocation2 + $0xc0] sm:$0xff]
    %v133 = vld [vmem:[#allocation2 + $0xc8] sm:$0xff]
    %v134 = vld [vmem:[#allocation2 + $0xd0] sm:$0xff]
    %v135 = vld [vmem:[#allocation2 + $0xd8] sm:$0xff]
    %v136 = vld [vmem:[#allocation2 + $0xe0] sm:$0xff]
    %v137 = vld [vmem:[#allocation2 + $0xe8] sm:$0xff]
    %v138 = vld [vmem:[#allocation2 + $0xf0] sm:$0xff]
    %v139 = vld [vmem:[#allocation2 + $0xf8] sm:$0xff]
    %v140 = vld [vmem:[#allocation2 + $0x100] sm:$0xff]
    %v141 = vld [vmem:[#allocation2 + $0x108] sm:$0xff]
    %v142 = vld [vmem:[#allocation2 + $0x110] sm:$0xff]
    %v143 = vld [vmem:[#allocation2 + $0x118] sm:$0xff]
    %v144 = vld [vmem:[#allocation2 + $0x120] sm:$0xff]
    %v145 = vld [vmem:[#allocation2 + $0x128] sm:$0xff]
    %v146 = vld [vmem:[#allocation2 + $0x130] sm:$0xff]
    %v147 = vld [vmem:[#allocation2 + $0x138] sm:$0xff]
    %v148 = vld [vmem:[#allocation2 + $0x140] sm:$0xff]
    %v149 = vld [vmem:[#allocation2 + $0x148] sm:$0xff]
    %v150 = vld [vmem:[#allocation2 + $0x150] sm:$0xff]
    %v151 = vld [vmem:[#allocation2 + $0x158] sm:$0xff]
    %v152 = vld [vmem:[#allocation2 + $0x160] sm:$0xff]
    %v153 = vld [vmem:[#allocation2 + $0x168] sm:$0xff]
    %v154 = vld [vmem:[#allocation2 + $0x170] sm:$0xff]
    %v155 = vld [vmem:[#allocation2 + $0x178] sm:$0xff]
    %v156 = vld [vmem:[%s5] sm:$0x1]
    %v157 = vld [vmem:[%s6] sm:$0x1]
    %vm158 = vcmask 261120
    %v160 = vsel %vm158, %v80, 0
    %v163 = vsel %vm158, %v81, 0
    %v166 = vsel %vm158, %v82, 0
    %v169 = vsel %vm158, %v83, 0
    %v172 = vsel %vm158, %v84, 0
    %v175 = vsel %vm158, %v85, 0
    %v178 = vsel %vm158, %v86, 0
    %v181 = vsel %vm158, %v87, 0
    %183 = vmatpush.msra.mxu0 0.0
    %184 = vmatpush.msra.mxu0 0.0
    %185 = vmatpush.msra.mxu0 0.0
    %186 = vmatpush.msra.mxu0 0.0
    %187 = vmatpush.msra.mxu0 0.0
    %188 = vmatpush.msra.mxu0 0.0
    %189 = vmatpush.msra.mxu0 0.0
    %190 = vmatpush.msra.mxu0 0.0
    %191 = vmatpush.msra.mxu0 0.0
    %192 = vmatpush.msra.mxu0 0.0
    %193 = vmatpush.msra.mxu0 0.0
    %194 = vmatpush.msra.mxu0 0.0
    %v195 = vand.u32 %v107, 4294901760
    %196 = vmatpush.msra.mxu0 %v195
    %v197 = vand.u32 %v106, 4294901760
    %198 = vmatpush.msra.mxu0 %v197
    %v199 = vand.u32 %v105, 4294901760
    %200 = vmatpush.msra.mxu0 %v199
    %v201 = vand.u32 %v104, 4294901760
    %202 = vmatpush.msra.mxu0 %v201
    %v203 = vand.u32 %v160, 4294901760
    %v204 = vsub.f32 %v160, %v203
    %v205 = vand.u32 %v204, 4294901760
    %v206 = vsub.f32 %v204, %v205
    %v207 = vand.u32 %v206, 4294901760
    %208 = vmatmul.f32.gmra.mxu0 %v207
    %v209 = vpop.f32.mrf.mxu0
    %v210 = vadd.f32 0.0, %v209
    %v211 = vand.u32 %v163, 4294901760
    %v212 = vsub.f32 %v163, %v211
    %v213 = vand.u32 %v212, 4294901760
    %v214 = vsub.f32 %v212, %v213
    %v215 = vand.u32 %v214, 4294901760
    %216 = vmatmul.f32.gmra.mxu0 %v215
    %v217 = vpop.f32.mrf.mxu0
    %v218 = vadd.f32 0.0, %v217
    %v219 = vand.u32 %v166, 4294901760
    %v220 = vsub.f32 %v166, %v219
    %v221 = vand.u32 %v220, 4294901760
    %v222 = vsub.f32 %v220, %v221
    %v223 = vand.u32 %v222, 4294901760
    %224 = vmatmul.f32.gmra.mxu0 %v223
    %v225 = vpop.f32.mrf.mxu0
    %v226 = vadd.f32 0.0, %v225
    %v227 = vand.u32 %v169, 4294901760
    %v228 = vsub.f32 %v169, %v227
    %v229 = vand.u32 %v228, 4294901760
    %v230 = vsub.f32 %v228, %v229
    %v231 = vand.u32 %v230, 4294901760
    %232 = vmatmul.f32.gmra.mxu0 %v231
    %v233 = vpop.f32.mrf.mxu0
    %v234 = vadd.f32 0.0, %v233
    %v235 = vand.u32 %v172, 4294901760
    %v236 = vsub.f32 %v172, %v235
    %v237 = vand.u32 %v236, 4294901760
    %v238 = vsub.f32 %v236, %v237
    %v239 = vand.u32 %v238, 4294901760
    %240 = vmatmul.f32.gmra.mxu0 %v239
    %v241 = vpop.f32.mrf.mxu0
    %v242 = vadd.f32 0.0, %v241
    %v243 = vand.u32 %v175, 4294901760
    %v244 = vsub.f32 %v175, %v243
    %v245 = vand.u32 %v244, 4294901760
    %v246 = vsub.f32 %v244, %v245
    %v247 = vand.u32 %v246, 4294901760
    %248 = vmatmul.f32.gmra.mxu0 %v247
    %v249 = vpop.f32.mrf.mxu0
    %v250 = vadd.f32 0.0, %v249
    %v251 = vand.u32 %v178, 4294901760
    %v252 = vsub.f32 %v178, %v251
    %v253 = vand.u32 %v252, 4294901760
    %v254 = vsub.f32 %v252, %v253
    %v255 = vand.u32 %v254, 4294901760
    %256 = vmatmul.f32.gmra.mxu0 %v255
    %v257 = vpop.f32.mrf.mxu0
    %v258 = vadd.f32 0.0, %v257
    %v259 = vand.u32 %v181, 4294901760
    %v260 = vsub.f32 %v181, %v259
    %v261 = vand.u32 %v260, 4294901760
    %v262 = vsub.f32 %v260, %v261
    %v263 = vand.u32 %v262, 4294901760
    %264 = vmatmul.f32.gmra.mxu0 %v263
    %v265 = vpop.f32.mrf.mxu0
    %v266 = vadd.f32 0.0, %v265
    %267 = vdwg.mxu0
    %268 = vmatpush.msra.mxu0 0.0
    %269 = vmatpush.msra.mxu0 0.0
    %270 = vmatpush.msra.mxu0 0.0
    %271 = vmatpush.msra.mxu0 0.0
    %272 = vmatpush.msra.mxu0 0.0
    %273 = vmatpush.msra.mxu0 0.0
    %274 = vmatpush.msra.mxu0 0.0
    %275 = vmatpush.msra.mxu0 0.0
    %276 = vmatpush.msra.mxu0 0.0
    %277 = vmatpush.msra.mxu0 0.0
    %278 = vmatpush.msra.mxu0 0.0
    %279 = vmatpush.msra.mxu0 0.0
    %v280 = vand.u32 %v107, 4294901760
    %v281 = vsub.f32 %v107, %v280
    %v282 = vand.u32 %v281, 4294901760
    %v283 = vsub.f32 %v281, %v282
    %v284 = vand.u32 %v283, 4294901760
    %285 = vmatpush.msra.mxu0 %v284
    %v286 = vand.u32 %v106, 4294901760
    %v287 = vsub.f32 %v106, %v286
    %v288 = vand.u32 %v287, 4294901760
    %v289 = vsub.f32 %v287, %v288
    %v290 = vand.u32 %v289, 4294901760
    %291 = vmatpush.msra.mxu0 %v290
    %v292 = vand.u32 %v105, 4294901760
    %v293 = vsub.f32 %v105, %v292
    %v294 = vand.u32 %v293, 4294901760
    %v295 = vsub.f32 %v293, %v294
    %v296 = vand.u32 %v295, 4294901760
    %297 = vmatpush.msra.mxu0 %v296
    %v298 = vand.u32 %v104, 4294901760
    %v299 = vsub.f32 %v104, %v298
    %v300 = vand.u32 %v299, 4294901760
    %v301 = vsub.f32 %v299, %v300
    %v302 = vand.u32 %v301, 4294901760
    %303 = vmatpush.msra.mxu0 %v302
    %v304 = vand.u32 %v160, 4294901760
    %305 = vmatmul.f32.gmra.mxu0 %v304
    %v306 = vpop.f32.mrf.mxu0
    %v307 = vadd.f32 %v210, %v306
    %v308 = vand.u32 %v163, 4294901760
    %309 = vmatmul.f32.gmra.mxu0 %v308
    %v310 = vpop.f32.mrf.mxu0
    %v311 = vadd.f32 %v218, %v310
    %v312 = vand.u32 %v166, 4294901760
    %313 = vmatmul.f32.gmra.mxu0 %v312
    %v314 = vpop.f32.mrf.mxu0
    %v315 = vadd.f32 %v226, %v314
    %v316 = vand.u32 %v169, 4294901760
    %317 = vmatmul.f32.gmra.mxu0 %v316
    %v318 = vpop.f32.mrf.mxu0
    %v319 = vadd.f32 %v234, %v318
    %v320 = vand.u32 %v172, 4294901760
    %321 = vmatmul.f32.gmra.mxu0 %v320
    %v322 = vpop.f32.mrf.mxu0
    %v323 = vadd.f32 %v242, %v322
    %v324 = vand.u32 %v175, 4294901760
    %325 = vmatmul.f32.gmra.mxu0 %v324
    %v326 = vpop.f32.mrf.mxu0
    %v327 = vadd.f32 %v250, %v326
    %v328 = vand.u32 %v178, 4294901760
    %329 = vmatmul.f32.gmra.mxu0 %v328
    %v330 = vpop.f32.mrf.mxu0
    %v331 = vadd.f32 %v258, %v330
    %v332 = vand.u32 %v181, 4294901760
    %333 = vmatmul.f32.gmra.mxu0 %v332
    %v334 = vpop.f32.mrf.mxu0
    %v335 = vadd.f32 %v266, %v334
    %336 = vdwg.mxu0
    %337 = vmatpush.msra.mxu0 0.0
    %338 = vmatpush.msra.mxu0 0.0
    %339 = vmatpush.msra.mxu0 0.0
    %340 = vmatpush.msra.mxu0 0.0
    %341 = vmatpush.msra.mxu0 0.0
    %342 = vmatpush.msra.mxu0 0.0
    %343 = vmatpush.msra.mxu0 0.0
    %344 = vmatpush.msra.mxu0 0.0
    %345 = vmatpush.msra.mxu0 0.0
    %346 = vmatpush.msra.mxu0 0.0
    %347 = vmatpush.msra.mxu0 0.0
    %348 = vmatpush.msra.mxu0 0.0
    %v349 = vand.u32 %v107, 4294901760
    %v350 = vsub.f32 %v107, %v349
    %351 = vmatpush.msra.mxu0 %v350
    %v352 = vand.u32 %v106, 4294901760
    %v353 = vsub.f32 %v106, %v352
    %354 = vmatpush.msra.mxu0 %v353
    %v355 = vand.u32 %v105, 4294901760
    %v356 = vsub.f32 %v105, %v355
    %357 = vmatpush.msra.mxu0 %v356
    %v358 = vand.u32 %v104, 4294901760
    %v359 = vsub.f32 %v104, %v358
    %360 = vmatpush.msra.mxu0 %v359
    %v361 = vand.u32 %v160, 4294901760
    %v362 = vsub.f32 %v160, %v361
    %363 = vmatmul.f32.gmra.mxu0 %v362
    %v364 = vpop.f32.mrf.mxu0
    %v365 = vadd.f32 %v307, %v364
    %v366 = vand.u32 %v163, 4294901760
    %v367 = vsub.f32 %v163, %v366
    %368 = vmatmul.f32.gmra.mxu0 %v367
    %v369 = vpop.f32.mrf.mxu0
    %v370 = vadd.f32 %v311, %v369
    %v371 = vand.u32 %v166, 4294901760
    %v372 = vsub.f32 %v166, %v371
    %373 = vmatmul.f32.gmra.mxu0 %v372
    %v374 = vpop.f32.mrf.mxu0
    %v375 = vadd.f32 %v315, %v374
    %v376 = vand.u32 %v169, 4294901760
    %v377 = vsub.f32 %v169, %v376
    %378 = vmatmul.f32.gmra.mxu0 %v377
    %v379 = vpop.f32.mrf.mxu0
    %v380 = vadd.f32 %v319, %v379
    %v381 = vand.u32 %v172, 4294901760
    %v382 = vsub.f32 %v172, %v381
    %383 = vmatmul.f32.gmra.mxu0 %v382
    %v384 = vpop.f32.mrf.mxu0
    %v385 = vadd.f32 %v323, %v384
    %v386 = vand.u32 %v175, 4294901760
    %v387 = vsub.f32 %v175, %v386
    %388 = vmatmul.f32.gmra.mxu0 %v387
    %v389 = vpop.f32.mrf.mxu0
    %v390 = vadd.f32 %v327, %v389
    %v391 = vand.u32 %v178, 4294901760
    %v392 = vsub.f32 %v178, %v391
    %393 = vmatmul.f32.gmra.mxu0 %v392
    %v394 = vpop.f32.mrf.mxu0
    %v395 = vadd.f32 %v331, %v394
    %v396 = vand.u32 %v181, 4294901760
    %v397 = vsub.f32 %v181, %v396
    %398 = vmatmul.f32.gmra.mxu0 %v397
    %v399 = vpop.f32.mrf.mxu0
    %v400 = vadd.f32 %v335, %v399
    %401 = vdwg.mxu0
    %402 = vmatpush.msra.mxu0 0.0
    %403 = vmatpush.msra.mxu0 0.0
    %404 = vmatpush.msra.mxu0 0.0
    %405 = vmatpush.msra.mxu0 0.0
    %406 = vmatpush.msra.mxu0 0.0
    %407 = vmatpush.msra.mxu0 0.0
    %408 = vmatpush.msra.mxu0 0.0
    %409 = vmatpush.msra.mxu0 0.0
    %410 = vmatpush.msra.mxu0 0.0
    %411 = vmatpush.msra.mxu0 0.0
    %412 = vmatpush.msra.mxu0 0.0
    %413 = vmatpush.msra.mxu0 0.0
    %v414 = vand.u32 %v107, 4294901760
    %415 = vmatpush.msra.mxu0 %v414
    %v416 = vand.u32 %v106, 4294901760
    %417 = vmatpush.msra.mxu0 %v416
    %v418 = vand.u32 %v105, 4294901760
    %419 = vmatpush.msra.mxu0 %v418
    %v420 = vand.u32 %v104, 4294901760
    %421 = vmatpush.msra.mxu0 %v420
    %v422 = vand.u32 %v160, 4294901760
    %v423 = vsub.f32 %v160, %v422
    %v424 = vand.u32 %v423, 4294901760
    %425 = vmatmul.f32.gmra.mxu0 %v424
    %v426 = vpop.f32.mrf.mxu0
    %v427 = vadd.f32 %v365, %v426
    %v428 = vand.u32 %v163, 4294901760
    %v429 = vsub.f32 %v163, %v428
    %v430 = vand.u32 %v429, 4294901760
    %431 = vmatmul.f32.gmra.mxu0 %v430
    %v432 = vpop.f32.mrf.mxu0
    %v433 = vadd.f32 %v370, %v432
    %v434 = vand.u32 %v166, 4294901760
    %v435 = vsub.f32 %v166, %v434
    %v436 = vand.u32 %v435, 4294901760
    %437 = vmatmul.f32.gmra.mxu0 %v436
    %v438 = vpop.f32.mrf.mxu0
    %v439 = vadd.f32 %v375, %v438
    %v440 = vand.u32 %v169, 4294901760
    %v441 = vsub.f32 %v169, %v440
    %v442 = vand.u32 %v441, 4294901760
    %443 = vmatmul.f32.gmra.mxu0 %v442
    %v444 = vpop.f32.mrf.mxu0
    %v445 = vadd.f32 %v380, %v444
    %v446 = vand.u32 %v172, 4294901760
    %v447 = vsub.f32 %v172, %v446
    %v448 = vand.u32 %v447, 4294901760
    %449 = vmatmul.f32.gmra.mxu0 %v448
    %v450 = vpop.f32.mrf.mxu0
    %v451 = vadd.f32 %v385, %v450
    %v452 = vand.u32 %v175, 4294901760
    %v453 = vsub.f32 %v175, %v452
    %v454 = vand.u32 %v453, 4294901760
    %455 = vmatmul.f32.gmra.mxu0 %v454
    %v456 = vpop.f32.mrf.mxu0
    %v457 = vadd.f32 %v390, %v456
    %v458 = vand.u32 %v178, 4294901760
    %v459 = vsub.f32 %v178, %v458
    %v460 = vand.u32 %v459, 4294901760
    %461 = vmatmul.f32.gmra.mxu0 %v460
    %v462 = vpop.f32.mrf.mxu0
    %v463 = vadd.f32 %v395, %v462
    %v464 = vand.u32 %v181, 4294901760
    %v465 = vsub.f32 %v181, %v464
    %v466 = vand.u32 %v465, 4294901760
    %467 = vmatmul.f32.gmra.mxu0 %v466
    %v468 = vpop.f32.mrf.mxu0
    %v469 = vadd.f32 %v400, %v468
    %470 = vdwg.mxu0
    %471 = vmatpush.msra.mxu0 0.0
    %472 = vmatpush.msra.mxu0 0.0
    %473 = vmatpush.msra.mxu0 0.0
    %474 = vmatpush.msra.mxu0 0.0
    %475 = vmatpush.msra.mxu0 0.0
    %476 = vmatpush.msra.mxu0 0.0
    %477 = vmatpush.msra.mxu0 0.0
    %478 = vmatpush.msra.mxu0 0.0
    %479 = vmatpush.msra.mxu0 0.0
    %480 = vmatpush.msra.mxu0 0.0
    %481 = vmatpush.msra.mxu0 0.0
    %482 = vmatpush.msra.mxu0 0.0
    %v483 = vand.u32 %v107, 4294901760
    %v484 = vsub.f32 %v107, %v483
    %v485 = vand.u32 %v484, 4294901760
    %486 = vmatpush.msra.mxu0 %v485
    %v487 = vand.u32 %v106, 4294901760
    %v488 = vsub.f32 %v106, %v487
    %v489 = vand.u32 %v488, 4294901760
    %490 = vmatpush.msra.mxu0 %v489
    %v491 = vand.u32 %v105, 4294901760
    %v492 = vsub.f32 %v105, %v491
    %v493 = vand.u32 %v492, 4294901760
    %494 = vmatpush.msra.mxu0 %v493
    %v495 = vand.u32 %v104, 4294901760
    %v496 = vsub.f32 %v104, %v495
    %v497 = vand.u32 %v496, 4294901760
    %498 = vmatpush.msra.mxu0 %v497
    %v499 = vand.u32 %v160, 4294901760
    %500 = vmatmul.f32.gmra.mxu0 %v499
    %v501 = vpop.f32.mrf.mxu0
    %v502 = vadd.f32 %v427, %v501
    %v503 = vand.u32 %v163, 4294901760
    %504 = vmatmul.f32.gmra.mxu0 %v503
    %v505 = vpop.f32.mrf.mxu0
    %v506 = vadd.f32 %v433, %v505
    %v507 = vand.u32 %v166, 4294901760
    %508 = vmatmul.f32.gmra.mxu0 %v507
    %v509 = vpop.f32.mrf.mxu0
    %v510 = vadd.f32 %v439, %v509
    %v511 = vand.u32 %v169, 4294901760
    %512 = vmatmul.f32.gmra.mxu0 %v511
    %v513 = vpop.f32.mrf.mxu0
    %v514 = vadd.f32 %v445, %v513
    %v515 = vand.u32 %v172, 4294901760
    %516 = vmatmul.f32.gmra.mxu0 %v515
    %v517 = vpop.f32.mrf.mxu0
    %v518 = vadd.f32 %v451, %v517
    %v519 = vand.u32 %v175, 4294901760
    %520 = vmatmul.f32.gmra.mxu0 %v519
    %v521 = vpop.f32.mrf.mxu0
    %v522 = vadd.f32 %v457, %v521
    %v523 = vand.u32 %v178, 4294901760
    %524 = vmatmul.f32.gmra.mxu0 %v523
    %v525 = vpop.f32.mrf.mxu0
    %v526 = vadd.f32 %v463, %v525
    %v527 = vand.u32 %v181, 4294901760
    %528 = vmatmul.f32.gmra.mxu0 %v527
    %v529 = vpop.f32.mrf.mxu0
    %v530 = vadd.f32 %v469, %v529
    %531 = vdwg.mxu0
    %532 = vmatpush.msra.mxu0 0.0
    %533 = vmatpush.msra.mxu0 0.0
    %534 = vmatpush.msra.mxu0 0.0
    %535 = vmatpush.msra.mxu0 0.0
    %536 = vmatpush.msra.mxu0 0.0
    %537 = vmatpush.msra.mxu0 0.0
    %538 = vmatpush.msra.mxu0 0.0
    %539 = vmatpush.msra.mxu0 0.0
    %540 = vmatpush.msra.mxu0 0.0
    %541 = vmatpush.msra.mxu0 0.0
    %542 = vmatpush.msra.mxu0 0.0
    %543 = vmatpush.msra.mxu0 0.0
    %v544 = vand.u32 %v107, 4294901760
    %545 = vmatpush.msra.mxu0 %v544
    %v546 = vand.u32 %v106, 4294901760
    %547 = vmatpush.msra.mxu0 %v546
    %v548 = vand.u32 %v105, 4294901760
    %549 = vmatpush.msra.mxu0 %v548
    %v550 = vand.u32 %v104, 4294901760
    %551 = vmatpush.msra.mxu0 %v550
    %v552 = vand.u32 %v160, 4294901760
    %553 = vmatmul.f32.gmra.mxu0 %v552
    %v554 = vpop.f32.mrf.mxu0
    %v555 = vadd.f32 %v502, %v554
    %v556 = vand.u32 %v163, 4294901760
    %557 = vmatmul.f32.gmra.mxu0 %v556
    %v558 = vpop.f32.mrf.mxu0
    %v559 = vadd.f32 %v506, %v558
    %v560 = vand.u32 %v166, 4294901760
    %561 = vmatmul.f32.gmra.mxu0 %v560
    %v562 = vpop.f32.mrf.mxu0
    %v563 = vadd.f32 %v510, %v562
    %v564 = vand.u32 %v169, 4294901760
    %565 = vmatmul.f32.gmra.mxu0 %v564
    %v566 = vpop.f32.mrf.mxu0
    %v567 = vadd.f32 %v514, %v566
    %v568 = vand.u32 %v172, 4294901760
    %569 = vmatmul.f32.gmra.mxu0 %v568
    %v570 = vpop.f32.mrf.mxu0
    %v571 = vadd.f32 %v518, %v570
    %v572 = vand.u32 %v175, 4294901760
    %573 = vmatmul.f32.gmra.mxu0 %v572
    %v574 = vpop.f32.mrf.mxu0
    %v575 = vadd.f32 %v522, %v574
    %v576 = vand.u32 %v178, 4294901760
    %577 = vmatmul.f32.gmra.mxu0 %v576
    %v578 = vpop.f32.mrf.mxu0
    %v579 = vadd.f32 %v526, %v578
    %v580 = vand.u32 %v181, 4294901760
    %581 = vmatmul.f32.gmra.mxu0 %v580
    %v582 = vpop.f32.mrf.mxu0
    %v583 = vadd.f32 %v530, %v582
    %584 = vdwg.mxu0
    %v585 = vand.u32 %v123, 4294901760
    %586 = vmatpush.msra.mxu0 %v585
    %v587 = vand.u32 %v122, 4294901760
    %588 = vmatpush.msra.mxu0 %v587
    %v589 = vand.u32 %v121, 4294901760
    %590 = vmatpush.msra.mxu0 %v589
    %v591 = vand.u32 %v120, 4294901760
    %592 = vmatpush.msra.mxu0 %v591
    %v593 = vand.u32 %v119, 4294901760
    %594 = vmatpush.msra.mxu0 %v593
    %v595 = vand.u32 %v118, 4294901760
    %596 = vmatpush.msra.mxu0 %v595
    %v597 = vand.u32 %v117, 4294901760
    %598 = vmatpush.msra.mxu0 %v597
    %v599 = vand.u32 %v116, 4294901760
    %600 = vmatpush.msra.mxu0 %v599
    %v601 = vand.u32 %v115, 4294901760
    %602 = vmatpush.msra.mxu0 %v601
    %v603 = vand.u32 %v114, 4294901760
    %604 = vmatpush.msra.mxu0 %v603
    %v605 = vand.u32 %v113, 4294901760
    %606 = vmatpush.msra.mxu0 %v605
    %v607 = vand.u32 %v112, 4294901760
    %608 = vmatpush.msra.mxu0 %v607
    %v609 = vand.u32 %v111, 4294901760
    %610 = vmatpush.msra.mxu0 %v609
    %v611 = vand.u32 %v110, 4294901760
    %612 = vmatpush.msra.mxu0 %v611
    %v613 = vand.u32 %v109, 4294901760
    %614 = vmatpush.msra.mxu0 %v613
    %v615 = vand.u32 %v108, 4294901760
    %616 = vmatpush.msra.mxu0 %v615
    %v617 = vand.u32 %v104, 4294901760
    %v618 = vsub.f32 %v104, %v617
    %v619 = vand.u32 %v618, 4294901760
    %v620 = vsub.f32 %v618, %v619
    %v621 = vand.u32 %v620, 4294901760
    %622 = vmatmul.f32.gmra.mxu0 %v621
    %v623 = vpop.f32.mrf.mxu0
    %v624 = vadd.f32 0.0, %v623
    %v625 = vand.u32 %v105, 4294901760
    %v626 = vsub.f32 %v105, %v625
    %v627 = vand.u32 %v626, 4294901760
    %v628 = vsub.f32 %v626, %v627
    %v629 = vand.u32 %v628, 4294901760
    %630 = vmatmul.f32.gmra.mxu0 %v629
    %v631 = vpop.f32.mrf.mxu0
    %v632 = vadd.f32 0.0, %v631
    %v633 = vand.u32 %v106, 4294901760
    %v634 = vsub.f32 %v106, %v633
    %v635 = vand.u32 %v634, 4294901760
    %v636 = vsub.f32 %v634, %v635
    %v637 = vand.u32 %v636, 4294901760
    %638 = vmatmul.f32.gmra.mxu0 %v637
    %v639 = vpop.f32.mrf.mxu0
    %v640 = vadd.f32 0.0, %v639
    %v641 = vand.u32 %v107, 4294901760
    %v642 = vsub.f32 %v107, %v641
    %v643 = vand.u32 %v642, 4294901760
    %v644 = vsub.f32 %v642, %v643
    %v645 = vand.u32 %v644, 4294901760
    %646 = vmatmul.f32.gmra.mxu0 %v645
    %v647 = vpop.f32.mrf.mxu0
    %v648 = vadd.f32 0.0, %v647
    %649 = vdwg.mxu0
    %v650 = vand.u32 %v123, 4294901760
    %v651 = vsub.f32 %v123, %v650
    %v652 = vand.u32 %v651, 4294901760
    %v653 = vsub.f32 %v651, %v652
    %v654 = vand.u32 %v653, 4294901760
    %655 = vmatpush.msra.mxu0 %v654
    %v656 = vand.u32 %v122, 4294901760
    %v657 = vsub.f32 %v122, %v656
    %v658 = vand.u32 %v657, 4294901760
    %v659 = vsub.f32 %v657, %v658
    %v660 = vand.u32 %v659, 4294901760
    %661 = vmatpush.msra.mxu0 %v660
    %v662 = vand.u32 %v121, 4294901760
    %v663 = vsub.f32 %v121, %v662
    %v664 = vand.u32 %v663, 4294901760
    %v665 = vsub.f32 %v663, %v664
    %v666 = vand.u32 %v665, 4294901760
    %667 = vmatpush.msra.mxu0 %v666
    %v668 = vand.u32 %v120, 4294901760
    %v669 = vsub.f32 %v120, %v668
    %v670 = vand.u32 %v669, 4294901760
    %v671 = vsub.f32 %v669, %v670
    %v672 = vand.u32 %v671, 4294901760
    %673 = vmatpush.msra.mxu0 %v672
    %v674 = vand.u32 %v119, 4294901760
    %v675 = vsub.f32 %v119, %v674
    %v676 = vand.u32 %v675, 4294901760
    %v677 = vsub.f32 %v675, %v676
    %v678 = vand.u32 %v677, 4294901760
    %679 = vmatpush.msra.mxu0 %v678
    %v680 = vand.u32 %v118, 4294901760
    %v681 = vsub.f32 %v118, %v680
    %v682 = vand.u32 %v681, 4294901760
    %v683 = vsub.f32 %v681, %v682
    %v684 = vand.u32 %v683, 4294901760
    %685 = vmatpush.msra.mxu0 %v684
    %v686 = vand.u32 %v117, 4294901760
    %v687 = vsub.f32 %v117, %v686
    %v688 = vand.u32 %v687, 4294901760
    %v689 = vsub.f32 %v687, %v688
    %v690 = vand.u32 %v689, 4294901760
    %691 = vmatpush.msra.mxu0 %v690
    %v692 = vand.u32 %v116, 4294901760
    %v693 = vsub.f32 %v116, %v692
    %v694 = vand.u32 %v693, 4294901760
    %v695 = vsub.f32 %v693, %v694
    %v696 = vand.u32 %v695, 4294901760
    %697 = vmatpush.msra.mxu0 %v696
    %v698 = vand.u32 %v115, 4294901760
    %v699 = vsub.f32 %v115, %v698
    %v700 = vand.u32 %v699, 4294901760
    %v701 = vsub.f32 %v699, %v700
    %v702 = vand.u32 %v701, 4294901760
    %703 = vmatpush.msra.mxu0 %v702
    %v704 = vand.u32 %v114, 4294901760
    %v705 = vsub.f32 %v114, %v704
    %v706 = vand.u32 %v705, 4294901760
    %v707 = vsub.f32 %v705, %v706
    %v708 = vand.u32 %v707, 4294901760
    %709 = vmatpush.msra.mxu0 %v708
    %v710 = vand.u32 %v113, 4294901760
    %v711 = vsub.f32 %v113, %v710
    %v712 = vand.u32 %v711, 4294901760
    %v713 = vsub.f32 %v711, %v712
    %v714 = vand.u32 %v713, 4294901760
    %715 = vmatpush.msra.mxu0 %v714
    %v716 = vand.u32 %v112, 4294901760
    %v717 = vsub.f32 %v112, %v716
    %v718 = vand.u32 %v717, 4294901760
    %v719 = vsub.f32 %v717, %v718
    %v720 = vand.u32 %v719, 4294901760
    %721 = vmatpush.msra.mxu0 %v720
    %v722 = vand.u32 %v111, 4294901760
    %v723 = vsub.f32 %v111, %v722
    %v724 = vand.u32 %v723, 4294901760
    %v725 = vsub.f32 %v723, %v724
    %v726 = vand.u32 %v725, 4294901760
    %727 = vmatpush.msra.mxu0 %v726
    %v728 = vand.u32 %v110, 4294901760
    %v729 = vsub.f32 %v110, %v728
    %v730 = vand.u32 %v729, 4294901760
    %v731 = vsub.f32 %v729, %v730
    %v732 = vand.u32 %v731, 4294901760
    %733 = vmatpush.msra.mxu0 %v732
    %v734 = vand.u32 %v109, 4294901760
    %v735 = vsub.f32 %v109, %v734
    %v736 = vand.u32 %v735, 4294901760
    %v737 = vsub.f32 %v735, %v736
    %v738 = vand.u32 %v737, 4294901760
    %739 = vmatpush.msra.mxu0 %v738
    %v740 = vand.u32 %v108, 4294901760
    %v741 = vsub.f32 %v108, %v740
    %v742 = vand.u32 %v741, 4294901760
    %v743 = vsub.f32 %v741, %v742
    %v744 = vand.u32 %v743, 4294901760
    %745 = vmatpush.msra.mxu0 %v744
    %v746 = vand.u32 %v104, 4294901760
    %747 = vmatmul.f32.gmra.mxu0 %v746
    %v748 = vpop.f32.mrf.mxu0
    %v749 = vadd.f32 %v624, %v748
    %v750 = vand.u32 %v105, 4294901760
    %751 = vmatmul.f32.gmra.mxu0 %v750
    %v752 = vpop.f32.mrf.mxu0
    %v753 = vadd.f32 %v632, %v752
    %v754 = vand.u32 %v106, 4294901760
    %755 = vmatmul.f32.gmra.mxu0 %v754
    %v756 = vpop.f32.mrf.mxu0
    %v757 = vadd.f32 %v640, %v756
    %v758 = vand.u32 %v107, 4294901760
    %759 = vmatmul.f32.gmra.mxu0 %v758
    %v760 = vpop.f32.mrf.mxu0
    %v761 = vadd.f32 %v648, %v760
    %762 = vdwg.mxu0
    %v763 = vand.u32 %v123, 4294901760
    %v764 = vsub.f32 %v123, %v763
    %765 = vmatpush.msra.mxu0 %v764
    %v766 = vand.u32 %v122, 4294901760
    %v767 = vsub.f32 %v122, %v766
    %768 = vmatpush.msra.mxu0 %v767
    %v769 = vand.u32 %v121, 4294901760
    %v770 = vsub.f32 %v121, %v769
    %771 = vmatpush.msra.mxu0 %v770
    %v772 = vand.u32 %v120, 4294901760
    %v773 = vsub.f32 %v120, %v772
    %774 = vmatpush.msra.mxu0 %v773
    %v775 = vand.u32 %v119, 4294901760
    %v776 = vsub.f32 %v119, %v775
    %777 = vmatpush.msra.mxu0 %v776
    %v778 = vand.u32 %v118, 4294901760
    %v779 = vsub.f32 %v118, %v778
    %780 = vmatpush.msra.mxu0 %v779
    %v781 = vand.u32 %v117, 4294901760
    %v782 = vsub.f32 %v117, %v781
    %783 = vmatpush.msra.mxu0 %v782
    %v784 = vand.u32 %v116, 4294901760
    %v785 = vsub.f32 %v116, %v784
    %786 = vmatpush.msra.mxu0 %v785
    %v787 = vand.u32 %v115, 4294901760
    %v788 = vsub.f32 %v115, %v787
    %789 = vmatpush.msra.mxu0 %v788
    %v790 = vand.u32 %v114, 4294901760
    %v791 = vsub.f32 %v114, %v790
    %792 = vmatpush.msra.mxu0 %v791
    %v793 = vand.u32 %v113, 4294901760
    %v794 = vsub.f32 %v113, %v793
    %795 = vmatpush.msra.mxu0 %v794
    %v796 = vand.u32 %v112, 4294901760
    %v797 = vsub.f32 %v112, %v796
    %798 = vmatpush.msra.mxu0 %v797
    %v799 = vand.u32 %v111, 4294901760
    %v800 = vsub.f32 %v111, %v799
    %801 = vmatpush.msra.mxu0 %v800
    %v802 = vand.u32 %v110, 4294901760
    %v803 = vsub.f32 %v110, %v802
    %804 = vmatpush.msra.mxu0 %v803
    %v805 = vand.u32 %v109, 4294901760
    %v806 = vsub.f32 %v109, %v805
    %807 = vmatpush.msra.mxu0 %v806
    %v808 = vand.u32 %v108, 4294901760
    %v809 = vsub.f32 %v108, %v808
    %810 = vmatpush.msra.mxu0 %v809
    %v811 = vand.u32 %v104, 4294901760
    %v812 = vsub.f32 %v104, %v811
    %813 = vmatmul.f32.gmra.mxu0 %v812
    %v814 = vpop.f32.mrf.mxu0
    %v815 = vadd.f32 %v749, %v814
    %v816 = vand.u32 %v105, 4294901760
    %v817 = vsub.f32 %v105, %v816
    %818 = vmatmul.f32.gmra.mxu0 %v817
    %v819 = vpop.f32.mrf.mxu0
    %v820 = vadd.f32 %v753, %v819
    %v821 = vand.u32 %v106, 4294901760
    %v822 = vsub.f32 %v106, %v821
    %823 = vmatmul.f32.gmra.mxu0 %v822
    %v824 = vpop.f32.mrf.mxu0
    %v825 = vadd.f32 %v757, %v824
    %v826 = vand.u32 %v107, 4294901760
    %v827 = vsub.f32 %v107, %v826
    %828 = vmatmul.f32.gmra.mxu0 %v827
    %v829 = vpop.f32.mrf.mxu0
    %v830 = vadd.f32 %v761, %v829
    %831 = vdwg.mxu0
    %v832 = vand.u32 %v123, 4294901760
    %833 = vmatpush.msra.mxu0 %v832
    %v834 = vand.u32 %v122, 4294901760
    %835 = vmatpush.msra.mxu0 %v834
    %v836 = vand.u32 %v121, 4294901760
    %837 = vmatpush.msra.mxu0 %v836
    %v838 = vand.u32 %v120, 4294901760
    %839 = vmatpush.msra.mxu0 %v838
    %v840 = vand.u32 %v119, 4294901760
    %841 = vmatpush.msra.mxu0 %v840
    %v842 = vand.u32 %v118, 4294901760
    %843 = vmatpush.msra.mxu0 %v842
    %v844 = vand.u32 %v117, 4294901760
    %845 = vmatpush.msra.mxu0 %v844
    %v846 = vand.u32 %v116, 4294901760
    %847 = vmatpush.msra.mxu0 %v846
    %v848 = vand.u32 %v115, 4294901760
    %849 = vmatpush.msra.mxu0 %v848
    %v850 = vand.u32 %v114, 4294901760
    %851 = vmatpush.msra.mxu0 %v850
    %v852 = vand.u32 %v113, 4294901760
    %853 = vmatpush.msra.mxu0 %v852
    %v854 = vand.u32 %v112, 4294901760
    %855 = vmatpush.msra.mxu0 %v854
    %v856 = vand.u32 %v111, 4294901760
    %857 = vmatpush.msra.mxu0 %v856
    %v858 = vand.u32 %v110, 4294901760
    %859 = vmatpush.msra.mxu0 %v858
    %v860 = vand.u32 %v109, 4294901760
    %861 = vmatpush.msra.mxu0 %v860
    %v862 = vand.u32 %v108, 4294901760
    %863 = vmatpush.msra.mxu0 %v862
    %v864 = vand.u32 %v104, 4294901760
    %v865 = vsub.f32 %v104, %v864
    %v866 = vand.u32 %v865, 4294901760
    %867 = vmatmul.f32.gmra.mxu0 %v866
    %v868 = vpop.f32.mrf.mxu0
    %v869 = vadd.f32 %v815, %v868
    %v870 = vand.u32 %v105, 4294901760
    %v871 = vsub.f32 %v105, %v870
    %v872 = vand.u32 %v871, 4294901760
    %873 = vmatmul.f32.gmra.mxu0 %v872
    %v874 = vpop.f32.mrf.mxu0
    %v875 = vadd.f32 %v820, %v874
    %v876 = vand.u32 %v106, 4294901760
    %v877 = vsub.f32 %v106, %v876
    %v878 = vand.u32 %v877, 4294901760
    %879 = vmatmul.f32.gmra.mxu0 %v878
    %v880 = vpop.f32.mrf.mxu0
    %v881 = vadd.f32 %v825, %v880
    %v882 = vand.u32 %v107, 4294901760
    %v883 = vsub.f32 %v107, %v882
    %v884 = vand.u32 %v883, 4294901760
    %885 = vmatmul.f32.gmra.mxu0 %v884
    %v886 = vpop.f32.mrf.mxu0
    %v887 = vadd.f32 %v830, %v886
    %888 = vdwg.mxu0
    %v889 = vand.u32 %v123, 4294901760
    %v890 = vsub.f32 %v123, %v889
    %v891 = vand.u32 %v890, 4294901760
    %892 = vmatpush.msra.mxu0 %v891
    %v893 = vand.u32 %v122, 4294901760
    %v894 = vsub.f32 %v122, %v893
    %v895 = vand.u32 %v894, 4294901760
    %896 = vmatpush.msra.mxu0 %v895
    %v897 = vand.u32 %v121, 4294901760
    %v898 = vsub.f32 %v121, %v897
    %v899 = vand.u32 %v898, 4294901760
    %900 = vmatpush.msra.mxu0 %v899
    %v901 = vand.u32 %v120, 4294901760
    %v902 = vsub.f32 %v120, %v901
    %v903 = vand.u32 %v902, 4294901760
    %904 = vmatpush.msra.mxu0 %v903
    %v905 = vand.u32 %v119, 4294901760
    %v906 = vsub.f32 %v119, %v905
    %v907 = vand.u32 %v906, 4294901760
    %908 = vmatpush.msra.mxu0 %v907
    %v909 = vand.u32 %v118, 4294901760
    %v910 = vsub.f32 %v118, %v909
    %v911 = vand.u32 %v910, 4294901760
    %912 = vmatpush.msra.mxu0 %v911
    %v913 = vand.u32 %v117, 4294901760
    %v914 = vsub.f32 %v117, %v913
    %v915 = vand.u32 %v914, 4294901760
    %916 = vmatpush.msra.mxu0 %v915
    %v917 = vand.u32 %v116, 4294901760
    %v918 = vsub.f32 %v116, %v917
    %v919 = vand.u32 %v918, 4294901760
    %920 = vmatpush.msra.mxu0 %v919
    %v921 = vand.u32 %v115, 4294901760
    %v922 = vsub.f32 %v115, %v921
    %v923 = vand.u32 %v922, 4294901760
    %924 = vmatpush.msra.mxu0 %v923
    %v925 = vand.u32 %v114, 4294901760
    %v926 = vsub.f32 %v114, %v925
    %v927 = vand.u32 %v926, 4294901760
    %928 = vmatpush.msra.mxu0 %v927
    %v929 = vand.u32 %v113, 4294901760
    %v930 = vsub.f32 %v113, %v929
    %v931 = vand.u32 %v930, 4294901760
    %932 = vmatpush.msra.mxu0 %v931
    %v933 = vand.u32 %v112, 4294901760
    %v934 = vsub.f32 %v112, %v933
    %v935 = vand.u32 %v934, 4294901760
    %936 = vmatpush.msra.mxu0 %v935
    %v937 = vand.u32 %v111, 4294901760
    %v938 = vsub.f32 %v111, %v937
    %v939 = vand.u32 %v938, 4294901760
    %940 = vmatpush.msra.mxu0 %v939
    %v941 = vand.u32 %v110, 4294901760
    %v942 = vsub.f32 %v110, %v941
    %v943 = vand.u32 %v942, 4294901760
    %944 = vmatpush.msra.mxu0 %v943
    %v945 = vand.u32 %v109, 4294901760
    %v946 = vsub.f32 %v109, %v945
    %v947 = vand.u32 %v946, 4294901760
    %948 = vmatpush.msra.mxu0 %v947
    %v949 = vand.u32 %v108, 4294901760
    %v950 = vsub.f32 %v108, %v949
    %v951 = vand.u32 %v950, 4294901760
    %952 = vmatpush.msra.mxu0 %v951
    %v953 = vand.u32 %v104, 4294901760
    %954 = vmatmul.f32.gmra.mxu0 %v953
    %v955 = vpop.f32.mrf.mxu0
    %v956 = vadd.f32 %v869, %v955
    %v957 = vand.u32 %v105, 4294901760
    %958 = vmatmul.f32.gmra.mxu0 %v957
    %v959 = vpop.f32.mrf.mxu0
    %v960 = vadd.f32 %v875, %v959
    %v961 = vand.u32 %v106, 4294901760
    %962 = vmatmul.f32.gmra.mxu0 %v961
    %v963 = vpop.f32.mrf.mxu0
    %v964 = vadd.f32 %v881, %v963
    %v965 = vand.u32 %v107, 4294901760
    %966 = vmatmul.f32.gmra.mxu0 %v965
    %v967 = vpop.f32.mrf.mxu0
    %v968 = vadd.f32 %v887, %v967
    %969 = vdwg.mxu0
    %v970 = vand.u32 %v123, 4294901760
    %971 = vmatpush.msra.mxu0 %v970
    %v972 = vand.u32 %v122, 4294901760
    %973 = vmatpush.msra.mxu0 %v972
    %v974 = vand.u32 %v121, 4294901760
    %975 = vmatpush.msra.mxu0 %v974
    %v976 = vand.u32 %v120, 4294901760
    %977 = vmatpush.msra.mxu0 %v976
    %v978 = vand.u32 %v119, 4294901760
    %979 = vmatpush.msra.mxu0 %v978
    %v980 = vand.u32 %v118, 4294901760
    %981 = vmatpush.msra.mxu0 %v980
    %v982 = vand.u32 %v117, 4294901760
    %983 = vmatpush.msra.mxu0 %v982
    %v984 = vand.u32 %v116, 4294901760
    %985 = vmatpush.msra.mxu0 %v984
    %v986 = vand.u32 %v115, 4294901760
    %987 = vmatpush.msra.mxu0 %v986
    %v988 = vand.u32 %v114, 4294901760
    %989 = vmatpush.msra.mxu0 %v988
    %v990 = vand.u32 %v113, 4294901760
    %991 = vmatpush.msra.mxu0 %v990
    %v992 = vand.u32 %v112, 4294901760
    %993 = vmatpush.msra.mxu0 %v992
    %v994 = vand.u32 %v111, 4294901760
    %995 = vmatpush.msra.mxu0 %v994
    %v996 = vand.u32 %v110, 4294901760
    %997 = vmatpush.msra.mxu0 %v996
    %v998 = vand.u32 %v109, 4294901760
    %999 = vmatpush.msra.mxu0 %v998
    %v1000 = vand.u32 %v108, 4294901760
    %1001 = vmatpush.msra.mxu0 %v1000
    %v1002 = vand.u32 %v104, 4294901760
    %1003 = vmatmul.f32.gmra.mxu0 %v1002
    %v1004 = vpop.f32.mrf.mxu0
    %v1005 = vadd.f32 %v956, %v1004
    %v1006 = vand.u32 %v105, 4294901760
    %1007 = vmatmul.f32.gmra.mxu0 %v1006
    %v1008 = vpop.f32.mrf.mxu0
    %v1009 = vadd.f32 %v960, %v1008
    %v1010 = vand.u32 %v106, 4294901760
    %1011 = vmatmul.f32.gmra.mxu0 %v1010
    %v1012 = vpop.f32.mrf.mxu0
    %v1013 = vadd.f32 %v964, %v1012
    %v1014 = vand.u32 %v107, 4294901760
    %1015 = vmatmul.f32.gmra.mxu0 %v1014
    %v1016 = vpop.f32.mrf.mxu0
    %v1017 = vadd.f32 %v968, %v1016
    %1018 = vdwg.mxu0
    %v1019 = vand.u32 %v139, 4294901760
    %1020 = vmatpush.msra.mxu0 %v1019
    %v1021 = vand.u32 %v138, 4294901760
    %1022 = vmatpush.msra.mxu0 %v1021
    %v1023 = vand.u32 %v137, 4294901760
    %1024 = vmatpush.msra.mxu0 %v1023
    %v1025 = vand.u32 %v136, 4294901760
    %1026 = vmatpush.msra.mxu0 %v1025
    %v1027 = vand.u32 %v135, 4294901760
    %1028 = vmatpush.msra.mxu0 %v1027
    %v1029 = vand.u32 %v134, 4294901760
    %1030 = vmatpush.msra.mxu0 %v1029
    %v1031 = vand.u32 %v133, 4294901760
    %1032 = vmatpush.msra.mxu0 %v1031
    %v1033 = vand.u32 %v132, 4294901760
    %1034 = vmatpush.msra.mxu0 %v1033
    %v1035 = vand.u32 %v131, 4294901760
    %1036 = vmatpush.msra.mxu0 %v1035
    %v1037 = vand.u32 %v130, 4294901760
    %1038 = vmatpush.msra.mxu0 %v1037
    %v1039 = vand.u32 %v129, 4294901760
    %1040 = vmatpush.msra.mxu0 %v1039
    %v1041 = vand.u32 %v128, 4294901760
    %1042 = vmatpush.msra.mxu0 %v1041
    %v1043 = vand.u32 %v127, 4294901760
    %1044 = vmatpush.msra.mxu0 %v1043
    %v1045 = vand.u32 %v126, 4294901760
    %1046 = vmatpush.msra.mxu0 %v1045
    %v1047 = vand.u32 %v125, 4294901760
    %1048 = vmatpush.msra.mxu0 %v1047
    %v1049 = vand.u32 %v124, 4294901760
    %1050 = vmatpush.msra.mxu0 %v1049
    %v1051 = vand.u32 %v555, 4294901760
    %v1052 = vsub.f32 %v555, %v1051
    %v1053 = vand.u32 %v1052, 4294901760
    %v1054 = vsub.f32 %v1052, %v1053
    %v1055 = vand.u32 %v1054, 4294901760
    %1056 = vmatmul.f32.gmra.mxu0 %v1055
    %v1057 = vpop.f32.mrf.mxu0
    %v1058 = vadd.f32 %v1005, %v1057
    %v1059 = vand.u32 %v559, 4294901760
    %v1060 = vsub.f32 %v559, %v1059
    %v1061 = vand.u32 %v1060, 4294901760
    %v1062 = vsub.f32 %v1060, %v1061
    %v1063 = vand.u32 %v1062, 4294901760
    %1064 = vmatmul.f32.gmra.mxu0 %v1063
    %v1065 = vpop.f32.mrf.mxu0
    %v1066 = vadd.f32 %v1009, %v1065
    %v1067 = vand.u32 %v563, 4294901760
    %v1068 = vsub.f32 %v563, %v1067
    %v1069 = vand.u32 %v1068, 4294901760
    %v1070 = vsub.f32 %v1068, %v1069
    %v1071 = vand.u32 %v1070, 4294901760
    %1072 = vmatmul.f32.gmra.mxu0 %v1071
    %v1073 = vpop.f32.mrf.mxu0
    %v1074 = vadd.f32 %v1013, %v1073
    %v1075 = vand.u32 %v567, 4294901760
    %v1076 = vsub.f32 %v567, %v1075
    %v1077 = vand.u32 %v1076, 4294901760
    %v1078 = vsub.f32 %v1076, %v1077
    %v1079 = vand.u32 %v1078, 4294901760
    %1080 = vmatmul.f32.gmra.mxu0 %v1079
    %v1081 = vpop.f32.mrf.mxu0
    %v1082 = vadd.f32 %v1017, %v1081
    %1083 = vdwg.mxu0
    %v1084 = vand.u32 %v139, 4294901760
    %v1085 = vsub.f32 %v139, %v1084
    %v1086 = vand.u32 %v1085, 4294901760
    %v1087 = vsub.f32 %v1085, %v1086
    %v1088 = vand.u32 %v1087, 4294901760
    %1089 = vmatpush.msra.mxu0 %v1088
    %v1090 = vand.u32 %v138, 4294901760
    %v1091 = vsub.f32 %v138, %v1090
    %v1092 = vand.u32 %v1091, 4294901760
    %v1093 = vsub.f32 %v1091, %v1092
    %v1094 = vand.u32 %v1093, 4294901760
    %1095 = vmatpush.msra.mxu0 %v1094
    %v1096 = vand.u32 %v137, 4294901760
    %v1097 = vsub.f32 %v137, %v1096
    %v1098 = vand.u32 %v1097, 4294901760
    %v1099 = vsub.f32 %v1097, %v1098
    %v1100 = vand.u32 %v1099, 4294901760
    %1101 = vmatpush.msra.mxu0 %v1100
    %v1102 = vand.u32 %v136, 4294901760
    %v1103 = vsub.f32 %v136, %v1102
    %v1104 = vand.u32 %v1103, 4294901760
    %v1105 = vsub.f32 %v1103, %v1104
    %v1106 = vand.u32 %v1105, 4294901760
    %1107 = vmatpush.msra.mxu0 %v1106
    %v1108 = vand.u32 %v135, 4294901760
    %v1109 = vsub.f32 %v135, %v1108
    %v1110 = vand.u32 %v1109, 4294901760
    %v1111 = vsub.f32 %v1109, %v1110
    %v1112 = vand.u32 %v1111, 4294901760
    %1113 = vmatpush.msra.mxu0 %v1112
    %v1114 = vand.u32 %v134, 4294901760
    %v1115 = vsub.f32 %v134, %v1114
    %v1116 = vand.u32 %v1115, 4294901760
    %v1117 = vsub.f32 %v1115, %v1116
    %v1118 = vand.u32 %v1117, 4294901760
    %1119 = vmatpush.msra.mxu0 %v1118
    %v1120 = vand.u32 %v133, 4294901760
    %v1121 = vsub.f32 %v133, %v1120
    %v1122 = vand.u32 %v1121, 4294901760
    %v1123 = vsub.f32 %v1121, %v1122
    %v1124 = vand.u32 %v1123, 4294901760
    %1125 = vmatpush.msra.mxu0 %v1124
    %v1126 = vand.u32 %v132, 4294901760
    %v1127 = vsub.f32 %v132, %v1126
    %v1128 = vand.u32 %v1127, 4294901760
    %v1129 = vsub.f32 %v1127, %v1128
    %v1130 = vand.u32 %v1129, 4294901760
    %1131 = vmatpush.msra.mxu0 %v1130
    %v1132 = vand.u32 %v131, 4294901760
    %v1133 = vsub.f32 %v131, %v1132
    %v1134 = vand.u32 %v1133, 4294901760
    %v1135 = vsub.f32 %v1133, %v1134
    %v1136 = vand.u32 %v1135, 4294901760
    %1137 = vmatpush.msra.mxu0 %v1136
    %v1138 = vand.u32 %v130, 4294901760
    %v1139 = vsub.f32 %v130, %v1138
    %v1140 = vand.u32 %v1139, 4294901760
    %v1141 = vsub.f32 %v1139, %v1140
    %v1142 = vand.u32 %v1141, 4294901760
    %1143 = vmatpush.msra.mxu0 %v1142
    %v1144 = vand.u32 %v129, 4294901760
    %v1145 = vsub.f32 %v129, %v1144
    %v1146 = vand.u32 %v1145, 4294901760
    %v1147 = vsub.f32 %v1145, %v1146
    %v1148 = vand.u32 %v1147, 4294901760
    %1149 = vmatpush.msra.mxu0 %v1148
    %v1150 = vand.u32 %v128, 4294901760
    %v1151 = vsub.f32 %v128, %v1150
    %v1152 = vand.u32 %v1151, 4294901760
    %v1153 = vsub.f32 %v1151, %v1152
    %v1154 = vand.u32 %v1153, 4294901760
    %1155 = vmatpush.msra.mxu0 %v1154
    %v1156 = vand.u32 %v127, 4294901760
    %v1157 = vsub.f32 %v127, %v1156
    %v1158 = vand.u32 %v1157, 4294901760
    %v1159 = vsub.f32 %v1157, %v1158
    %v1160 = vand.u32 %v1159, 4294901760
    %1161 = vmatpush.msra.mxu0 %v1160
    %v1162 = vand.u32 %v126, 4294901760
    %v1163 = vsub.f32 %v126, %v1162
    %v1164 = vand.u32 %v1163, 4294901760
    %v1165 = vsub.f32 %v1163, %v1164
    %v1166 = vand.u32 %v1165, 4294901760
    %1167 = vmatpush.msra.mxu0 %v1166
    %v1168 = vand.u32 %v125, 4294901760
    %v1169 = vsub.f32 %v125, %v1168
    %v1170 = vand.u32 %v1169, 4294901760
    %v1171 = vsub.f32 %v1169, %v1170
    %v1172 = vand.u32 %v1171, 4294901760
    %1173 = vmatpush.msra.mxu0 %v1172
    %v1174 = vand.u32 %v124, 4294901760
    %v1175 = vsub.f32 %v124, %v1174
    %v1176 = vand.u32 %v1175, 4294901760
    %v1177 = vsub.f32 %v1175, %v1176
    %v1178 = vand.u32 %v1177, 4294901760
    %1179 = vmatpush.msra.mxu0 %v1178
    %v1180 = vand.u32 %v555, 4294901760
    %1181 = vmatmul.f32.gmra.mxu0 %v1180
    %v1182 = vpop.f32.mrf.mxu0
    %v1183 = vadd.f32 %v1058, %v1182
    %v1184 = vand.u32 %v559, 4294901760
    %1185 = vmatmul.f32.gmra.mxu0 %v1184
    %v1186 = vpop.f32.mrf.mxu0
    %v1187 = vadd.f32 %v1066, %v1186
    %v1188 = vand.u32 %v563, 4294901760
    %1189 = vmatmul.f32.gmra.mxu0 %v1188
    %v1190 = vpop.f32.mrf.mxu0
    %v1191 = vadd.f32 %v1074, %v1190
    %v1192 = vand.u32 %v567, 4294901760
    %1193 = vmatmul.f32.gmra.mxu0 %v1192
    %v1194 = vpop.f32.mrf.mxu0
    %v1195 = vadd.f32 %v1082, %v1194
    %1196 = vdwg.mxu0
    %v1197 = vand.u32 %v139, 4294901760
    %v1198 = vsub.f32 %v139, %v1197
    %1199 = vmatpush.msra.mxu0 %v1198
    %v1200 = vand.u32 %v138, 4294901760
    %v1201 = vsub.f32 %v138, %v1200
    %1202 = vmatpush.msra.mxu0 %v1201
    %v1203 = vand.u32 %v137, 4294901760
    %v1204 = vsub.f32 %v137, %v1203
    %1205 = vmatpush.msra.mxu0 %v1204
    %v1206 = vand.u32 %v136, 4294901760
    %v1207 = vsub.f32 %v136, %v1206
    %1208 = vmatpush.msra.mxu0 %v1207
    %v1209 = vand.u32 %v135, 4294901760
    %v1210 = vsub.f32 %v135, %v1209
    %1211 = vmatpush.msra.mxu0 %v1210
    %v1212 = vand.u32 %v134, 4294901760
    %v1213 = vsub.f32 %v134, %v1212
    %1214 = vmatpush.msra.mxu0 %v1213
    %v1215 = vand.u32 %v133, 4294901760
    %v1216 = vsub.f32 %v133, %v1215
    %1217 = vmatpush.msra.mxu0 %v1216
    %v1218 = vand.u32 %v132, 4294901760
    %v1219 = vsub.f32 %v132, %v1218
    %1220 = vmatpush.msra.mxu0 %v1219
    %v1221 = vand.u32 %v131, 4294901760
    %v1222 = vsub.f32 %v131, %v1221
    %1223 = vmatpush.msra.mxu0 %v1222
    %v1224 = vand.u32 %v130, 4294901760
    %v1225 = vsub.f32 %v130, %v1224
    %1226 = vmatpush.msra.mxu0 %v1225
    %v1227 = vand.u32 %v129, 4294901760
    %v1228 = vsub.f32 %v129, %v1227
    %1229 = vmatpush.msra.mxu0 %v1228
    %v1230 = vand.u32 %v128, 4294901760
    %v1231 = vsub.f32 %v128, %v1230
    %1232 = vmatpush.msra.mxu0 %v1231
    %v1233 = vand.u32 %v127, 4294901760
    %v1234 = vsub.f32 %v127, %v1233
    %1235 = vmatpush.msra.mxu0 %v1234
    %v1236 = vand.u32 %v126, 4294901760
    %v1237 = vsub.f32 %v126, %v1236
    %1238 = vmatpush.msra.mxu0 %v1237
    %v1239 = vand.u32 %v125, 4294901760
    %v1240 = vsub.f32 %v125, %v1239
    %1241 = vmatpush.msra.mxu0 %v1240
    %v1242 = vand.u32 %v124, 4294901760
    %v1243 = vsub.f32 %v124, %v1242
    %1244 = vmatpush.msra.mxu0 %v1243
    %v1245 = vand.u32 %v555, 4294901760
    %v1246 = vsub.f32 %v555, %v1245
    %1247 = vmatmul.f32.gmra.mxu0 %v1246
    %v1248 = vpop.f32.mrf.mxu0
    %v1249 = vadd.f32 %v1183, %v1248
    %v1250 = vand.u32 %v559, 4294901760
    %v1251 = vsub.f32 %v559, %v1250
    %1252 = vmatmul.f32.gmra.mxu0 %v1251
    %v1253 = vpop.f32.mrf.mxu0
    %v1254 = vadd.f32 %v1187, %v1253
    %v1255 = vand.u32 %v563, 4294901760
    %v1256 = vsub.f32 %v563, %v1255
    %1257 = vmatmul.f32.gmra.mxu0 %v1256
    %v1258 = vpop.f32.mrf.mxu0
    %v1259 = vadd.f32 %v1191, %v1258
    %v1260 = vand.u32 %v567, 4294901760
    %v1261 = vsub.f32 %v567, %v1260
    %1262 = vmatmul.f32.gmra.mxu0 %v1261
    %v1263 = vpop.f32.mrf.mxu0
    %v1264 = vadd.f32 %v1195, %v1263
    %1265 = vdwg.mxu0
    %v1266 = vand.u32 %v139, 4294901760
    %1267 = vmatpush.msra.mxu0 %v1266
    %v1268 = vand.u32 %v138, 4294901760
    %1269 = vmatpush.msra.mxu0 %v1268
    %v1270 = vand.u32 %v137, 4294901760
    %1271 = vmatpush.msra.mxu0 %v1270
    %v1272 = vand.u32 %v136, 4294901760
    %1273 = vmatpush.msra.mxu0 %v1272
    %v1274 = vand.u32 %v135, 4294901760
    %1275 = vmatpush.msra.mxu0 %v1274
    %v1276 = vand.u32 %v134, 4294901760
    %1277 = vmatpush.msra.mxu0 %v1276
    %v1278 = vand.u32 %v133, 4294901760
    %1279 = vmatpush.msra.mxu0 %v1278
    %v1280 = vand.u32 %v132, 4294901760
    %1281 = vmatpush.msra.mxu0 %v1280
    %v1282 = vand.u32 %v131, 4294901760
    %1283 = vmatpush.msra.mxu0 %v1282
    %v1284 = vand.u32 %v130, 4294901760
    %1285 = vmatpush.msra.mxu0 %v1284
    %v1286 = vand.u32 %v129, 4294901760
    %1287 = vmatpush.msra.mxu0 %v1286
    %v1288 = vand.u32 %v128, 4294901760
    %1289 = vmatpush.msra.mxu0 %v1288
    %v1290 = vand.u32 %v127, 4294901760
    %1291 = vmatpush.msra.mxu0 %v1290
    %v1292 = vand.u32 %v126, 4294901760
    %1293 = vmatpush.msra.mxu0 %v1292
    %v1294 = vand.u32 %v125, 4294901760
    %1295 = vmatpush.msra.mxu0 %v1294
    %v1296 = vand.u32 %v124, 4294901760
    %1297 = vmatpush.msra.mxu0 %v1296
    %v1298 = vand.u32 %v555, 4294901760
    %v1299 = vsub.f32 %v555, %v1298
    %v1300 = vand.u32 %v1299, 4294901760
    %1301 = vmatmul.f32.gmra.mxu0 %v1300
    %v1302 = vpop.f32.mrf.mxu0
    %v1303 = vadd.f32 %v1249, %v1302
    %v1304 = vand.u32 %v559, 4294901760
    %v1305 = vsub.f32 %v559, %v1304
    %v1306 = vand.u32 %v1305, 4294901760
    %1307 = vmatmul.f32.gmra.mxu0 %v1306
    %v1308 = vpop.f32.mrf.mxu0
    %v1309 = vadd.f32 %v1254, %v1308
    %v1310 = vand.u32 %v563, 4294901760
    %v1311 = vsub.f32 %v563, %v1310
    %v1312 = vand.u32 %v1311, 4294901760
    %1313 = vmatmul.f32.gmra.mxu0 %v1312
    %v1314 = vpop.f32.mrf.mxu0
    %v1315 = vadd.f32 %v1259, %v1314
    %v1316 = vand.u32 %v567, 4294901760
    %v1317 = vsub.f32 %v567, %v1316
    %v1318 = vand.u32 %v1317, 4294901760
    %1319 = vmatmul.f32.gmra.mxu0 %v1318
    %v1320 = vpop.f32.mrf.mxu0
    %v1321 = vadd.f32 %v1264, %v1320
    %1322 = vdwg.mxu0
    %v1323 = vand.u32 %v139, 4294901760
    %v1324 = vsub.f32 %v139, %v1323
    %v1325 = vand.u32 %v1324, 4294901760
    %1326 = vmatpush.msra.mxu0 %v1325
    %v1327 = vand.u32 %v138, 4294901760
    %v1328 = vsub.f32 %v138, %v1327
    %v1329 = vand.u32 %v1328, 4294901760
    %1330 = vmatpush.msra.mxu0 %v1329
    %v1331 = vand.u32 %v137, 4294901760
    %v1332 = vsub.f32 %v137, %v1331
    %v1333 = vand.u32 %v1332, 4294901760
    %1334 = vmatpush.msra.mxu0 %v1333
    %v1335 = vand.u32 %v136, 4294901760
    %v1336 = vsub.f32 %v136, %v1335
    %v1337 = vand.u32 %v1336, 4294901760
    %1338 = vmatpush.msra.mxu0 %v1337
    %v1339 = vand.u32 %v135, 4294901760
    %v1340 = vsub.f32 %v135, %v1339
    %v1341 = vand.u32 %v1340, 4294901760
    %1342 = vmatpush.msra.mxu0 %v1341
    %v1343 = vand.u32 %v134, 4294901760
    %v1344 = vsub.f32 %v134, %v1343
    %v1345 = vand.u32 %v1344, 4294901760
    %1346 = vmatpush.msra.mxu0 %v1345
    %v1347 = vand.u32 %v133, 4294901760
    %v1348 = vsub.f32 %v133, %v1347
    %v1349 = vand.u32 %v1348, 4294901760
    %1350 = vmatpush.msra.mxu0 %v1349
    %v1351 = vand.u32 %v132, 4294901760
    %v1352 = vsub.f32 %v132, %v1351
    %v1353 = vand.u32 %v1352, 4294901760
    %1354 = vmatpush.msra.mxu0 %v1353
    %v1355 = vand.u32 %v131, 4294901760
    %v1356 = vsub.f32 %v131, %v1355
    %v1357 = vand.u32 %v1356, 4294901760
    %1358 = vmatpush.msra.mxu0 %v1357
    %v1359 = vand.u32 %v130, 4294901760
    %v1360 = vsub.f32 %v130, %v1359
    %v1361 = vand.u32 %v1360, 4294901760
    %1362 = vmatpush.msra.mxu0 %v1361
    %v1363 = vand.u32 %v129, 4294901760
    %v1364 = vsub.f32 %v129, %v1363
    %v1365 = vand.u32 %v1364, 4294901760
    %1366 = vmatpush.msra.mxu0 %v1365
    %v1367 = vand.u32 %v128, 4294901760
    %v1368 = vsub.f32 %v128, %v1367
    %v1369 = vand.u32 %v1368, 4294901760
    %1370 = vmatpush.msra.mxu0 %v1369
    %v1371 = vand.u32 %v127, 4294901760
    %v1372 = vsub.f32 %v127, %v1371
    %v1373 = vand.u32 %v1372, 4294901760
    %1374 = vmatpush.msra.mxu0 %v1373
    %v1375 = vand.u32 %v126, 4294901760
    %v1376 = vsub.f32 %v126, %v1375
    %v1377 = vand.u32 %v1376, 4294901760
    %1378 = vmatpush.msra.mxu0 %v1377
    %v1379 = vand.u32 %v125, 4294901760
    %v1380 = vsub.f32 %v125, %v1379
    %v1381 = vand.u32 %v1380, 4294901760
    %1382 = vmatpush.msra.mxu0 %v1381
    %v1383 = vand.u32 %v124, 4294901760
    %v1384 = vsub.f32 %v124, %v1383
    %v1385 = vand.u32 %v1384, 4294901760
    %1386 = vmatpush.msra.mxu0 %v1385
    %v1387 = vand.u32 %v555, 4294901760
    %1388 = vmatmul.f32.gmra.mxu0 %v1387
    %v1389 = vpop.f32.mrf.mxu0
    %v1390 = vadd.f32 %v1303, %v1389
    %v1391 = vand.u32 %v559, 4294901760
    %1392 = vmatmul.f32.gmra.mxu0 %v1391
    %v1393 = vpop.f32.mrf.mxu0
    %v1394 = vadd.f32 %v1309, %v1393
    %v1395 = vand.u32 %v563, 4294901760
    %1396 = vmatmul.f32.gmra.mxu0 %v1395
    %v1397 = vpop.f32.mrf.mxu0
    %v1398 = vadd.f32 %v1315, %v1397
    %v1399 = vand.u32 %v567, 4294901760
    %1400 = vmatmul.f32.gmra.mxu0 %v1399
    %v1401 = vpop.f32.mrf.mxu0
    %v1402 = vadd.f32 %v1321, %v1401
    %1403 = vdwg.mxu0
    %v1404 = vand.u32 %v139, 4294901760
    %1405 = vmatpush.msra.mxu0 %v1404
    %v1406 = vand.u32 %v138, 4294901760
    %1407 = vmatpush.msra.mxu0 %v1406
    %v1408 = vand.u32 %v137, 4294901760
    %1409 = vmatpush.msra.mxu0 %v1408
    %v1410 = vand.u32 %v136, 4294901760
    %1411 = vmatpush.msra.mxu0 %v1410
    %v1412 = vand.u32 %v135, 4294901760
    %1413 = vmatpush.msra.mxu0 %v1412
    %v1414 = vand.u32 %v134, 4294901760
    %1415 = vmatpush.msra.mxu0 %v1414
    %v1416 = vand.u32 %v133, 4294901760
    %1417 = vmatpush.msra.mxu0 %v1416
    %v1418 = vand.u32 %v132, 4294901760
    %1419 = vmatpush.msra.mxu0 %v1418
    %v1420 = vand.u32 %v131, 4294901760
    %1421 = vmatpush.msra.mxu0 %v1420
    %v1422 = vand.u32 %v130, 4294901760
    %1423 = vmatpush.msra.mxu0 %v1422
    %v1424 = vand.u32 %v129, 4294901760
    %1425 = vmatpush.msra.mxu0 %v1424
    %v1426 = vand.u32 %v128, 4294901760
    %1427 = vmatpush.msra.mxu0 %v1426
    %v1428 = vand.u32 %v127, 4294901760
    %1429 = vmatpush.msra.mxu0 %v1428
    %v1430 = vand.u32 %v126, 4294901760
    %1431 = vmatpush.msra.mxu0 %v1430
    %v1432 = vand.u32 %v125, 4294901760
    %1433 = vmatpush.msra.mxu0 %v1432
    %v1434 = vand.u32 %v124, 4294901760
    %1435 = vmatpush.msra.mxu0 %v1434
    %v1436 = vand.u32 %v555, 4294901760
    %1437 = vmatmul.f32.gmra.mxu0 %v1436
    %v1438 = vpop.f32.mrf.mxu0
    %v1439 = vadd.f32 %v1390, %v1438
    %v1440 = vand.u32 %v559, 4294901760
    %1441 = vmatmul.f32.gmra.mxu0 %v1440
    %v1442 = vpop.f32.mrf.mxu0
    %v1443 = vadd.f32 %v1394, %v1442
    %v1444 = vand.u32 %v563, 4294901760
    %1445 = vmatmul.f32.gmra.mxu0 %v1444
    %v1446 = vpop.f32.mrf.mxu0
    %v1447 = vadd.f32 %v1398, %v1446
    %v1448 = vand.u32 %v567, 4294901760
    %1449 = vmatmul.f32.gmra.mxu0 %v1448
    %v1450 = vpop.f32.mrf.mxu0
    %v1451 = vadd.f32 %v1402, %v1450
    %1452 = vdwg.mxu0
    %v1453 = vand.u32 %v155, 4294901760
    %1454 = vmatpush.msra.mxu0 %v1453
    %v1455 = vand.u32 %v154, 4294901760
    %1456 = vmatpush.msra.mxu0 %v1455
    %v1457 = vand.u32 %v153, 4294901760
    %1458 = vmatpush.msra.mxu0 %v1457
    %v1459 = vand.u32 %v152, 4294901760
    %1460 = vmatpush.msra.mxu0 %v1459
    %v1461 = vand.u32 %v151, 4294901760
    %1462 = vmatpush.msra.mxu0 %v1461
    %v1463 = vand.u32 %v150, 4294901760
    %1464 = vmatpush.msra.mxu0 %v1463
    %v1465 = vand.u32 %v149, 4294901760
    %1466 = vmatpush.msra.mxu0 %v1465
    %v1467 = vand.u32 %v148, 4294901760
    %1468 = vmatpush.msra.mxu0 %v1467
    %v1469 = vand.u32 %v147, 4294901760
    %1470 = vmatpush.msra.mxu0 %v1469
    %v1471 = vand.u32 %v146, 4294901760
    %1472 = vmatpush.msra.mxu0 %v1471
    %v1473 = vand.u32 %v145, 4294901760
    %1474 = vmatpush.msra.mxu0 %v1473
    %v1475 = vand.u32 %v144, 4294901760
    %1476 = vmatpush.msra.mxu0 %v1475
    %v1477 = vand.u32 %v143, 4294901760
    %1478 = vmatpush.msra.mxu0 %v1477
    %v1479 = vand.u32 %v142, 4294901760
    %1480 = vmatpush.msra.mxu0 %v1479
    %v1481 = vand.u32 %v141, 4294901760
    %1482 = vmatpush.msra.mxu0 %v1481
    %v1483 = vand.u32 %v140, 4294901760
    %1484 = vmatpush.msra.mxu0 %v1483
    %v1485 = vand.u32 %v571, 4294901760
    %v1486 = vsub.f32 %v571, %v1485
    %v1487 = vand.u32 %v1486, 4294901760
    %v1488 = vsub.f32 %v1486, %v1487
    %v1489 = vand.u32 %v1488, 4294901760
    %1490 = vmatmul.f32.gmra.mxu0 %v1489
    %v1491 = vpop.f32.mrf.mxu0
    %v1492 = vadd.f32 %v1439, %v1491
    %v1493 = vand.u32 %v575, 4294901760
    %v1494 = vsub.f32 %v575, %v1493
    %v1495 = vand.u32 %v1494, 4294901760
    %v1496 = vsub.f32 %v1494, %v1495
    %v1497 = vand.u32 %v1496, 4294901760
    %1498 = vmatmul.f32.gmra.mxu0 %v1497
    %v1499 = vpop.f32.mrf.mxu0
    %v1500 = vadd.f32 %v1443, %v1499
    %v1501 = vand.u32 %v579, 4294901760
    %v1502 = vsub.f32 %v579, %v1501
    %v1503 = vand.u32 %v1502, 4294901760
    %v1504 = vsub.f32 %v1502, %v1503
    %v1505 = vand.u32 %v1504, 4294901760
    %1506 = vmatmul.f32.gmra.mxu0 %v1505
    %v1507 = vpop.f32.mrf.mxu0
    %v1508 = vadd.f32 %v1447, %v1507
    %v1509 = vand.u32 %v583, 4294901760
    %v1510 = vsub.f32 %v583, %v1509
    %v1511 = vand.u32 %v1510, 4294901760
    %v1512 = vsub.f32 %v1510, %v1511
    %v1513 = vand.u32 %v1512, 4294901760
    %1514 = vmatmul.f32.gmra.mxu0 %v1513
    %v1515 = vpop.f32.mrf.mxu0
    %v1516 = vadd.f32 %v1451, %v1515
    %1517 = vdwg.mxu0
    %v1518 = vand.u32 %v155, 4294901760
    %v1519 = vsub.f32 %v155, %v1518
    %v1520 = vand.u32 %v1519, 4294901760
    %v1521 = vsub.f32 %v1519, %v1520
    %v1522 = vand.u32 %v1521, 4294901760
    %1523 = vmatpush.msra.mxu0 %v1522
    %v1524 = vand.u32 %v154, 4294901760
    %v1525 = vsub.f32 %v154, %v1524
    %v1526 = vand.u32 %v1525, 4294901760
    %v1527 = vsub.f32 %v1525, %v1526
    %v1528 = vand.u32 %v1527, 4294901760
    %1529 = vmatpush.msra.mxu0 %v1528
    %v1530 = vand.u32 %v153, 4294901760
    %v1531 = vsub.f32 %v153, %v1530
    %v1532 = vand.u32 %v1531, 4294901760
    %v1533 = vsub.f32 %v1531, %v1532
    %v1534 = vand.u32 %v1533, 4294901760
    %1535 = vmatpush.msra.mxu0 %v1534
    %v1536 = vand.u32 %v152, 4294901760
    %v1537 = vsub.f32 %v152, %v1536
    %v1538 = vand.u32 %v1537, 4294901760
    %v1539 = vsub.f32 %v1537, %v1538
    %v1540 = vand.u32 %v1539, 4294901760
    %1541 = vmatpush.msra.mxu0 %v1540
    %v1542 = vand.u32 %v151, 4294901760
    %v1543 = vsub.f32 %v151, %v1542
    %v1544 = vand.u32 %v1543, 4294901760
    %v1545 = vsub.f32 %v1543, %v1544
    %v1546 = vand.u32 %v1545, 4294901760
    %1547 = vmatpush.msra.mxu0 %v1546
    %v1548 = vand.u32 %v150, 4294901760
    %v1549 = vsub.f32 %v150, %v1548
    %v1550 = vand.u32 %v1549, 4294901760
    %v1551 = vsub.f32 %v1549, %v1550
    %v1552 = vand.u32 %v1551, 4294901760
    %1553 = vmatpush.msra.mxu0 %v1552
    %v1554 = vand.u32 %v149, 4294901760
    %v1555 = vsub.f32 %v149, %v1554
    %v1556 = vand.u32 %v1555, 4294901760
    %v1557 = vsub.f32 %v1555, %v1556
    %v1558 = vand.u32 %v1557, 4294901760
    %1559 = vmatpush.msra.mxu0 %v1558
    %v1560 = vand.u32 %v148, 4294901760
    %v1561 = vsub.f32 %v148, %v1560
    %v1562 = vand.u32 %v1561, 4294901760
    %v1563 = vsub.f32 %v1561, %v1562
    %v1564 = vand.u32 %v1563, 4294901760
    %1565 = vmatpush.msra.mxu0 %v1564
    %v1566 = vand.u32 %v147, 4294901760
    %v1567 = vsub.f32 %v147, %v1566
    %v1568 = vand.u32 %v1567, 4294901760
    %v1569 = vsub.f32 %v1567, %v1568
    %v1570 = vand.u32 %v1569, 4294901760
    %1571 = vmatpush.msra.mxu0 %v1570
    %v1572 = vand.u32 %v146, 4294901760
    %v1573 = vsub.f32 %v146, %v1572
    %v1574 = vand.u32 %v1573, 4294901760
    %v1575 = vsub.f32 %v1573, %v1574
    %v1576 = vand.u32 %v1575, 4294901760
    %1577 = vmatpush.msra.mxu0 %v1576
    %v1578 = vand.u32 %v145, 4294901760
    %v1579 = vsub.f32 %v145, %v1578
    %v1580 = vand.u32 %v1579, 4294901760
    %v1581 = vsub.f32 %v1579, %v1580
    %v1582 = vand.u32 %v1581, 4294901760
    %1583 = vmatpush.msra.mxu0 %v1582
    %v1584 = vand.u32 %v144, 4294901760
    %v1585 = vsub.f32 %v144, %v1584
    %v1586 = vand.u32 %v1585, 4294901760
    %v1587 = vsub.f32 %v1585, %v1586
    %v1588 = vand.u32 %v1587, 4294901760
    %1589 = vmatpush.msra.mxu0 %v1588
    %v1590 = vand.u32 %v143, 4294901760
    %v1591 = vsub.f32 %v143, %v1590
    %v1592 = vand.u32 %v1591, 4294901760
    %v1593 = vsub.f32 %v1591, %v1592
    %v1594 = vand.u32 %v1593, 4294901760
    %1595 = vmatpush.msra.mxu0 %v1594
    %v1596 = vand.u32 %v142, 4294901760
    %v1597 = vsub.f32 %v142, %v1596
    %v1598 = vand.u32 %v1597, 4294901760
    %v1599 = vsub.f32 %v1597, %v1598
    %v1600 = vand.u32 %v1599, 4294901760
    %1601 = vmatpush.msra.mxu0 %v1600
    %v1602 = vand.u32 %v141, 4294901760
    %v1603 = vsub.f32 %v141, %v1602
    %v1604 = vand.u32 %v1603, 4294901760
    %v1605 = vsub.f32 %v1603, %v1604
    %v1606 = vand.u32 %v1605, 4294901760
    %1607 = vmatpush.msra.mxu0 %v1606
    %v1608 = vand.u32 %v140, 4294901760
    %v1609 = vsub.f32 %v140, %v1608
    %v1610 = vand.u32 %v1609, 4294901760
    %v1611 = vsub.f32 %v1609, %v1610
    %v1612 = vand.u32 %v1611, 4294901760
    %1613 = vmatpush.msra.mxu0 %v1612
    %v1614 = vand.u32 %v571, 4294901760
    %1615 = vmatmul.f32.gmra.mxu0 %v1614
    %v1616 = vpop.f32.mrf.mxu0
    %v1617 = vadd.f32 %v1492, %v1616
    %v1618 = vand.u32 %v575, 4294901760
    %1619 = vmatmul.f32.gmra.mxu0 %v1618
    %v1620 = vpop.f32.mrf.mxu0
    %v1621 = vadd.f32 %v1500, %v1620
    %v1622 = vand.u32 %v579, 4294901760
    %1623 = vmatmul.f32.gmra.mxu0 %v1622
    %v1624 = vpop.f32.mrf.mxu0
    %v1625 = vadd.f32 %v1508, %v1624
    %v1626 = vand.u32 %v583, 4294901760
    %1627 = vmatmul.f32.gmra.mxu0 %v1626
    %v1628 = vpop.f32.mrf.mxu0
    %v1629 = vadd.f32 %v1516, %v1628
    %1630 = vdwg.mxu0
    %v1631 = vand.u32 %v155, 4294901760
    %v1632 = vsub.f32 %v155, %v1631
    %1633 = vmatpush.msra.mxu0 %v1632
    %v1634 = vand.u32 %v154, 4294901760
    %v1635 = vsub.f32 %v154, %v1634
    %1636 = vmatpush.msra.mxu0 %v1635
    %v1637 = vand.u32 %v153, 4294901760
    %v1638 = vsub.f32 %v153, %v1637
    %1639 = vmatpush.msra.mxu0 %v1638
    %v1640 = vand.u32 %v152, 4294901760
    %v1641 = vsub.f32 %v152, %v1640
    %1642 = vmatpush.msra.mxu0 %v1641
    %v1643 = vand.u32 %v151, 4294901760
    %v1644 = vsub.f32 %v151, %v1643
    %1645 = vmatpush.msra.mxu0 %v1644
    %v1646 = vand.u32 %v150, 4294901760
    %v1647 = vsub.f32 %v150, %v1646
    %1648 = vmatpush.msra.mxu0 %v1647
    %v1649 = vand.u32 %v149, 4294901760
    %v1650 = vsub.f32 %v149, %v1649
    %1651 = vmatpush.msra.mxu0 %v1650
    %v1652 = vand.u32 %v148, 4294901760
    %v1653 = vsub.f32 %v148, %v1652
    %1654 = vmatpush.msra.mxu0 %v1653
    %v1655 = vand.u32 %v147, 4294901760
    %v1656 = vsub.f32 %v147, %v1655
    %1657 = vmatpush.msra.mxu0 %v1656
    %v1658 = vand.u32 %v146, 4294901760
    %v1659 = vsub.f32 %v146, %v1658
    %1660 = vmatpush.msra.mxu0 %v1659
    %v1661 = vand.u32 %v145, 4294901760
    %v1662 = vsub.f32 %v145, %v1661
    %1663 = vmatpush.msra.mxu0 %v1662
    %v1664 = vand.u32 %v144, 4294901760
    %v1665 = vsub.f32 %v144, %v1664
    %1666 = vmatpush.msra.mxu0 %v1665
    %v1667 = vand.u32 %v143, 4294901760
    %v1668 = vsub.f32 %v143, %v1667
    %1669 = vmatpush.msra.mxu0 %v1668
    %v1670 = vand.u32 %v142, 4294901760
    %v1671 = vsub.f32 %v142, %v1670
    %1672 = vmatpush.msra.mxu0 %v1671
    %v1673 = vand.u32 %v141, 4294901760
    %v1674 = vsub.f32 %v141, %v1673
    %1675 = vmatpush.msra.mxu0 %v1674
    %v1676 = vand.u32 %v140, 4294901760
    %v1677 = vsub.f32 %v140, %v1676
    %1678 = vmatpush.msra.mxu0 %v1677
    %v1679 = vand.u32 %v571, 4294901760
    %v1680 = vsub.f32 %v571, %v1679
    %1681 = vmatmul.f32.gmra.mxu0 %v1680
    %v1682 = vpop.f32.mrf.mxu0
    %v1683 = vadd.f32 %v1617, %v1682
    %v1684 = vand.u32 %v575, 4294901760
    %v1685 = vsub.f32 %v575, %v1684
    %1686 = vmatmul.f32.gmra.mxu0 %v1685
    %v1687 = vpop.f32.mrf.mxu0
    %v1688 = vadd.f32 %v1621, %v1687
    %v1689 = vand.u32 %v579, 4294901760
    %v1690 = vsub.f32 %v579, %v1689
    %1691 = vmatmul.f32.gmra.mxu0 %v1690
    %v1692 = vpop.f32.mrf.mxu0
    %v1693 = vadd.f32 %v1625, %v1692
    %v1694 = vand.u32 %v583, 4294901760
    %v1695 = vsub.f32 %v583, %v1694
    %1696 = vmatmul.f32.gmra.mxu0 %v1695
    %v1697 = vpop.f32.mrf.mxu0
    %v1698 = vadd.f32 %v1629, %v1697
    %1699 = vdwg.mxu0
    %v1700 = vand.u32 %v155, 4294901760
    %1701 = vmatpush.msra.mxu0 %v1700
    %v1702 = vand.u32 %v154, 4294901760
    %1703 = vmatpush.msra.mxu0 %v1702
    %v1704 = vand.u32 %v153, 4294901760
    %1705 = vmatpush.msra.mxu0 %v1704
    %v1706 = vand.u32 %v152, 4294901760
    %1707 = vmatpush.msra.mxu0 %v1706
    %v1708 = vand.u32 %v151, 4294901760
    %1709 = vmatpush.msra.mxu0 %v1708
    %v1710 = vand.u32 %v150, 4294901760
    %1711 = vmatpush.msra.mxu0 %v1710
    %v1712 = vand.u32 %v149, 4294901760
    %1713 = vmatpush.msra.mxu0 %v1712
    %v1714 = vand.u32 %v148, 4294901760
    %1715 = vmatpush.msra.mxu0 %v1714
    %v1716 = vand.u32 %v147, 4294901760
    %1717 = vmatpush.msra.mxu0 %v1716
    %v1718 = vand.u32 %v146, 4294901760
    %1719 = vmatpush.msra.mxu0 %v1718
    %v1720 = vand.u32 %v145, 4294901760
    %1721 = vmatpush.msra.mxu0 %v1720
    %v1722 = vand.u32 %v144, 4294901760
    %1723 = vmatpush.msra.mxu0 %v1722
    %v1724 = vand.u32 %v143, 4294901760
    %1725 = vmatpush.msra.mxu0 %v1724
    %v1726 = vand.u32 %v142, 4294901760
    %1727 = vmatpush.msra.mxu0 %v1726
    %v1728 = vand.u32 %v141, 4294901760
    %1729 = vmatpush.msra.mxu0 %v1728
    %v1730 = vand.u32 %v140, 4294901760
    %1731 = vmatpush.msra.mxu0 %v1730
    %v1732 = vand.u32 %v571, 4294901760
    %v1733 = vsub.f32 %v571, %v1732
    %v1734 = vand.u32 %v1733, 4294901760
    %1735 = vmatmul.f32.gmra.mxu0 %v1734
    %v1736 = vpop.f32.mrf.mxu0
    %v1737 = vadd.f32 %v1683, %v1736
    %v1738 = vand.u32 %v575, 4294901760
    %v1739 = vsub.f32 %v575, %v1738
    %v1740 = vand.u32 %v1739, 4294901760
    %1741 = vmatmul.f32.gmra.mxu0 %v1740
    %v1742 = vpop.f32.mrf.mxu0
    %v1743 = vadd.f32 %v1688, %v1742
    %v1744 = vand.u32 %v579, 4294901760
    %v1745 = vsub.f32 %v579, %v1744
    %v1746 = vand.u32 %v1745, 4294901760
    %1747 = vmatmul.f32.gmra.mxu0 %v1746
    %v1748 = vpop.f32.mrf.mxu0
    %v1749 = vadd.f32 %v1693, %v1748
    %v1750 = vand.u32 %v583, 4294901760
    %v1751 = vsub.f32 %v583, %v1750
    %v1752 = vand.u32 %v1751, 4294901760
    %1753 = vmatmul.f32.gmra.mxu0 %v1752
    %v1754 = vpop.f32.mrf.mxu0
    %v1755 = vadd.f32 %v1698, %v1754
    %1756 = vdwg.mxu0
    %v1757 = vand.u32 %v155, 4294901760
    %v1758 = vsub.f32 %v155, %v1757
    %v1759 = vand.u32 %v1758, 4294901760
    %1760 = vmatpush.msra.mxu0 %v1759
    %v1761 = vand.u32 %v154, 4294901760
    %v1762 = vsub.f32 %v154, %v1761
    %v1763 = vand.u32 %v1762, 4294901760
    %1764 = vmatpush.msra.mxu0 %v1763
    %v1765 = vand.u32 %v153, 4294901760
    %v1766 = vsub.f32 %v153, %v1765
    %v1767 = vand.u32 %v1766, 4294901760
    %1768 = vmatpush.msra.mxu0 %v1767
    %v1769 = vand.u32 %v152, 4294901760
    %v1770 = vsub.f32 %v152, %v1769
    %v1771 = vand.u32 %v1770, 4294901760
    %1772 = vmatpush.msra.mxu0 %v1771
    %v1773 = vand.u32 %v151, 4294901760
    %v1774 = vsub.f32 %v151, %v1773
    %v1775 = vand.u32 %v1774, 4294901760
    %1776 = vmatpush.msra.mxu0 %v1775
    %v1777 = vand.u32 %v150, 4294901760
    %v1778 = vsub.f32 %v150, %v1777
    %v1779 = vand.u32 %v1778, 4294901760
    %1780 = vmatpush.msra.mxu0 %v1779
    %v1781 = vand.u32 %v149, 4294901760
    %v1782 = vsub.f32 %v149, %v1781
    %v1783 = vand.u32 %v1782, 4294901760
    %1784 = vmatpush.msra.mxu0 %v1783
    %v1785 = vand.u32 %v148, 4294901760
    %v1786 = vsub.f32 %v148, %v1785
    %v1787 = vand.u32 %v1786, 4294901760
    %1788 = vmatpush.msra.mxu0 %v1787
    %v1789 = vand.u32 %v147, 4294901760
    %v1790 = vsub.f32 %v147, %v1789
    %v1791 = vand.u32 %v1790, 4294901760
    %1792 = vmatpush.msra.mxu0 %v1791
    %v1793 = vand.u32 %v146, 4294901760
    %v1794 = vsub.f32 %v146, %v1793
    %v1795 = vand.u32 %v1794, 4294901760
    %1796 = vmatpush.msra.mxu0 %v1795
    %v1797 = vand.u32 %v145, 4294901760
    %v1798 = vsub.f32 %v145, %v1797
    %v1799 = vand.u32 %v1798, 4294901760
    %1800 = vmatpush.msra.mxu0 %v1799
    %v1801 = vand.u32 %v144, 4294901760
    %v1802 = vsub.f32 %v144, %v1801
    %v1803 = vand.u32 %v1802, 4294901760
    %1804 = vmatpush.msra.mxu0 %v1803
    %v1805 = vand.u32 %v143, 4294901760
    %v1806 = vsub.f32 %v143, %v1805
    %v1807 = vand.u32 %v1806, 4294901760
    %1808 = vmatpush.msra.mxu0 %v1807
    %v1809 = vand.u32 %v142, 4294901760
    %v1810 = vsub.f32 %v142, %v1809
    %v1811 = vand.u32 %v1810, 4294901760
    %1812 = vmatpush.msra.mxu0 %v1811
    %v1813 = vand.u32 %v141, 4294901760
    %v1814 = vsub.f32 %v141, %v1813
    %v1815 = vand.u32 %v1814, 4294901760
    %1816 = vmatpush.msra.mxu0 %v1815
    %v1817 = vand.u32 %v140, 4294901760
    %v1818 = vsub.f32 %v140, %v1817
    %v1819 = vand.u32 %v1818, 4294901760
    %1820 = vmatpush.msra.mxu0 %v1819
    %v1821 = vand.u32 %v571, 4294901760
    %1822 = vmatmul.f32.gmra.mxu0 %v1821
    %v1823 = vpop.f32.mrf.mxu0
    %v1824 = vadd.f32 %v1737, %v1823
    %v1825 = vand.u32 %v575, 4294901760
    %1826 = vmatmul.f32.gmra.mxu0 %v1825
    %v1827 = vpop.f32.mrf.mxu0
    %v1828 = vadd.f32 %v1743, %v1827
    %v1829 = vand.u32 %v579, 4294901760
    %1830 = vmatmul.f32.gmra.mxu0 %v1829
    %v1831 = vpop.f32.mrf.mxu0
    %v1832 = vadd.f32 %v1749, %v1831
    %v1833 = vand.u32 %v583, 4294901760
    %1834 = vmatmul.f32.gmra.mxu0 %v1833
    %v1835 = vpop.f32.mrf.mxu0
    %v1836 = vadd.f32 %v1755, %v1835
    %1837 = vdwg.mxu0
    %v1838 = vand.u32 %v155, 4294901760
    %1839 = vmatpush.msra.mxu0 %v1838
    %v1840 = vand.u32 %v154, 4294901760
    %1841 = vmatpush.msra.mxu0 %v1840
    %v1842 = vand.u32 %v153, 4294901760
    %1843 = vmatpush.msra.mxu0 %v1842
    %v1844 = vand.u32 %v152, 4294901760
    %1845 = vmatpush.msra.mxu0 %v1844
    %v1846 = vand.u32 %v151, 4294901760
    %1847 = vmatpush.msra.mxu0 %v1846
    %v1848 = vand.u32 %v150, 4294901760
    %1849 = vmatpush.msra.mxu0 %v1848
    %v1850 = vand.u32 %v149, 4294901760
    %1851 = vmatpush.msra.mxu0 %v1850
    %v1852 = vand.u32 %v148, 4294901760
    %1853 = vmatpush.msra.mxu0 %v1852
    %v1854 = vand.u32 %v147, 4294901760
    %1855 = vmatpush.msra.mxu0 %v1854
    %v1856 = vand.u32 %v146, 4294901760
    %1857 = vmatpush.msra.mxu0 %v1856
    %v1858 = vand.u32 %v145, 4294901760
    %1859 = vmatpush.msra.mxu0 %v1858
    %v1860 = vand.u32 %v144, 4294901760
    %1861 = vmatpush.msra.mxu0 %v1860
    %v1862 = vand.u32 %v143, 4294901760
    %1863 = vmatpush.msra.mxu0 %v1862
    %v1864 = vand.u32 %v142, 4294901760
    %1865 = vmatpush.msra.mxu0 %v1864
    %v1866 = vand.u32 %v141, 4294901760
    %1867 = vmatpush.msra.mxu0 %v1866
    %v1868 = vand.u32 %v140, 4294901760
    %1869 = vmatpush.msra.mxu0 %v1868
    %v1870 = vand.u32 %v571, 4294901760
    %1871 = vmatmul.f32.gmra.mxu0 %v1870
    %v1872 = vpop.f32.mrf.mxu0
    %v1873 = vadd.f32 %v1824, %v1872
    %v1874 = vand.u32 %v575, 4294901760
    %1875 = vmatmul.f32.gmra.mxu0 %v1874
    %v1876 = vpop.f32.mrf.mxu0
    %v1877 = vadd.f32 %v1828, %v1876
    %v1878 = vand.u32 %v579, 4294901760
    %1879 = vmatmul.f32.gmra.mxu0 %v1878
    %v1880 = vpop.f32.mrf.mxu0
    %v1881 = vadd.f32 %v1832, %v1880
    %v1882 = vand.u32 %v583, 4294901760
    %1883 = vmatmul.f32.gmra.mxu0 %v1882
    %v1884 = vpop.f32.mrf.mxu0
    %v1885 = vadd.f32 %v1836, %v1884
    %1886 = vdwg.mxu0
    %v1887 = vadd.f32 %v1873, %v1877
    %v1888 = vadd.f32 %v1887, %v1881
    %v1889 = vadd.f32 %v1888, %v1885
    %v1890 = vrot.slane %v1889, 4
    %v1891 = vadd.f32 %v1889, %v1890
    %v1892 = vrot.slane %v1891, 2
    %v1893 = vadd.f32 %v1891, %v1892
    %v1894 = vrot.slane %v1893, 1
    %v1895 = vadd.f32 %v1893, %v1894
    %v1896 = vmul.f32 %v1873, %v1873
    %v1897 = vmul.f32 %v1877, %v1877
    %v1898 = vmul.f32 %v1881, %v1881
    %v1899 = vmul.f32 %v1885, %v1885
    %v1900 = vadd.f32 %v1896, %v1897
    %v1901 = vadd.f32 %v1900, %v1898
    %v1902 = vadd.f32 %v1901, %v1899
    %v1903 = vrot.slane %v1902, 4
    %v1904 = vadd.f32 %v1902, %v1903
    %v1905 = vrot.slane %v1904, 2
    %v1906 = vadd.f32 %v1904, %v1905
    %v1907 = vrot.slane %v1906, 1
    %v1908 = vadd.f32 %v1906, %v1907
    %vm1909 = vcmask 1040384
    %v1910 = vsel %vm1909, %v1895, %v1908
    %v1911 = vand.u32 %v103, 4294901760
    %1912 = vmatpush.msra.mxu0 %v1911
    %v1913 = vand.u32 %v102, 4294901760
    %1914 = vmatpush.msra.mxu0 %v1913
    %v1915 = vand.u32 %v101, 4294901760
    %1916 = vmatpush.msra.mxu0 %v1915
    %v1917 = vand.u32 %v100, 4294901760
    %1918 = vmatpush.msra.mxu0 %v1917
    %v1919 = vand.u32 %v99, 4294901760
    %1920 = vmatpush.msra.mxu0 %v1919
    %v1921 = vand.u32 %v98, 4294901760
    %1922 = vmatpush.msra.mxu0 %v1921
    %v1923 = vand.u32 %v97, 4294901760
    %1924 = vmatpush.msra.mxu0 %v1923
    %v1925 = vand.u32 %v96, 4294901760
    %1926 = vmatpush.msra.mxu0 %v1925
    %v1927 = vand.u32 %v95, 4294901760
    %1928 = vmatpush.msra.mxu0 %v1927
    %v1929 = vand.u32 %v94, 4294901760
    %1930 = vmatpush.msra.mxu0 %v1929
    %v1931 = vand.u32 %v93, 4294901760
    %1932 = vmatpush.msra.mxu0 %v1931
    %v1933 = vand.u32 %v92, 4294901760
    %1934 = vmatpush.msra.mxu0 %v1933
    %v1935 = vand.u32 %v91, 4294901760
    %1936 = vmatpush.msra.mxu0 %v1935
    %v1937 = vand.u32 %v90, 4294901760
    %1938 = vmatpush.msra.mxu0 %v1937
    %v1939 = vand.u32 %v89, 4294901760
    %1940 = vmatpush.msra.mxu0 %v1939
    %v1941 = vand.u32 %v88, 4294901760
    %1942 = vmatpush.msra.mxu0 %v1941
    %v1943 = vand.u32 %v1910, 4294901760
    %v1944 = vsub.f32 %v1910, %v1943
    %v1945 = vand.u32 %v1944, 4294901760
    %v1946 = vsub.f32 %v1944, %v1945
    %v1947 = vand.u32 %v1946, 4294901760
    %1948 = vmatmul.f32.gmra.mxu0 %v1947
    %v1949 = vpop.f32.mrf.mxu0
    %v1950 = vadd.f32 0.0, %v1949
    %1951 = vdwg.mxu0
    %v1952 = vand.u32 %v103, 4294901760
    %v1953 = vsub.f32 %v103, %v1952
    %v1954 = vand.u32 %v1953, 4294901760
    %v1955 = vsub.f32 %v1953, %v1954
    %v1956 = vand.u32 %v1955, 4294901760
    %1957 = vmatpush.msra.mxu0 %v1956
    %v1958 = vand.u32 %v102, 4294901760
    %v1959 = vsub.f32 %v102, %v1958
    %v1960 = vand.u32 %v1959, 4294901760
    %v1961 = vsub.f32 %v1959, %v1960
    %v1962 = vand.u32 %v1961, 4294901760
    %1963 = vmatpush.msra.mxu0 %v1962
    %v1964 = vand.u32 %v101, 4294901760
    %v1965 = vsub.f32 %v101, %v1964
    %v1966 = vand.u32 %v1965, 4294901760
    %v1967 = vsub.f32 %v1965, %v1966
    %v1968 = vand.u32 %v1967, 4294901760
    %1969 = vmatpush.msra.mxu0 %v1968
    %v1970 = vand.u32 %v100, 4294901760
    %v1971 = vsub.f32 %v100, %v1970
    %v1972 = vand.u32 %v1971, 4294901760
    %v1973 = vsub.f32 %v1971, %v1972
    %v1974 = vand.u32 %v1973, 4294901760
    %1975 = vmatpush.msra.mxu0 %v1974
    %v1976 = vand.u32 %v99, 4294901760
    %v1977 = vsub.f32 %v99, %v1976
    %v1978 = vand.u32 %v1977, 4294901760
    %v1979 = vsub.f32 %v1977, %v1978
    %v1980 = vand.u32 %v1979, 4294901760
    %1981 = vmatpush.msra.mxu0 %v1980
    %v1982 = vand.u32 %v98, 4294901760
    %v1983 = vsub.f32 %v98, %v1982
    %v1984 = vand.u32 %v1983, 4294901760
    %v1985 = vsub.f32 %v1983, %v1984
    %v1986 = vand.u32 %v1985, 4294901760
    %1987 = vmatpush.msra.mxu0 %v1986
    %v1988 = vand.u32 %v97, 4294901760
    %v1989 = vsub.f32 %v97, %v1988
    %v1990 = vand.u32 %v1989, 4294901760
    %v1991 = vsub.f32 %v1989, %v1990
    %v1992 = vand.u32 %v1991, 4294901760
    %1993 = vmatpush.msra.mxu0 %v1992
    %v1994 = vand.u32 %v96, 4294901760
    %v1995 = vsub.f32 %v96, %v1994
    %v1996 = vand.u32 %v1995, 4294901760
    %v1997 = vsub.f32 %v1995, %v1996
    %v1998 = vand.u32 %v1997, 4294901760
    %1999 = vmatpush.msra.mxu0 %v1998
    %v2000 = vand.u32 %v95, 4294901760
    %v2001 = vsub.f32 %v95, %v2000
    %v2002 = vand.u32 %v2001, 4294901760
    %v2003 = vsub.f32 %v2001, %v2002
    %v2004 = vand.u32 %v2003, 4294901760
    %2005 = vmatpush.msra.mxu0 %v2004
    %v2006 = vand.u32 %v94, 4294901760
    %v2007 = vsub.f32 %v94, %v2006
    %v2008 = vand.u32 %v2007, 4294901760
    %v2009 = vsub.f32 %v2007, %v2008
    %v2010 = vand.u32 %v2009, 4294901760
    %2011 = vmatpush.msra.mxu0 %v2010
    %v2012 = vand.u32 %v93, 4294901760
    %v2013 = vsub.f32 %v93, %v2012
    %v2014 = vand.u32 %v2013, 4294901760
    %v2015 = vsub.f32 %v2013, %v2014
    %v2016 = vand.u32 %v2015, 4294901760
    %2017 = vmatpush.msra.mxu0 %v2016
    %v2018 = vand.u32 %v92, 4294901760
    %v2019 = vsub.f32 %v92, %v2018
    %v2020 = vand.u32 %v2019, 4294901760
    %v2021 = vsub.f32 %v2019, %v2020
    %v2022 = vand.u32 %v2021, 4294901760
    %2023 = vmatpush.msra.mxu0 %v2022
    %v2024 = vand.u32 %v91, 4294901760
    %v2025 = vsub.f32 %v91, %v2024
    %v2026 = vand.u32 %v2025, 4294901760
    %v2027 = vsub.f32 %v2025, %v2026
    %v2028 = vand.u32 %v2027, 4294901760
    %2029 = vmatpush.msra.mxu0 %v2028
    %v2030 = vand.u32 %v90, 4294901760
    %v2031 = vsub.f32 %v90, %v2030
    %v2032 = vand.u32 %v2031, 4294901760
    %v2033 = vsub.f32 %v2031, %v2032
    %v2034 = vand.u32 %v2033, 4294901760
    %2035 = vmatpush.msra.mxu0 %v2034
    %v2036 = vand.u32 %v89, 4294901760
    %v2037 = vsub.f32 %v89, %v2036
    %v2038 = vand.u32 %v2037, 4294901760
    %v2039 = vsub.f32 %v2037, %v2038
    %v2040 = vand.u32 %v2039, 4294901760
    %2041 = vmatpush.msra.mxu0 %v2040
    %v2042 = vand.u32 %v88, 4294901760
    %v2043 = vsub.f32 %v88, %v2042
    %v2044 = vand.u32 %v2043, 4294901760
    %v2045 = vsub.f32 %v2043, %v2044
    %v2046 = vand.u32 %v2045, 4294901760
    %2047 = vmatpush.msra.mxu0 %v2046
    %v2048 = vand.u32 %v1910, 4294901760
    %2049 = vmatmul.f32.gmra.mxu0 %v2048
    %v2050 = vpop.f32.mrf.mxu0
    %v2051 = vadd.f32 %v1950, %v2050
    %2052 = vdwg.mxu0
    %v2053 = vand.u32 %v103, 4294901760
    %v2054 = vsub.f32 %v103, %v2053
    %2055 = vmatpush.msra.mxu0 %v2054
    %v2056 = vand.u32 %v102, 4294901760
    %v2057 = vsub.f32 %v102, %v2056
    %2058 = vmatpush.msra.mxu0 %v2057
    %v2059 = vand.u32 %v101, 4294901760
    %v2060 = vsub.f32 %v101, %v2059
    %2061 = vmatpush.msra.mxu0 %v2060
    %v2062 = vand.u32 %v100, 4294901760
    %v2063 = vsub.f32 %v100, %v2062
    %2064 = vmatpush.msra.mxu0 %v2063
    %v2065 = vand.u32 %v99, 4294901760
    %v2066 = vsub.f32 %v99, %v2065
    %2067 = vmatpush.msra.mxu0 %v2066
    %v2068 = vand.u32 %v98, 4294901760
    %v2069 = vsub.f32 %v98, %v2068
    %2070 = vmatpush.msra.mxu0 %v2069
    %v2071 = vand.u32 %v97, 4294901760
    %v2072 = vsub.f32 %v97, %v2071
    %2073 = vmatpush.msra.mxu0 %v2072
    %v2074 = vand.u32 %v96, 4294901760
    %v2075 = vsub.f32 %v96, %v2074
    %2076 = vmatpush.msra.mxu0 %v2075
    %v2077 = vand.u32 %v95, 4294901760
    %v2078 = vsub.f32 %v95, %v2077
    %2079 = vmatpush.msra.mxu0 %v2078
    %v2080 = vand.u32 %v94, 4294901760
    %v2081 = vsub.f32 %v94, %v2080
    %2082 = vmatpush.msra.mxu0 %v2081
    %v2083 = vand.u32 %v93, 4294901760
    %v2084 = vsub.f32 %v93, %v2083
    %2085 = vmatpush.msra.mxu0 %v2084
    %v2086 = vand.u32 %v92, 4294901760
    %v2087 = vsub.f32 %v92, %v2086
    %2088 = vmatpush.msra.mxu0 %v2087
    %v2089 = vand.u32 %v91, 4294901760
    %v2090 = vsub.f32 %v91, %v2089
    %2091 = vmatpush.msra.mxu0 %v2090
    %v2092 = vand.u32 %v90, 4294901760
    %v2093 = vsub.f32 %v90, %v2092
    %2094 = vmatpush.msra.mxu0 %v2093
    %v2095 = vand.u32 %v89, 4294901760
    %v2096 = vsub.f32 %v89, %v2095
    %2097 = vmatpush.msra.mxu0 %v2096
    %v2098 = vand.u32 %v88, 4294901760
    %v2099 = vsub.f32 %v88, %v2098
    %2100 = vmatpush.msra.mxu0 %v2099
    %v2101 = vand.u32 %v1910, 4294901760
    %v2102 = vsub.f32 %v1910, %v2101
    %2103 = vmatmul.f32.gmra.mxu0 %v2102
    %v2104 = vpop.f32.mrf.mxu0
    %v2105 = vadd.f32 %v2051, %v2104
    %2106 = vdwg.mxu0
    %v2107 = vand.u32 %v103, 4294901760
    %2108 = vmatpush.msra.mxu0 %v2107
    %v2109 = vand.u32 %v102, 4294901760
    %2110 = vmatpush.msra.mxu0 %v2109
    %v2111 = vand.u32 %v101, 4294901760
    %2112 = vmatpush.msra.mxu0 %v2111
    %v2113 = vand.u32 %v100, 4294901760
    %2114 = vmatpush.msra.mxu0 %v2113
    %v2115 = vand.u32 %v99, 4294901760
    %2116 = vmatpush.msra.mxu0 %v2115
    %v2117 = vand.u32 %v98, 4294901760
    %2118 = vmatpush.msra.mxu0 %v2117
    %v2119 = vand.u32 %v97, 4294901760
    %2120 = vmatpush.msra.mxu0 %v2119
    %v2121 = vand.u32 %v96, 4294901760
    %2122 = vmatpush.msra.mxu0 %v2121
    %v2123 = vand.u32 %v95, 4294901760
    %2124 = vmatpush.msra.mxu0 %v2123
    %v2125 = vand.u32 %v94, 4294901760
    %2126 = vmatpush.msra.mxu0 %v2125
    %v2127 = vand.u32 %v93, 4294901760
    %2128 = vmatpush.msra.mxu0 %v2127
    %v2129 = vand.u32 %v92, 4294901760
    %2130 = vmatpush.msra.mxu0 %v2129
    %v2131 = vand.u32 %v91, 4294901760
    %2132 = vmatpush.msra.mxu0 %v2131
    %v2133 = vand.u32 %v90, 4294901760
    %2134 = vmatpush.msra.mxu0 %v2133
    %v2135 = vand.u32 %v89, 4294901760
    %2136 = vmatpush.msra.mxu0 %v2135
    %v2137 = vand.u32 %v88, 4294901760
    %2138 = vmatpush.msra.mxu0 %v2137
    %v2139 = vand.u32 %v1910, 4294901760
    %v2140 = vsub.f32 %v1910, %v2139
    %v2141 = vand.u32 %v2140, 4294901760
    %2142 = vmatmul.f32.gmra.mxu0 %v2141
    %v2143 = vpop.f32.mrf.mxu0
    %v2144 = vadd.f32 %v2105, %v2143
    %2145 = vdwg.mxu0
    %v2146 = vand.u32 %v103, 4294901760
    %v2147 = vsub.f32 %v103, %v2146
    %v2148 = vand.u32 %v2147, 4294901760
    %2149 = vmatpush.msra.mxu0 %v2148
    %v2150 = vand.u32 %v102, 4294901760
    %v2151 = vsub.f32 %v102, %v2150
    %v2152 = vand.u32 %v2151, 4294901760
    %2153 = vmatpush.msra.mxu0 %v2152
    %v2154 = vand.u32 %v101, 4294901760
    %v2155 = vsub.f32 %v101, %v2154
    %v2156 = vand.u32 %v2155, 4294901760
    %2157 = vmatpush.msra.mxu0 %v2156
    %v2158 = vand.u32 %v100, 4294901760
    %v2159 = vsub.f32 %v100, %v2158
    %v2160 = vand.u32 %v2159, 4294901760
    %2161 = vmatpush.msra.mxu0 %v2160
    %v2162 = vand.u32 %v99, 4294901760
    %v2163 = vsub.f32 %v99, %v2162
    %v2164 = vand.u32 %v2163, 4294901760
    %2165 = vmatpush.msra.mxu0 %v2164
    %v2166 = vand.u32 %v98, 4294901760
    %v2167 = vsub.f32 %v98, %v2166
    %v2168 = vand.u32 %v2167, 4294901760
    %2169 = vmatpush.msra.mxu0 %v2168
    %v2170 = vand.u32 %v97, 4294901760
    %v2171 = vsub.f32 %v97, %v2170
    %v2172 = vand.u32 %v2171, 4294901760
    %2173 = vmatpush.msra.mxu0 %v2172
    %v2174 = vand.u32 %v96, 4294901760
    %v2175 = vsub.f32 %v96, %v2174
    %v2176 = vand.u32 %v2175, 4294901760
    %2177 = vmatpush.msra.mxu0 %v2176
    %v2178 = vand.u32 %v95, 4294901760
    %v2179 = vsub.f32 %v95, %v2178
    %v2180 = vand.u32 %v2179, 4294901760
    %2181 = vmatpush.msra.mxu0 %v2180
    %v2182 = vand.u32 %v94, 4294901760
    %v2183 = vsub.f32 %v94, %v2182
    %v2184 = vand.u32 %v2183, 4294901760
    %2185 = vmatpush.msra.mxu0 %v2184
    %v2186 = vand.u32 %v93, 4294901760
    %v2187 = vsub.f32 %v93, %v2186
    %v2188 = vand.u32 %v2187, 4294901760
    %2189 = vmatpush.msra.mxu0 %v2188
    %v2190 = vand.u32 %v92, 4294901760
    %v2191 = vsub.f32 %v92, %v2190
    %v2192 = vand.u32 %v2191, 4294901760
    %2193 = vmatpush.msra.mxu0 %v2192
    %v2194 = vand.u32 %v91, 4294901760
    %v2195 = vsub.f32 %v91, %v2194
    %v2196 = vand.u32 %v2195, 4294901760
    %2197 = vmatpush.msra.mxu0 %v2196
    %v2198 = vand.u32 %v90, 4294901760
    %v2199 = vsub.f32 %v90, %v2198
    %v2200 = vand.u32 %v2199, 4294901760
    %2201 = vmatpush.msra.mxu0 %v2200
    %v2202 = vand.u32 %v89, 4294901760
    %v2203 = vsub.f32 %v89, %v2202
    %v2204 = vand.u32 %v2203, 4294901760
    %2205 = vmatpush.msra.mxu0 %v2204
    %v2206 = vand.u32 %v88, 4294901760
    %v2207 = vsub.f32 %v88, %v2206
    %v2208 = vand.u32 %v2207, 4294901760
    %2209 = vmatpush.msra.mxu0 %v2208
    %v2210 = vand.u32 %v1910, 4294901760
    %2211 = vmatmul.f32.gmra.mxu0 %v2210
    %v2212 = vpop.f32.mrf.mxu0
    %v2213 = vadd.f32 %v2144, %v2212
    %2214 = vdwg.mxu0
    %v2215 = vand.u32 %v103, 4294901760
    %2216 = vmatpush.msra.mxu0 %v2215
    %v2217 = vand.u32 %v102, 4294901760
    %2218 = vmatpush.msra.mxu0 %v2217
    %v2219 = vand.u32 %v101, 4294901760
    %2220 = vmatpush.msra.mxu0 %v2219
    %v2221 = vand.u32 %v100, 4294901760
    %2222 = vmatpush.msra.mxu0 %v2221
    %v2223 = vand.u32 %v99, 4294901760
    %2224 = vmatpush.msra.mxu0 %v2223
    %v2225 = vand.u32 %v98, 4294901760
    %2226 = vmatpush.msra.mxu0 %v2225
    %v2227 = vand.u32 %v97, 4294901760
    %2228 = vmatpush.msra.mxu0 %v2227
    %v2229 = vand.u32 %v96, 4294901760
    %2230 = vmatpush.msra.mxu0 %v2229
    %v2231 = vand.u32 %v95, 4294901760
    %2232 = vmatpush.msra.mxu0 %v2231
    %v2233 = vand.u32 %v94, 4294901760
    %2234 = vmatpush.msra.mxu0 %v2233
    %v2235 = vand.u32 %v93, 4294901760
    %2236 = vmatpush.msra.mxu0 %v2235
    %v2237 = vand.u32 %v92, 4294901760
    %2238 = vmatpush.msra.mxu0 %v2237
    %v2239 = vand.u32 %v91, 4294901760
    %2240 = vmatpush.msra.mxu0 %v2239
    %v2241 = vand.u32 %v90, 4294901760
    %2242 = vmatpush.msra.mxu0 %v2241
    %v2243 = vand.u32 %v89, 4294901760
    %2244 = vmatpush.msra.mxu0 %v2243
    %v2245 = vand.u32 %v88, 4294901760
    %2246 = vmatpush.msra.mxu0 %v2245
    %v2247 = vand.u32 %v1910, 4294901760
    %2248 = vmatmul.f32.gmra.mxu0 %v2247
    %v2249 = vpop.f32.mrf.mxu0
    %v2250 = vadd.f32 %v2213, %v2249
    %2251 = vdwg.mxu0
    %v2252 = vmul.f32 %v2250, %v2250
    %v2254 = vrot.slane %v2252, 7
    %v2256 = vsub.f32 %v2250, %v2254
    %v2257 = vmax.f32 %v2256, 0.0
    %v2258 = vadd.f32 %v2257, 1e-05
    %v2259 = vrsqrt.pop %v2258
    %v2260 = vmul.f32 %v2259, %v2258
    %v2261 = vmul.f32 %v2260, %v2259
    %v2262 = vmul.f32 0.5, %v2261
    %v2263 = vsub.f32 1.5, %v2262
    %v2264 = vmul.f32 %v2259, %v2263
    %vm2265 = vweird.f32 %v2258
    %vm2266 = vweird.f32 %v2259
    %vm2267 = vmor %vm2265, %vm2266
    %v2268 = vsel %vm2267, %v2259, %v2264
    %2270 = vst [vmem:[#allocation1] sm:$0xff] %v2268
    %s2271 = scalar_lea.vmem [#allocation1], 1
    %v2272 = vld [vmem:[%s2271] ss:$9 sm:$0xff]
    %v2274 = vmul.f32 %v156, %v2272
    %v2275 = vmul.f32 %v2250, %v2274
    %v2276 = vsub.f32 %v157, %v2275
    %v2278 = vperm.slane %v2274, 0
    %v2280 = vmul.f32 %v1873, %v2278
    %v2281 = vmul.f32 %v1877, %v2278
    %v2282 = vmul.f32 %v1881, %v2278
    %v2283 = vmul.f32 %v1885, %v2278
    %v2285 = vperm.slane %v2276, 0
    %v2287 = vadd.f32 %v2280, %v2285
    %v2288 = vadd.f32 %v2281, %v2285
    %v2289 = vadd.f32 %v2282, %v2285
    %v2290 = vadd.f32 %v2283, %v2285
    %v2291 = vmax.f32 %v2287, 0.0
    %v2292 = vmax.f32 %v2288, 0.0
    %v2293 = vmax.f32 %v2289, 0.0
    %v2294 = vmax.f32 %v2290, 0.0
    %v2295 = vld [vmem:[#allocation5] sm:$0xff]
    %v2296 = vld [vmem:[#allocation5 + $0x8] sm:$0xff]
    %v2297 = vld [vmem:[#allocation5 + $0x10] sm:$0xff]
    %v2298 = vld [vmem:[#allocation5 + $0x18] sm:$0xff]
    %v2299 = vld [vmem:[#allocation5 + $0x20] sm:$0xff]
    %v2300 = vld [vmem:[#allocation5 + $0x28] sm:$0xff]
    %v2301 = vld [vmem:[#allocation5 + $0x30] sm:$0xff]
    %v2302 = vld [vmem:[#allocation5 + $0x38] sm:$0xff]
    %v2303 = vld [vmem:[#allocation5 + $0x40] sm:$0xff]
    %v2304 = vld [vmem:[#allocation5 + $0x48] sm:$0xff]
    %v2305 = vld [vmem:[#allocation5 + $0x50] sm:$0xff]
    %v2306 = vld [vmem:[#allocation5 + $0x58] sm:$0xff]
    %v2307 = vld [vmem:[#allocation5 + $0x60] sm:$0xff]
    %v2308 = vld [vmem:[#allocation5 + $0x68] sm:$0xff]
    %v2309 = vld [vmem:[#allocation5 + $0x70] sm:$0xff]
    %v2310 = vld [vmem:[#allocation5 + $0x78] sm:$0xff]
    %v2311 = vld [vmem:[#allocation5 + $0x80] sm:$0xff]
    %v2312 = vld [vmem:[#allocation5 + $0x88] sm:$0xff]
    %v2313 = vld [vmem:[#allocation5 + $0x90] sm:$0xff]
    %v2314 = vld [vmem:[#allocation5 + $0x98] sm:$0xff]
    %v2315 = vld [vmem:[#allocation5 + $0xa0] sm:$0xff]
    %v2316 = vld [vmem:[#allocation5 + $0xa8] sm:$0xff]
    %v2317 = vld [vmem:[#allocation5 + $0xb0] sm:$0xff]
    %v2318 = vld [vmem:[#allocation5 + $0xb8] sm:$0xff]
    %v2319 = vld [vmem:[#allocation5 + $0xc0] sm:$0xff]
    %v2320 = vld [vmem:[#allocation5 + $0xc8] sm:$0xff]
    %v2321 = vld [vmem:[#allocation5 + $0xd0] sm:$0xff]
    %v2322 = vld [vmem:[#allocation5 + $0xd8] sm:$0xff]
    %v2323 = vld [vmem:[#allocation5 + $0xe0] sm:$0xff]
    %v2324 = vld [vmem:[#allocation5 + $0xe8] sm:$0xff]
    %v2325 = vld [vmem:[#allocation5 + $0xf0] sm:$0xff]
    %v2326 = vld [vmem:[#allocation5 + $0xf8] sm:$0xff]
    %v2327 = vld [vmem:[#allocation5 + $0x100] sm:$0xff]
    %v2328 = vld [vmem:[#allocation5 + $0x108] sm:$0xff]
    %v2329 = vld [vmem:[#allocation5 + $0x110] sm:$0xff]
    %v2330 = vld [vmem:[#allocation5 + $0x118] sm:$0xff]
    %v2331 = vld [vmem:[#allocation5 + $0x120] sm:$0xff]
    %v2332 = vld [vmem:[#allocation5 + $0x128] sm:$0xff]
    %v2333 = vld [vmem:[#allocation5 + $0x130] sm:$0xff]
    %v2334 = vld [vmem:[#allocation5 + $0x138] sm:$0xff]
    %v2335 = vld [vmem:[#allocation5 + $0x140] sm:$0xff]
    %v2336 = vld [vmem:[#allocation5 + $0x148] sm:$0xff]
    %v2337 = vld [vmem:[#allocation5 + $0x150] sm:$0xff]
    %v2338 = vld [vmem:[#allocation5 + $0x158] sm:$0xff]
    %v2339 = vld [vmem:[#allocation5 + $0x160] sm:$0xff]
    %v2340 = vld [vmem:[#allocation5 + $0x168] sm:$0xff]
    %v2341 = vld [vmem:[#allocation5 + $0x170] sm:$0xff]
    %v2342 = vld [vmem:[#allocation5 + $0x178] sm:$0xff]
    %v2343 = vld [vmem:[%s7] sm:$0x1]
    %v2344 = vld [vmem:[%s8] sm:$0x1]
    %2345 = vmatpush.msra.mxu0 0.0
    %2346 = vmatpush.msra.mxu0 0.0
    %2347 = vmatpush.msra.mxu0 0.0
    %2348 = vmatpush.msra.mxu0 0.0
    %2349 = vmatpush.msra.mxu0 0.0
    %2350 = vmatpush.msra.mxu0 0.0
    %2351 = vmatpush.msra.mxu0 0.0
    %2352 = vmatpush.msra.mxu0 0.0
    %2353 = vmatpush.msra.mxu0 0.0
    %2354 = vmatpush.msra.mxu0 0.0
    %2355 = vmatpush.msra.mxu0 0.0
    %2356 = vmatpush.msra.mxu0 0.0
    %v2357 = vand.u32 %v2294, 4294901760
    %2358 = vmatpush.msra.mxu0 %v2357
    %v2359 = vand.u32 %v2293, 4294901760
    %2360 = vmatpush.msra.mxu0 %v2359
    %v2361 = vand.u32 %v2292, 4294901760
    %2362 = vmatpush.msra.mxu0 %v2361
    %v2363 = vand.u32 %v2291, 4294901760
    %2364 = vmatpush.msra.mxu0 %v2363
    %v2365 = vand.u32 %v160, 4294901760
    %v2366 = vsub.f32 %v160, %v2365
    %v2367 = vand.u32 %v2366, 4294901760
    %v2368 = vsub.f32 %v2366, %v2367
    %v2369 = vand.u32 %v2368, 4294901760
    %2370 = vmatmul.f32.gmra.mxu0 %v2369
    %v2371 = vpop.f32.mrf.mxu0
    %v2372 = vadd.f32 0.0, %v2371
    %v2373 = vand.u32 %v163, 4294901760
    %v2374 = vsub.f32 %v163, %v2373
    %v2375 = vand.u32 %v2374, 4294901760
    %v2376 = vsub.f32 %v2374, %v2375
    %v2377 = vand.u32 %v2376, 4294901760
    %2378 = vmatmul.f32.gmra.mxu0 %v2377
    %v2379 = vpop.f32.mrf.mxu0
    %v2380 = vadd.f32 0.0, %v2379
    %v2381 = vand.u32 %v166, 4294901760
    %v2382 = vsub.f32 %v166, %v2381
    %v2383 = vand.u32 %v2382, 4294901760
    %v2384 = vsub.f32 %v2382, %v2383
    %v2385 = vand.u32 %v2384, 4294901760
    %2386 = vmatmul.f32.gmra.mxu0 %v2385
    %v2387 = vpop.f32.mrf.mxu0
    %v2388 = vadd.f32 0.0, %v2387
    %v2389 = vand.u32 %v169, 4294901760
    %v2390 = vsub.f32 %v169, %v2389
    %v2391 = vand.u32 %v2390, 4294901760
    %v2392 = vsub.f32 %v2390, %v2391
    %v2393 = vand.u32 %v2392, 4294901760
    %2394 = vmatmul.f32.gmra.mxu0 %v2393
    %v2395 = vpop.f32.mrf.mxu0
    %v2396 = vadd.f32 0.0, %v2395
    %v2397 = vand.u32 %v172, 4294901760
    %v2398 = vsub.f32 %v172, %v2397
    %v2399 = vand.u32 %v2398, 4294901760
    %v2400 = vsub.f32 %v2398, %v2399
    %v2401 = vand.u32 %v2400, 4294901760
    %2402 = vmatmul.f32.gmra.mxu0 %v2401
    %v2403 = vpop.f32.mrf.mxu0
    %v2404 = vadd.f32 0.0, %v2403
    %v2405 = vand.u32 %v175, 4294901760
    %v2406 = vsub.f32 %v175, %v2405
    %v2407 = vand.u32 %v2406, 4294901760
    %v2408 = vsub.f32 %v2406, %v2407
    %v2409 = vand.u32 %v2408, 4294901760
    %2410 = vmatmul.f32.gmra.mxu0 %v2409
    %v2411 = vpop.f32.mrf.mxu0
    %v2412 = vadd.f32 0.0, %v2411
    %v2413 = vand.u32 %v178, 4294901760
    %v2414 = vsub.f32 %v178, %v2413
    %v2415 = vand.u32 %v2414, 4294901760
    %v2416 = vsub.f32 %v2414, %v2415
    %v2417 = vand.u32 %v2416, 4294901760
    %2418 = vmatmul.f32.gmra.mxu0 %v2417
    %v2419 = vpop.f32.mrf.mxu0
    %v2420 = vadd.f32 0.0, %v2419
    %v2421 = vand.u32 %v181, 4294901760
    %v2422 = vsub.f32 %v181, %v2421
    %v2423 = vand.u32 %v2422, 4294901760
    %v2424 = vsub.f32 %v2422, %v2423
    %v2425 = vand.u32 %v2424, 4294901760
    %2426 = vmatmul.f32.gmra.mxu0 %v2425
    %v2427 = vpop.f32.mrf.mxu0
    %v2428 = vadd.f32 0.0, %v2427
    %2429 = vdwg.mxu0
    %2430 = vmatpush.msra.mxu0 0.0
    %2431 = vmatpush.msra.mxu0 0.0
    %2432 = vmatpush.msra.mxu0 0.0
    %2433 = vmatpush.msra.mxu0 0.0
    %2434 = vmatpush.msra.mxu0 0.0
    %2435 = vmatpush.msra.mxu0 0.0
    %2436 = vmatpush.msra.mxu0 0.0
    %2437 = vmatpush.msra.mxu0 0.0
    %2438 = vmatpush.msra.mxu0 0.0
    %2439 = vmatpush.msra.mxu0 0.0
    %2440 = vmatpush.msra.mxu0 0.0
    %2441 = vmatpush.msra.mxu0 0.0
    %v2442 = vand.u32 %v2294, 4294901760
    %v2443 = vsub.f32 %v2294, %v2442
    %v2444 = vand.u32 %v2443, 4294901760
    %v2445 = vsub.f32 %v2443, %v2444
    %v2446 = vand.u32 %v2445, 4294901760
    %2447 = vmatpush.msra.mxu0 %v2446
    %v2448 = vand.u32 %v2293, 4294901760
    %v2449 = vsub.f32 %v2293, %v2448
    %v2450 = vand.u32 %v2449, 4294901760
    %v2451 = vsub.f32 %v2449, %v2450
    %v2452 = vand.u32 %v2451, 4294901760
    %2453 = vmatpush.msra.mxu0 %v2452
    %v2454 = vand.u32 %v2292, 4294901760
    %v2455 = vsub.f32 %v2292, %v2454
    %v2456 = vand.u32 %v2455, 4294901760
    %v2457 = vsub.f32 %v2455, %v2456
    %v2458 = vand.u32 %v2457, 4294901760
    %2459 = vmatpush.msra.mxu0 %v2458
    %v2460 = vand.u32 %v2291, 4294901760
    %v2461 = vsub.f32 %v2291, %v2460
    %v2462 = vand.u32 %v2461, 4294901760
    %v2463 = vsub.f32 %v2461, %v2462
    %v2464 = vand.u32 %v2463, 4294901760
    %2465 = vmatpush.msra.mxu0 %v2464
    %v2466 = vand.u32 %v160, 4294901760
    %2467 = vmatmul.f32.gmra.mxu0 %v2466
    %v2468 = vpop.f32.mrf.mxu0
    %v2469 = vadd.f32 %v2372, %v2468
    %v2470 = vand.u32 %v163, 4294901760
    %2471 = vmatmul.f32.gmra.mxu0 %v2470
    %v2472 = vpop.f32.mrf.mxu0
    %v2473 = vadd.f32 %v2380, %v2472
    %v2474 = vand.u32 %v166, 4294901760
    %2475 = vmatmul.f32.gmra.mxu0 %v2474
    %v2476 = vpop.f32.mrf.mxu0
    %v2477 = vadd.f32 %v2388, %v2476
    %v2478 = vand.u32 %v169, 4294901760
    %2479 = vmatmul.f32.gmra.mxu0 %v2478
    %v2480 = vpop.f32.mrf.mxu0
    %v2481 = vadd.f32 %v2396, %v2480
    %v2482 = vand.u32 %v172, 4294901760
    %2483 = vmatmul.f32.gmra.mxu0 %v2482
    %v2484 = vpop.f32.mrf.mxu0
    %v2485 = vadd.f32 %v2404, %v2484
    %v2486 = vand.u32 %v175, 4294901760
    %2487 = vmatmul.f32.gmra.mxu0 %v2486
    %v2488 = vpop.f32.mrf.mxu0
    %v2489 = vadd.f32 %v2412, %v2488
    %v2490 = vand.u32 %v178, 4294901760
    %2491 = vmatmul.f32.gmra.mxu0 %v2490
    %v2492 = vpop.f32.mrf.mxu0
    %v2493 = vadd.f32 %v2420, %v2492
    %v2494 = vand.u32 %v181, 4294901760
    %2495 = vmatmul.f32.gmra.mxu0 %v2494
    %v2496 = vpop.f32.mrf.mxu0
    %v2497 = vadd.f32 %v2428, %v2496
    %2498 = vdwg.mxu0
    %2499 = vmatpush.msra.mxu0 0.0
    %2500 = vmatpush.msra.mxu0 0.0
    %2501 = vmatpush.msra.mxu0 0.0
    %2502 = vmatpush.msra.mxu0 0.0
    %2503 = vmatpush.msra.mxu0 0.0
    %2504 = vmatpush.msra.mxu0 0.0
    %2505 = vmatpush.msra.mxu0 0.0
    %2506 = vmatpush.msra.mxu0 0.0
    %2507 = vmatpush.msra.mxu0 0.0
    %2508 = vmatpush.msra.mxu0 0.0
    %2509 = vmatpush.msra.mxu0 0.0
    %2510 = vmatpush.msra.mxu0 0.0
    %v2511 = vand.u32 %v2294, 4294901760
    %v2512 = vsub.f32 %v2294, %v2511
    %2513 = vmatpush.msra.mxu0 %v2512
    %v2514 = vand.u32 %v2293, 4294901760
    %v2515 = vsub.f32 %v2293, %v2514
    %2516 = vmatpush.msra.mxu0 %v2515
    %v2517 = vand.u32 %v2292, 4294901760
    %v2518 = vsub.f32 %v2292, %v2517
    %2519 = vmatpush.msra.mxu0 %v2518
    %v2520 = vand.u32 %v2291, 4294901760
    %v2521 = vsub.f32 %v2291, %v2520
    %2522 = vmatpush.msra.mxu0 %v2521
    %v2523 = vand.u32 %v160, 4294901760
    %v2524 = vsub.f32 %v160, %v2523
    %2525 = vmatmul.f32.gmra.mxu0 %v2524
    %v2526 = vpop.f32.mrf.mxu0
    %v2527 = vadd.f32 %v2469, %v2526
    %v2528 = vand.u32 %v163, 4294901760
    %v2529 = vsub.f32 %v163, %v2528
    %2530 = vmatmul.f32.gmra.mxu0 %v2529
    %v2531 = vpop.f32.mrf.mxu0
    %v2532 = vadd.f32 %v2473, %v2531
    %v2533 = vand.u32 %v166, 4294901760
    %v2534 = vsub.f32 %v166, %v2533
    %2535 = vmatmul.f32.gmra.mxu0 %v2534
    %v2536 = vpop.f32.mrf.mxu0
    %v2537 = vadd.f32 %v2477, %v2536
    %v2538 = vand.u32 %v169, 4294901760
    %v2539 = vsub.f32 %v169, %v2538
    %2540 = vmatmul.f32.gmra.mxu0 %v2539
    %v2541 = vpop.f32.mrf.mxu0
    %v2542 = vadd.f32 %v2481, %v2541
    %v2543 = vand.u32 %v172, 4294901760
    %v2544 = vsub.f32 %v172, %v2543
    %2545 = vmatmul.f32.gmra.mxu0 %v2544
    %v2546 = vpop.f32.mrf.mxu0
    %v2547 = vadd.f32 %v2485, %v2546
    %v2548 = vand.u32 %v175, 4294901760
    %v2549 = vsub.f32 %v175, %v2548
    %2550 = vmatmul.f32.gmra.mxu0 %v2549
    %v2551 = vpop.f32.mrf.mxu0
    %v2552 = vadd.f32 %v2489, %v2551
    %v2553 = vand.u32 %v178, 4294901760
    %v2554 = vsub.f32 %v178, %v2553
    %2555 = vmatmul.f32.gmra.mxu0 %v2554
    %v2556 = vpop.f32.mrf.mxu0
    %v2557 = vadd.f32 %v2493, %v2556
    %v2558 = vand.u32 %v181, 4294901760
    %v2559 = vsub.f32 %v181, %v2558
    %2560 = vmatmul.f32.gmra.mxu0 %v2559
    %v2561 = vpop.f32.mrf.mxu0
    %v2562 = vadd.f32 %v2497, %v2561
    %2563 = vdwg.mxu0
    %2564 = vmatpush.msra.mxu0 0.0
    %2565 = vmatpush.msra.mxu0 0.0
    %2566 = vmatpush.msra.mxu0 0.0
    %2567 = vmatpush.msra.mxu0 0.0
    %2568 = vmatpush.msra.mxu0 0.0
    %2569 = vmatpush.msra.mxu0 0.0
    %2570 = vmatpush.msra.mxu0 0.0
    %2571 = vmatpush.msra.mxu0 0.0
    %2572 = vmatpush.msra.mxu0 0.0
    %2573 = vmatpush.msra.mxu0 0.0
    %2574 = vmatpush.msra.mxu0 0.0
    %2575 = vmatpush.msra.mxu0 0.0
    %v2576 = vand.u32 %v2294, 4294901760
    %2577 = vmatpush.msra.mxu0 %v2576
    %v2578 = vand.u32 %v2293, 4294901760
    %2579 = vmatpush.msra.mxu0 %v2578
    %v2580 = vand.u32 %v2292, 4294901760
    %2581 = vmatpush.msra.mxu0 %v2580
    %v2582 = vand.u32 %v2291, 4294901760
    %2583 = vmatpush.msra.mxu0 %v2582
    %v2584 = vand.u32 %v160, 4294901760
    %v2585 = vsub.f32 %v160, %v2584
    %v2586 = vand.u32 %v2585, 4294901760
    %2587 = vmatmul.f32.gmra.mxu0 %v2586
    %v2588 = vpop.f32.mrf.mxu0
    %v2589 = vadd.f32 %v2527, %v2588
    %v2590 = vand.u32 %v163, 4294901760
    %v2591 = vsub.f32 %v163, %v2590
    %v2592 = vand.u32 %v2591, 4294901760
    %2593 = vmatmul.f32.gmra.mxu0 %v2592
    %v2594 = vpop.f32.mrf.mxu0
    %v2595 = vadd.f32 %v2532, %v2594
    %v2596 = vand.u32 %v166, 4294901760
    %v2597 = vsub.f32 %v166, %v2596
    %v2598 = vand.u32 %v2597, 4294901760
    %2599 = vmatmul.f32.gmra.mxu0 %v2598
    %v2600 = vpop.f32.mrf.mxu0
    %v2601 = vadd.f32 %v2537, %v2600
    %v2602 = vand.u32 %v169, 4294901760
    %v2603 = vsub.f32 %v169, %v2602
    %v2604 = vand.u32 %v2603, 4294901760
    %2605 = vmatmul.f32.gmra.mxu0 %v2604
    %v2606 = vpop.f32.mrf.mxu0
    %v2607 = vadd.f32 %v2542, %v2606
    %v2608 = vand.u32 %v172, 4294901760
    %v2609 = vsub.f32 %v172, %v2608
    %v2610 = vand.u32 %v2609, 4294901760
    %2611 = vmatmul.f32.gmra.mxu0 %v2610
    %v2612 = vpop.f32.mrf.mxu0
    %v2613 = vadd.f32 %v2547, %v2612
    %v2614 = vand.u32 %v175, 4294901760
    %v2615 = vsub.f32 %v175, %v2614
    %v2616 = vand.u32 %v2615, 4294901760
    %2617 = vmatmul.f32.gmra.mxu0 %v2616
    %v2618 = vpop.f32.mrf.mxu0
    %v2619 = vadd.f32 %v2552, %v2618
    %v2620 = vand.u32 %v178, 4294901760
    %v2621 = vsub.f32 %v178, %v2620
    %v2622 = vand.u32 %v2621, 4294901760
    %2623 = vmatmul.f32.gmra.mxu0 %v2622
    %v2624 = vpop.f32.mrf.mxu0
    %v2625 = vadd.f32 %v2557, %v2624
    %v2626 = vand.u32 %v181, 4294901760
    %v2627 = vsub.f32 %v181, %v2626
    %v2628 = vand.u32 %v2627, 4294901760
    %2629 = vmatmul.f32.gmra.mxu0 %v2628
    %v2630 = vpop.f32.mrf.mxu0
    %v2631 = vadd.f32 %v2562, %v2630
    %2632 = vdwg.mxu0
    %2633 = vmatpush.msra.mxu0 0.0
    %2634 = vmatpush.msra.mxu0 0.0
    %2635 = vmatpush.msra.mxu0 0.0
    %2636 = vmatpush.msra.mxu0 0.0
    %2637 = vmatpush.msra.mxu0 0.0
    %2638 = vmatpush.msra.mxu0 0.0
    %2639 = vmatpush.msra.mxu0 0.0
    %2640 = vmatpush.msra.mxu0 0.0
    %2641 = vmatpush.msra.mxu0 0.0
    %2642 = vmatpush.msra.mxu0 0.0
    %2643 = vmatpush.msra.mxu0 0.0
    %2644 = vmatpush.msra.mxu0 0.0
    %v2645 = vand.u32 %v2294, 4294901760
    %v2646 = vsub.f32 %v2294, %v2645
    %v2647 = vand.u32 %v2646, 4294901760
    %2648 = vmatpush.msra.mxu0 %v2647
    %v2649 = vand.u32 %v2293, 4294901760
    %v2650 = vsub.f32 %v2293, %v2649
    %v2651 = vand.u32 %v2650, 4294901760
    %2652 = vmatpush.msra.mxu0 %v2651
    %v2653 = vand.u32 %v2292, 4294901760
    %v2654 = vsub.f32 %v2292, %v2653
    %v2655 = vand.u32 %v2654, 4294901760
    %2656 = vmatpush.msra.mxu0 %v2655
    %v2657 = vand.u32 %v2291, 4294901760
    %v2658 = vsub.f32 %v2291, %v2657
    %v2659 = vand.u32 %v2658, 4294901760
    %2660 = vmatpush.msra.mxu0 %v2659
    %v2661 = vand.u32 %v160, 4294901760
    %2662 = vmatmul.f32.gmra.mxu0 %v2661
    %v2663 = vpop.f32.mrf.mxu0
    %v2664 = vadd.f32 %v2589, %v2663
    %v2665 = vand.u32 %v163, 4294901760
    %2666 = vmatmul.f32.gmra.mxu0 %v2665
    %v2667 = vpop.f32.mrf.mxu0
    %v2668 = vadd.f32 %v2595, %v2667
    %v2669 = vand.u32 %v166, 4294901760
    %2670 = vmatmul.f32.gmra.mxu0 %v2669
    %v2671 = vpop.f32.mrf.mxu0
    %v2672 = vadd.f32 %v2601, %v2671
    %v2673 = vand.u32 %v169, 4294901760
    %2674 = vmatmul.f32.gmra.mxu0 %v2673
    %v2675 = vpop.f32.mrf.mxu0
    %v2676 = vadd.f32 %v2607, %v2675
    %v2677 = vand.u32 %v172, 4294901760
    %2678 = vmatmul.f32.gmra.mxu0 %v2677
    %v2679 = vpop.f32.mrf.mxu0
    %v2680 = vadd.f32 %v2613, %v2679
    %v2681 = vand.u32 %v175, 4294901760
    %2682 = vmatmul.f32.gmra.mxu0 %v2681
    %v2683 = vpop.f32.mrf.mxu0
    %v2684 = vadd.f32 %v2619, %v2683
    %v2685 = vand.u32 %v178, 4294901760
    %2686 = vmatmul.f32.gmra.mxu0 %v2685
    %v2687 = vpop.f32.mrf.mxu0
    %v2688 = vadd.f32 %v2625, %v2687
    %v2689 = vand.u32 %v181, 4294901760
    %2690 = vmatmul.f32.gmra.mxu0 %v2689
    %v2691 = vpop.f32.mrf.mxu0
    %v2692 = vadd.f32 %v2631, %v2691
    %2693 = vdwg.mxu0
    %2694 = vmatpush.msra.mxu0 0.0
    %2695 = vmatpush.msra.mxu0 0.0
    %2696 = vmatpush.msra.mxu0 0.0
    %2697 = vmatpush.msra.mxu0 0.0
    %2698 = vmatpush.msra.mxu0 0.0
    %2699 = vmatpush.msra.mxu0 0.0
    %2700 = vmatpush.msra.mxu0 0.0
    %2701 = vmatpush.msra.mxu0 0.0
    %2702 = vmatpush.msra.mxu0 0.0
    %2703 = vmatpush.msra.mxu0 0.0
    %2704 = vmatpush.msra.mxu0 0.0
    %2705 = vmatpush.msra.mxu0 0.0
    %v2706 = vand.u32 %v2294, 4294901760
    %2707 = vmatpush.msra.mxu0 %v2706
    %v2708 = vand.u32 %v2293, 4294901760
    %2709 = vmatpush.msra.mxu0 %v2708
    %v2710 = vand.u32 %v2292, 4294901760
    %2711 = vmatpush.msra.mxu0 %v2710
    %v2712 = vand.u32 %v2291, 4294901760
    %2713 = vmatpush.msra.mxu0 %v2712
    %v2714 = vand.u32 %v160, 4294901760
    %2715 = vmatmul.f32.gmra.mxu0 %v2714
    %v2716 = vpop.f32.mrf.mxu0
    %v2717 = vadd.f32 %v2664, %v2716
    %v2718 = vand.u32 %v163, 4294901760
    %2719 = vmatmul.f32.gmra.mxu0 %v2718
    %v2720 = vpop.f32.mrf.mxu0
    %v2721 = vadd.f32 %v2668, %v2720
    %v2722 = vand.u32 %v166, 4294901760
    %2723 = vmatmul.f32.gmra.mxu0 %v2722
    %v2724 = vpop.f32.mrf.mxu0
    %v2725 = vadd.f32 %v2672, %v2724
    %v2726 = vand.u32 %v169, 4294901760
    %2727 = vmatmul.f32.gmra.mxu0 %v2726
    %v2728 = vpop.f32.mrf.mxu0
    %v2729 = vadd.f32 %v2676, %v2728
    %v2730 = vand.u32 %v172, 4294901760
    %2731 = vmatmul.f32.gmra.mxu0 %v2730
    %v2732 = vpop.f32.mrf.mxu0
    %v2733 = vadd.f32 %v2680, %v2732
    %v2734 = vand.u32 %v175, 4294901760
    %2735 = vmatmul.f32.gmra.mxu0 %v2734
    %v2736 = vpop.f32.mrf.mxu0
    %v2737 = vadd.f32 %v2684, %v2736
    %v2738 = vand.u32 %v178, 4294901760
    %2739 = vmatmul.f32.gmra.mxu0 %v2738
    %v2740 = vpop.f32.mrf.mxu0
    %v2741 = vadd.f32 %v2688, %v2740
    %v2742 = vand.u32 %v181, 4294901760
    %2743 = vmatmul.f32.gmra.mxu0 %v2742
    %v2744 = vpop.f32.mrf.mxu0
    %v2745 = vadd.f32 %v2692, %v2744
    %2746 = vdwg.mxu0
    %v2747 = vand.u32 %v2310, 4294901760
    %2748 = vmatpush.msra.mxu0 %v2747
    %v2749 = vand.u32 %v2309, 4294901760
    %2750 = vmatpush.msra.mxu0 %v2749
    %v2751 = vand.u32 %v2308, 4294901760
    %2752 = vmatpush.msra.mxu0 %v2751
    %v2753 = vand.u32 %v2307, 4294901760
    %2754 = vmatpush.msra.mxu0 %v2753
    %v2755 = vand.u32 %v2306, 4294901760
    %2756 = vmatpush.msra.mxu0 %v2755
    %v2757 = vand.u32 %v2305, 4294901760
    %2758 = vmatpush.msra.mxu0 %v2757
    %v2759 = vand.u32 %v2304, 4294901760
    %2760 = vmatpush.msra.mxu0 %v2759
    %v2761 = vand.u32 %v2303, 4294901760
    %2762 = vmatpush.msra.mxu0 %v2761
    %v2763 = vand.u32 %v2302, 4294901760
    %2764 = vmatpush.msra.mxu0 %v2763
    %v2765 = vand.u32 %v2301, 4294901760
    %2766 = vmatpush.msra.mxu0 %v2765
    %v2767 = vand.u32 %v2300, 4294901760
    %2768 = vmatpush.msra.mxu0 %v2767
    %v2769 = vand.u32 %v2299, 4294901760
    %2770 = vmatpush.msra.mxu0 %v2769
    %v2771 = vand.u32 %v2298, 4294901760
    %2772 = vmatpush.msra.mxu0 %v2771
    %v2773 = vand.u32 %v2297, 4294901760
    %2774 = vmatpush.msra.mxu0 %v2773
    %v2775 = vand.u32 %v2296, 4294901760
    %2776 = vmatpush.msra.mxu0 %v2775
    %v2777 = vand.u32 %v2295, 4294901760
    %2778 = vmatpush.msra.mxu0 %v2777
    %v2779 = vand.u32 %v2291, 4294901760
    %v2780 = vsub.f32 %v2291, %v2779
    %v2781 = vand.u32 %v2780, 4294901760
    %v2782 = vsub.f32 %v2780, %v2781
    %v2783 = vand.u32 %v2782, 4294901760
    %2784 = vmatmul.f32.gmra.mxu0 %v2783
    %v2785 = vpop.f32.mrf.mxu0
    %v2786 = vadd.f32 0.0, %v2785
    %v2787 = vand.u32 %v2292, 4294901760
    %v2788 = vsub.f32 %v2292, %v2787
    %v2789 = vand.u32 %v2788, 4294901760
    %v2790 = vsub.f32 %v2788, %v2789
    %v2791 = vand.u32 %v2790, 4294901760
    %2792 = vmatmul.f32.gmra.mxu0 %v2791
    %v2793 = vpop.f32.mrf.mxu0
    %v2794 = vadd.f32 0.0, %v2793
    %v2795 = vand.u32 %v2293, 4294901760
    %v2796 = vsub.f32 %v2293, %v2795
    %v2797 = vand.u32 %v2796, 4294901760
    %v2798 = vsub.f32 %v2796, %v2797
    %v2799 = vand.u32 %v2798, 4294901760
    %2800 = vmatmul.f32.gmra.mxu0 %v2799
    %v2801 = vpop.f32.mrf.mxu0
    %v2802 = vadd.f32 0.0, %v2801
    %v2803 = vand.u32 %v2294, 4294901760
    %v2804 = vsub.f32 %v2294, %v2803
    %v2805 = vand.u32 %v2804, 4294901760
    %v2806 = vsub.f32 %v2804, %v2805
    %v2807 = vand.u32 %v2806, 4294901760
    %2808 = vmatmul.f32.gmra.mxu0 %v2807
    %v2809 = vpop.f32.mrf.mxu0
    %v2810 = vadd.f32 0.0, %v2809
    %2811 = vdwg.mxu0
    %v2812 = vand.u32 %v2310, 4294901760
    %v2813 = vsub.f32 %v2310, %v2812
    %v2814 = vand.u32 %v2813, 4294901760
    %v2815 = vsub.f32 %v2813, %v2814
    %v2816 = vand.u32 %v2815, 4294901760
    %2817 = vmatpush.msra.mxu0 %v2816
    %v2818 = vand.u32 %v2309, 4294901760
    %v2819 = vsub.f32 %v2309, %v2818
    %v2820 = vand.u32 %v2819, 4294901760
    %v2821 = vsub.f32 %v2819, %v2820
    %v2822 = vand.u32 %v2821, 4294901760
    %2823 = vmatpush.msra.mxu0 %v2822
    %v2824 = vand.u32 %v2308, 4294901760
    %v2825 = vsub.f32 %v2308, %v2824
    %v2826 = vand.u32 %v2825, 4294901760
    %v2827 = vsub.f32 %v2825, %v2826
    %v2828 = vand.u32 %v2827, 4294901760
    %2829 = vmatpush.msra.mxu0 %v2828
    %v2830 = vand.u32 %v2307, 4294901760
    %v2831 = vsub.f32 %v2307, %v2830
    %v2832 = vand.u32 %v2831, 4294901760
    %v2833 = vsub.f32 %v2831, %v2832
    %v2834 = vand.u32 %v2833, 4294901760
    %2835 = vmatpush.msra.mxu0 %v2834
    %v2836 = vand.u32 %v2306, 4294901760
    %v2837 = vsub.f32 %v2306, %v2836
    %v2838 = vand.u32 %v2837, 4294901760
    %v2839 = vsub.f32 %v2837, %v2838
    %v2840 = vand.u32 %v2839, 4294901760
    %2841 = vmatpush.msra.mxu0 %v2840
    %v2842 = vand.u32 %v2305, 4294901760
    %v2843 = vsub.f32 %v2305, %v2842
    %v2844 = vand.u32 %v2843, 4294901760
    %v2845 = vsub.f32 %v2843, %v2844
    %v2846 = vand.u32 %v2845, 4294901760
    %2847 = vmatpush.msra.mxu0 %v2846
    %v2848 = vand.u32 %v2304, 4294901760
    %v2849 = vsub.f32 %v2304, %v2848
    %v2850 = vand.u32 %v2849, 4294901760
    %v2851 = vsub.f32 %v2849, %v2850
    %v2852 = vand.u32 %v2851, 4294901760
    %2853 = vmatpush.msra.mxu0 %v2852
    %v2854 = vand.u32 %v2303, 4294901760
    %v2855 = vsub.f32 %v2303, %v2854
    %v2856 = vand.u32 %v2855, 4294901760
    %v2857 = vsub.f32 %v2855, %v2856
    %v2858 = vand.u32 %v2857, 4294901760
    %2859 = vmatpush.msra.mxu0 %v2858
    %v2860 = vand.u32 %v2302, 4294901760
    %v2861 = vsub.f32 %v2302, %v2860
    %v2862 = vand.u32 %v2861, 4294901760
    %v2863 = vsub.f32 %v2861, %v2862
    %v2864 = vand.u32 %v2863, 4294901760
    %2865 = vmatpush.msra.mxu0 %v2864
    %v2866 = vand.u32 %v2301, 4294901760
    %v2867 = vsub.f32 %v2301, %v2866
    %v2868 = vand.u32 %v2867, 4294901760
    %v2869 = vsub.f32 %v2867, %v2868
    %v2870 = vand.u32 %v2869, 4294901760
    %2871 = vmatpush.msra.mxu0 %v2870
    %v2872 = vand.u32 %v2300, 4294901760
    %v2873 = vsub.f32 %v2300, %v2872
    %v2874 = vand.u32 %v2873, 4294901760
    %v2875 = vsub.f32 %v2873, %v2874
    %v2876 = vand.u32 %v2875, 4294901760
    %2877 = vmatpush.msra.mxu0 %v2876
    %v2878 = vand.u32 %v2299, 4294901760
    %v2879 = vsub.f32 %v2299, %v2878
    %v2880 = vand.u32 %v2879, 4294901760
    %v2881 = vsub.f32 %v2879, %v2880
    %v2882 = vand.u32 %v2881, 4294901760
    %2883 = vmatpush.msra.mxu0 %v2882
    %v2884 = vand.u32 %v2298, 4294901760
    %v2885 = vsub.f32 %v2298, %v2884
    %v2886 = vand.u32 %v2885, 4294901760
    %v2887 = vsub.f32 %v2885, %v2886
    %v2888 = vand.u32 %v2887, 4294901760
    %2889 = vmatpush.msra.mxu0 %v2888
    %v2890 = vand.u32 %v2297, 4294901760
    %v2891 = vsub.f32 %v2297, %v2890
    %v2892 = vand.u32 %v2891, 4294901760
    %v2893 = vsub.f32 %v2891, %v2892
    %v2894 = vand.u32 %v2893, 4294901760
    %2895 = vmatpush.msra.mxu0 %v2894
    %v2896 = vand.u32 %v2296, 4294901760
    %v2897 = vsub.f32 %v2296, %v2896
    %v2898 = vand.u32 %v2897, 4294901760
    %v2899 = vsub.f32 %v2897, %v2898
    %v2900 = vand.u32 %v2899, 4294901760
    %2901 = vmatpush.msra.mxu0 %v2900
    %v2902 = vand.u32 %v2295, 4294901760
    %v2903 = vsub.f32 %v2295, %v2902
    %v2904 = vand.u32 %v2903, 4294901760
    %v2905 = vsub.f32 %v2903, %v2904
    %v2906 = vand.u32 %v2905, 4294901760
    %2907 = vmatpush.msra.mxu0 %v2906
    %v2908 = vand.u32 %v2291, 4294901760
    %2909 = vmatmul.f32.gmra.mxu0 %v2908
    %v2910 = vpop.f32.mrf.mxu0
    %v2911 = vadd.f32 %v2786, %v2910
    %v2912 = vand.u32 %v2292, 4294901760
    %2913 = vmatmul.f32.gmra.mxu0 %v2912
    %v2914 = vpop.f32.mrf.mxu0
    %v2915 = vadd.f32 %v2794, %v2914
    %v2916 = vand.u32 %v2293, 4294901760
    %2917 = vmatmul.f32.gmra.mxu0 %v2916
    %v2918 = vpop.f32.mrf.mxu0
    %v2919 = vadd.f32 %v2802, %v2918
    %v2920 = vand.u32 %v2294, 4294901760
    %2921 = vmatmul.f32.gmra.mxu0 %v2920
    %v2922 = vpop.f32.mrf.mxu0
    %v2923 = vadd.f32 %v2810, %v2922
    %2924 = vdwg.mxu0
    %v2925 = vand.u32 %v2310, 4294901760
    %v2926 = vsub.f32 %v2310, %v2925
    %2927 = vmatpush.msra.mxu0 %v2926
    %v2928 = vand.u32 %v2309, 4294901760
    %v2929 = vsub.f32 %v2309, %v2928
    %2930 = vmatpush.msra.mxu0 %v2929
    %v2931 = vand.u32 %v2308, 4294901760
    %v2932 = vsub.f32 %v2308, %v2931
    %2933 = vmatpush.msra.mxu0 %v2932
    %v2934 = vand.u32 %v2307, 4294901760
    %v2935 = vsub.f32 %v2307, %v2934
    %2936 = vmatpush.msra.mxu0 %v2935
    %v2937 = vand.u32 %v2306, 4294901760
    %v2938 = vsub.f32 %v2306, %v2937
    %2939 = vmatpush.msra.mxu0 %v2938
    %v2940 = vand.u32 %v2305, 4294901760
    %v2941 = vsub.f32 %v2305, %v2940
    %2942 = vmatpush.msra.mxu0 %v2941
    %v2943 = vand.u32 %v2304, 4294901760
    %v2944 = vsub.f32 %v2304, %v2943
    %2945 = vmatpush.msra.mxu0 %v2944
    %v2946 = vand.u32 %v2303, 4294901760
    %v2947 = vsub.f32 %v2303, %v2946
    %2948 = vmatpush.msra.mxu0 %v2947
    %v2949 = vand.u32 %v2302, 4294901760
    %v2950 = vsub.f32 %v2302, %v2949
    %2951 = vmatpush.msra.mxu0 %v2950
    %v2952 = vand.u32 %v2301, 4294901760
    %v2953 = vsub.f32 %v2301, %v2952
    %2954 = vmatpush.msra.mxu0 %v2953
    %v2955 = vand.u32 %v2300, 4294901760
    %v2956 = vsub.f32 %v2300, %v2955
    %2957 = vmatpush.msra.mxu0 %v2956
    %v2958 = vand.u32 %v2299, 4294901760
    %v2959 = vsub.f32 %v2299, %v2958
    %2960 = vmatpush.msra.mxu0 %v2959
    %v2961 = vand.u32 %v2298, 4294901760
    %v2962 = vsub.f32 %v2298, %v2961
    %2963 = vmatpush.msra.mxu0 %v2962
    %v2964 = vand.u32 %v2297, 4294901760
    %v2965 = vsub.f32 %v2297, %v2964
    %2966 = vmatpush.msra.mxu0 %v2965
    %v2967 = vand.u32 %v2296, 4294901760
    %v2968 = vsub.f32 %v2296, %v2967
    %2969 = vmatpush.msra.mxu0 %v2968
    %v2970 = vand.u32 %v2295, 4294901760
    %v2971 = vsub.f32 %v2295, %v2970
    %2972 = vmatpush.msra.mxu0 %v2971
    %v2973 = vand.u32 %v2291, 4294901760
    %v2974 = vsub.f32 %v2291, %v2973
    %2975 = vmatmul.f32.gmra.mxu0 %v2974
    %v2976 = vpop.f32.mrf.mxu0
    %v2977 = vadd.f32 %v2911, %v2976
    %v2978 = vand.u32 %v2292, 4294901760
    %v2979 = vsub.f32 %v2292, %v2978
    %2980 = vmatmul.f32.gmra.mxu0 %v2979
    %v2981 = vpop.f32.mrf.mxu0
    %v2982 = vadd.f32 %v2915, %v2981
    %v2983 = vand.u32 %v2293, 4294901760
    %v2984 = vsub.f32 %v2293, %v2983
    %2985 = vmatmul.f32.gmra.mxu0 %v2984
    %v2986 = vpop.f32.mrf.mxu0
    %v2987 = vadd.f32 %v2919, %v2986
    %v2988 = vand.u32 %v2294, 4294901760
    %v2989 = vsub.f32 %v2294, %v2988
    %2990 = vmatmul.f32.gmra.mxu0 %v2989
    %v2991 = vpop.f32.mrf.mxu0
    %v2992 = vadd.f32 %v2923, %v2991
    %2993 = vdwg.mxu0
    %v2994 = vand.u32 %v2310, 4294901760
    %2995 = vmatpush.msra.mxu0 %v2994
    %v2996 = vand.u32 %v2309, 4294901760
    %2997 = vmatpush.msra.mxu0 %v2996
    %v2998 = vand.u32 %v2308, 4294901760
    %2999 = vmatpush.msra.mxu0 %v2998
    %v3000 = vand.u32 %v2307, 4294901760
    %3001 = vmatpush.msra.mxu0 %v3000
    %v3002 = vand.u32 %v2306, 4294901760
    %3003 = vmatpush.msra.mxu0 %v3002
    %v3004 = vand.u32 %v2305, 4294901760
    %3005 = vmatpush.msra.mxu0 %v3004
    %v3006 = vand.u32 %v2304, 4294901760
    %3007 = vmatpush.msra.mxu0 %v3006
    %v3008 = vand.u32 %v2303, 4294901760
    %3009 = vmatpush.msra.mxu0 %v3008
    %v3010 = vand.u32 %v2302, 4294901760
    %3011 = vmatpush.msra.mxu0 %v3010
    %v3012 = vand.u32 %v2301, 4294901760
    %3013 = vmatpush.msra.mxu0 %v3012
    %v3014 = vand.u32 %v2300, 4294901760
    %3015 = vmatpush.msra.mxu0 %v3014
    %v3016 = vand.u32 %v2299, 4294901760
    %3017 = vmatpush.msra.mxu0 %v3016
    %v3018 = vand.u32 %v2298, 4294901760
    %3019 = vmatpush.msra.mxu0 %v3018
    %v3020 = vand.u32 %v2297, 4294901760
    %3021 = vmatpush.msra.mxu0 %v3020
    %v3022 = vand.u32 %v2296, 4294901760
    %3023 = vmatpush.msra.mxu0 %v3022
    %v3024 = vand.u32 %v2295, 4294901760
    %3025 = vmatpush.msra.mxu0 %v3024
    %v3026 = vand.u32 %v2291, 4294901760
    %v3027 = vsub.f32 %v2291, %v3026
    %v3028 = vand.u32 %v3027, 4294901760
    %3029 = vmatmul.f32.gmra.mxu0 %v3028
    %v3030 = vpop.f32.mrf.mxu0
    %v3031 = vadd.f32 %v2977, %v3030
    %v3032 = vand.u32 %v2292, 4294901760
    %v3033 = vsub.f32 %v2292, %v3032
    %v3034 = vand.u32 %v3033, 4294901760
    %3035 = vmatmul.f32.gmra.mxu0 %v3034
    %v3036 = vpop.f32.mrf.mxu0
    %v3037 = vadd.f32 %v2982, %v3036
    %v3038 = vand.u32 %v2293, 4294901760
    %v3039 = vsub.f32 %v2293, %v3038
    %v3040 = vand.u32 %v3039, 4294901760
    %3041 = vmatmul.f32.gmra.mxu0 %v3040
    %v3042 = vpop.f32.mrf.mxu0
    %v3043 = vadd.f32 %v2987, %v3042
    %v3044 = vand.u32 %v2294, 4294901760
    %v3045 = vsub.f32 %v2294, %v3044
    %v3046 = vand.u32 %v3045, 4294901760
    %3047 = vmatmul.f32.gmra.mxu0 %v3046
    %v3048 = vpop.f32.mrf.mxu0
    %v3049 = vadd.f32 %v2992, %v3048
    %3050 = vdwg.mxu0
    %v3051 = vand.u32 %v2310, 4294901760
    %v3052 = vsub.f32 %v2310, %v3051
    %v3053 = vand.u32 %v3052, 4294901760
    %3054 = vmatpush.msra.mxu0 %v3053
    %v3055 = vand.u32 %v2309, 4294901760
    %v3056 = vsub.f32 %v2309, %v3055
    %v3057 = vand.u32 %v3056, 4294901760
    %3058 = vmatpush.msra.mxu0 %v3057
    %v3059 = vand.u32 %v2308, 4294901760
    %v3060 = vsub.f32 %v2308, %v3059
    %v3061 = vand.u32 %v3060, 4294901760
    %3062 = vmatpush.msra.mxu0 %v3061
    %v3063 = vand.u32 %v2307, 4294901760
    %v3064 = vsub.f32 %v2307, %v3063
    %v3065 = vand.u32 %v3064, 4294901760
    %3066 = vmatpush.msra.mxu0 %v3065
    %v3067 = vand.u32 %v2306, 4294901760
    %v3068 = vsub.f32 %v2306, %v3067
    %v3069 = vand.u32 %v3068, 4294901760
    %3070 = vmatpush.msra.mxu0 %v3069
    %v3071 = vand.u32 %v2305, 4294901760
    %v3072 = vsub.f32 %v2305, %v3071
    %v3073 = vand.u32 %v3072, 4294901760
    %3074 = vmatpush.msra.mxu0 %v3073
    %v3075 = vand.u32 %v2304, 4294901760
    %v3076 = vsub.f32 %v2304, %v3075
    %v3077 = vand.u32 %v3076, 4294901760
    %3078 = vmatpush.msra.mxu0 %v3077
    %v3079 = vand.u32 %v2303, 4294901760
    %v3080 = vsub.f32 %v2303, %v3079
    %v3081 = vand.u32 %v3080, 4294901760
    %3082 = vmatpush.msra.mxu0 %v3081
    %v3083 = vand.u32 %v2302, 4294901760
    %v3084 = vsub.f32 %v2302, %v3083
    %v3085 = vand.u32 %v3084, 4294901760
    %3086 = vmatpush.msra.mxu0 %v3085
    %v3087 = vand.u32 %v2301, 4294901760
    %v3088 = vsub.f32 %v2301, %v3087
    %v3089 = vand.u32 %v3088, 4294901760
    %3090 = vmatpush.msra.mxu0 %v3089
    %v3091 = vand.u32 %v2300, 4294901760
    %v3092 = vsub.f32 %v2300, %v3091
    %v3093 = vand.u32 %v3092, 4294901760
    %3094 = vmatpush.msra.mxu0 %v3093
    %v3095 = vand.u32 %v2299, 4294901760
    %v3096 = vsub.f32 %v2299, %v3095
    %v3097 = vand.u32 %v3096, 4294901760
    %3098 = vmatpush.msra.mxu0 %v3097
    %v3099 = vand.u32 %v2298, 4294901760
    %v3100 = vsub.f32 %v2298, %v3099
    %v3101 = vand.u32 %v3100, 4294901760
    %3102 = vmatpush.msra.mxu0 %v3101
    %v3103 = vand.u32 %v2297, 4294901760
    %v3104 = vsub.f32 %v2297, %v3103
    %v3105 = vand.u32 %v3104, 4294901760
    %3106 = vmatpush.msra.mxu0 %v3105
    %v3107 = vand.u32 %v2296, 4294901760
    %v3108 = vsub.f32 %v2296, %v3107
    %v3109 = vand.u32 %v3108, 4294901760
    %3110 = vmatpush.msra.mxu0 %v3109
    %v3111 = vand.u32 %v2295, 4294901760
    %v3112 = vsub.f32 %v2295, %v3111
    %v3113 = vand.u32 %v3112, 4294901760
    %3114 = vmatpush.msra.mxu0 %v3113
    %v3115 = vand.u32 %v2291, 4294901760
    %3116 = vmatmul.f32.gmra.mxu0 %v3115
    %v3117 = vpop.f32.mrf.mxu0
    %v3118 = vadd.f32 %v3031, %v3117
    %v3119 = vand.u32 %v2292, 4294901760
    %3120 = vmatmul.f32.gmra.mxu0 %v3119
    %v3121 = vpop.f32.mrf.mxu0
    %v3122 = vadd.f32 %v3037, %v3121
    %v3123 = vand.u32 %v2293, 4294901760
    %3124 = vmatmul.f32.gmra.mxu0 %v3123
    %v3125 = vpop.f32.mrf.mxu0
    %v3126 = vadd.f32 %v3043, %v3125
    %v3127 = vand.u32 %v2294, 4294901760
    %3128 = vmatmul.f32.gmra.mxu0 %v3127
    %v3129 = vpop.f32.mrf.mxu0
    %v3130 = vadd.f32 %v3049, %v3129
    %3131 = vdwg.mxu0
    %v3132 = vand.u32 %v2310, 4294901760
    %3133 = vmatpush.msra.mxu0 %v3132
    %v3134 = vand.u32 %v2309, 4294901760
    %3135 = vmatpush.msra.mxu0 %v3134
    %v3136 = vand.u32 %v2308, 4294901760
    %3137 = vmatpush.msra.mxu0 %v3136
    %v3138 = vand.u32 %v2307, 4294901760
    %3139 = vmatpush.msra.mxu0 %v3138
    %v3140 = vand.u32 %v2306, 4294901760
    %3141 = vmatpush.msra.mxu0 %v3140
    %v3142 = vand.u32 %v2305, 4294901760
    %3143 = vmatpush.msra.mxu0 %v3142
    %v3144 = vand.u32 %v2304, 4294901760
    %3145 = vmatpush.msra.mxu0 %v3144
    %v3146 = vand.u32 %v2303, 4294901760
    %3147 = vmatpush.msra.mxu0 %v3146
    %v3148 = vand.u32 %v2302, 4294901760
    %3149 = vmatpush.msra.mxu0 %v3148
    %v3150 = vand.u32 %v2301, 4294901760
    %3151 = vmatpush.msra.mxu0 %v3150
    %v3152 = vand.u32 %v2300, 4294901760
    %3153 = vmatpush.msra.mxu0 %v3152
    %v3154 = vand.u32 %v2299, 4294901760
    %3155 = vmatpush.msra.mxu0 %v3154
    %v3156 = vand.u32 %v2298, 4294901760
    %3157 = vmatpush.msra.mxu0 %v3156
    %v3158 = vand.u32 %v2297, 4294901760
    %3159 = vmatpush.msra.mxu0 %v3158
    %v3160 = vand.u32 %v2296, 4294901760
    %3161 = vmatpush.msra.mxu0 %v3160
    %v3162 = vand.u32 %v2295, 4294901760
    %3163 = vmatpush.msra.mxu0 %v3162
    %v3164 = vand.u32 %v2291, 4294901760
    %3165 = vmatmul.f32.gmra.mxu0 %v3164
    %v3166 = vpop.f32.mrf.mxu0
    %v3167 = vadd.f32 %v3118, %v3166
    %v3168 = vand.u32 %v2292, 4294901760
    %3169 = vmatmul.f32.gmra.mxu0 %v3168
    %v3170 = vpop.f32.mrf.mxu0
    %v3171 = vadd.f32 %v3122, %v3170
    %v3172 = vand.u32 %v2293, 4294901760
    %3173 = vmatmul.f32.gmra.mxu0 %v3172
    %v3174 = vpop.f32.mrf.mxu0
    %v3175 = vadd.f32 %v3126, %v3174
    %v3176 = vand.u32 %v2294, 4294901760
    %3177 = vmatmul.f32.gmra.mxu0 %v3176
    %v3178 = vpop.f32.mrf.mxu0
    %v3179 = vadd.f32 %v3130, %v3178
    %3180 = vdwg.mxu0
    %v3181 = vand.u32 %v2326, 4294901760
    %3182 = vmatpush.msra.mxu0 %v3181
    %v3183 = vand.u32 %v2325, 4294901760
    %3184 = vmatpush.msra.mxu0 %v3183
    %v3185 = vand.u32 %v2324, 4294901760
    %3186 = vmatpush.msra.mxu0 %v3185
    %v3187 = vand.u32 %v2323, 4294901760
    %3188 = vmatpush.msra.mxu0 %v3187
    %v3189 = vand.u32 %v2322, 4294901760
    %3190 = vmatpush.msra.mxu0 %v3189
    %v3191 = vand.u32 %v2321, 4294901760
    %3192 = vmatpush.msra.mxu0 %v3191
    %v3193 = vand.u32 %v2320, 4294901760
    %3194 = vmatpush.msra.mxu0 %v3193
    %v3195 = vand.u32 %v2319, 4294901760
    %3196 = vmatpush.msra.mxu0 %v3195
    %v3197 = vand.u32 %v2318, 4294901760
    %3198 = vmatpush.msra.mxu0 %v3197
    %v3199 = vand.u32 %v2317, 4294901760
    %3200 = vmatpush.msra.mxu0 %v3199
    %v3201 = vand.u32 %v2316, 4294901760
    %3202 = vmatpush.msra.mxu0 %v3201
    %v3203 = vand.u32 %v2315, 4294901760
    %3204 = vmatpush.msra.mxu0 %v3203
    %v3205 = vand.u32 %v2314, 4294901760
    %3206 = vmatpush.msra.mxu0 %v3205
    %v3207 = vand.u32 %v2313, 4294901760
    %3208 = vmatpush.msra.mxu0 %v3207
    %v3209 = vand.u32 %v2312, 4294901760
    %3210 = vmatpush.msra.mxu0 %v3209
    %v3211 = vand.u32 %v2311, 4294901760
    %3212 = vmatpush.msra.mxu0 %v3211
    %v3213 = vand.u32 %v2717, 4294901760
    %v3214 = vsub.f32 %v2717, %v3213
    %v3215 = vand.u32 %v3214, 4294901760
    %v3216 = vsub.f32 %v3214, %v3215
    %v3217 = vand.u32 %v3216, 4294901760
    %3218 = vmatmul.f32.gmra.mxu0 %v3217
    %v3219 = vpop.f32.mrf.mxu0
    %v3220 = vadd.f32 %v3167, %v3219
    %v3221 = vand.u32 %v2721, 4294901760
    %v3222 = vsub.f32 %v2721, %v3221
    %v3223 = vand.u32 %v3222, 4294901760
    %v3224 = vsub.f32 %v3222, %v3223
    %v3225 = vand.u32 %v3224, 4294901760
    %3226 = vmatmul.f32.gmra.mxu0 %v3225
    %v3227 = vpop.f32.mrf.mxu0
    %v3228 = vadd.f32 %v3171, %v3227
    %v3229 = vand.u32 %v2725, 4294901760
    %v3230 = vsub.f32 %v2725, %v3229
    %v3231 = vand.u32 %v3230, 4294901760
    %v3232 = vsub.f32 %v3230, %v3231
    %v3233 = vand.u32 %v3232, 4294901760
    %3234 = vmatmul.f32.gmra.mxu0 %v3233
    %v3235 = vpop.f32.mrf.mxu0
    %v3236 = vadd.f32 %v3175, %v3235
    %v3237 = vand.u32 %v2729, 4294901760
    %v3238 = vsub.f32 %v2729, %v3237
    %v3239 = vand.u32 %v3238, 4294901760
    %v3240 = vsub.f32 %v3238, %v3239
    %v3241 = vand.u32 %v3240, 4294901760
    %3242 = vmatmul.f32.gmra.mxu0 %v3241
    %v3243 = vpop.f32.mrf.mxu0
    %v3244 = vadd.f32 %v3179, %v3243
    %3245 = vdwg.mxu0
    %v3246 = vand.u32 %v2326, 4294901760
    %v3247 = vsub.f32 %v2326, %v3246
    %v3248 = vand.u32 %v3247, 4294901760
    %v3249 = vsub.f32 %v3247, %v3248
    %v3250 = vand.u32 %v3249, 4294901760
    %3251 = vmatpush.msra.mxu0 %v3250
    %v3252 = vand.u32 %v2325, 4294901760
    %v3253 = vsub.f32 %v2325, %v3252
    %v3254 = vand.u32 %v3253, 4294901760
    %v3255 = vsub.f32 %v3253, %v3254
    %v3256 = vand.u32 %v3255, 4294901760
    %3257 = vmatpush.msra.mxu0 %v3256
    %v3258 = vand.u32 %v2324, 4294901760
    %v3259 = vsub.f32 %v2324, %v3258
    %v3260 = vand.u32 %v3259, 4294901760
    %v3261 = vsub.f32 %v3259, %v3260
    %v3262 = vand.u32 %v3261, 4294901760
    %3263 = vmatpush.msra.mxu0 %v3262
    %v3264 = vand.u32 %v2323, 4294901760
    %v3265 = vsub.f32 %v2323, %v3264
    %v3266 = vand.u32 %v3265, 4294901760
    %v3267 = vsub.f32 %v3265, %v3266
    %v3268 = vand.u32 %v3267, 4294901760
    %3269 = vmatpush.msra.mxu0 %v3268
    %v3270 = vand.u32 %v2322, 4294901760
    %v3271 = vsub.f32 %v2322, %v3270
    %v3272 = vand.u32 %v3271, 4294901760
    %v3273 = vsub.f32 %v3271, %v3272
    %v3274 = vand.u32 %v3273, 4294901760
    %3275 = vmatpush.msra.mxu0 %v3274
    %v3276 = vand.u32 %v2321, 4294901760
    %v3277 = vsub.f32 %v2321, %v3276
    %v3278 = vand.u32 %v3277, 4294901760
    %v3279 = vsub.f32 %v3277, %v3278
    %v3280 = vand.u32 %v3279, 4294901760
    %3281 = vmatpush.msra.mxu0 %v3280
    %v3282 = vand.u32 %v2320, 4294901760
    %v3283 = vsub.f32 %v2320, %v3282
    %v3284 = vand.u32 %v3283, 4294901760
    %v3285 = vsub.f32 %v3283, %v3284
    %v3286 = vand.u32 %v3285, 4294901760
    %3287 = vmatpush.msra.mxu0 %v3286
    %v3288 = vand.u32 %v2319, 4294901760
    %v3289 = vsub.f32 %v2319, %v3288
    %v3290 = vand.u32 %v3289, 4294901760
    %v3291 = vsub.f32 %v3289, %v3290
    %v3292 = vand.u32 %v3291, 4294901760
    %3293 = vmatpush.msra.mxu0 %v3292
    %v3294 = vand.u32 %v2318, 4294901760
    %v3295 = vsub.f32 %v2318, %v3294
    %v3296 = vand.u32 %v3295, 4294901760
    %v3297 = vsub.f32 %v3295, %v3296
    %v3298 = vand.u32 %v3297, 4294901760
    %3299 = vmatpush.msra.mxu0 %v3298
    %v3300 = vand.u32 %v2317, 4294901760
    %v3301 = vsub.f32 %v2317, %v3300
    %v3302 = vand.u32 %v3301, 4294901760
    %v3303 = vsub.f32 %v3301, %v3302
    %v3304 = vand.u32 %v3303, 4294901760
    %3305 = vmatpush.msra.mxu0 %v3304
    %v3306 = vand.u32 %v2316, 4294901760
    %v3307 = vsub.f32 %v2316, %v3306
    %v3308 = vand.u32 %v3307, 4294901760
    %v3309 = vsub.f32 %v3307, %v3308
    %v3310 = vand.u32 %v3309, 4294901760
    %3311 = vmatpush.msra.mxu0 %v3310
    %v3312 = vand.u32 %v2315, 4294901760
    %v3313 = vsub.f32 %v2315, %v3312
    %v3314 = vand.u32 %v3313, 4294901760
    %v3315 = vsub.f32 %v3313, %v3314
    %v3316 = vand.u32 %v3315, 4294901760
    %3317 = vmatpush.msra.mxu0 %v3316
    %v3318 = vand.u32 %v2314, 4294901760
    %v3319 = vsub.f32 %v2314, %v3318
    %v3320 = vand.u32 %v3319, 4294901760
    %v3321 = vsub.f32 %v3319, %v3320
    %v3322 = vand.u32 %v3321, 4294901760
    %3323 = vmatpush.msra.mxu0 %v3322
    %v3324 = vand.u32 %v2313, 4294901760
    %v3325 = vsub.f32 %v2313, %v3324
    %v3326 = vand.u32 %v3325, 4294901760
    %v3327 = vsub.f32 %v3325, %v3326
    %v3328 = vand.u32 %v3327, 4294901760
    %3329 = vmatpush.msra.mxu0 %v3328
    %v3330 = vand.u32 %v2312, 4294901760
    %v3331 = vsub.f32 %v2312, %v3330
    %v3332 = vand.u32 %v3331, 4294901760
    %v3333 = vsub.f32 %v3331, %v3332
    %v3334 = vand.u32 %v3333, 4294901760
    %3335 = vmatpush.msra.mxu0 %v3334
    %v3336 = vand.u32 %v2311, 4294901760
    %v3337 = vsub.f32 %v2311, %v3336
    %v3338 = vand.u32 %v3337, 4294901760
    %v3339 = vsub.f32 %v3337, %v3338
    %v3340 = vand.u32 %v3339, 4294901760
    %3341 = vmatpush.msra.mxu0 %v3340
    %v3342 = vand.u32 %v2717, 4294901760
    %3343 = vmatmul.f32.gmra.mxu0 %v3342
    %v3344 = vpop.f32.mrf.mxu0
    %v3345 = vadd.f32 %v3220, %v3344
    %v3346 = vand.u32 %v2721, 4294901760
    %3347 = vmatmul.f32.gmra.mxu0 %v3346
    %v3348 = vpop.f32.mrf.mxu0
    %v3349 = vadd.f32 %v3228, %v3348
    %v3350 = vand.u32 %v2725, 4294901760
    %3351 = vmatmul.f32.gmra.mxu0 %v3350
    %v3352 = vpop.f32.mrf.mxu0
    %v3353 = vadd.f32 %v3236, %v3352
    %v3354 = vand.u32 %v2729, 4294901760
    %3355 = vmatmul.f32.gmra.mxu0 %v3354
    %v3356 = vpop.f32.mrf.mxu0
    %v3357 = vadd.f32 %v3244, %v3356
    %3358 = vdwg.mxu0
    %v3359 = vand.u32 %v2326, 4294901760
    %v3360 = vsub.f32 %v2326, %v3359
    %3361 = vmatpush.msra.mxu0 %v3360
    %v3362 = vand.u32 %v2325, 4294901760
    %v3363 = vsub.f32 %v2325, %v3362
    %3364 = vmatpush.msra.mxu0 %v3363
    %v3365 = vand.u32 %v2324, 4294901760
    %v3366 = vsub.f32 %v2324, %v3365
    %3367 = vmatpush.msra.mxu0 %v3366
    %v3368 = vand.u32 %v2323, 4294901760
    %v3369 = vsub.f32 %v2323, %v3368
    %3370 = vmatpush.msra.mxu0 %v3369
    %v3371 = vand.u32 %v2322, 4294901760
    %v3372 = vsub.f32 %v2322, %v3371
    %3373 = vmatpush.msra.mxu0 %v3372
    %v3374 = vand.u32 %v2321, 4294901760
    %v3375 = vsub.f32 %v2321, %v3374
    %3376 = vmatpush.msra.mxu0 %v3375
    %v3377 = vand.u32 %v2320, 4294901760
    %v3378 = vsub.f32 %v2320, %v3377
    %3379 = vmatpush.msra.mxu0 %v3378
    %v3380 = vand.u32 %v2319, 4294901760
    %v3381 = vsub.f32 %v2319, %v3380
    %3382 = vmatpush.msra.mxu0 %v3381
    %v3383 = vand.u32 %v2318, 4294901760
    %v3384 = vsub.f32 %v2318, %v3383
    %3385 = vmatpush.msra.mxu0 %v3384
    %v3386 = vand.u32 %v2317, 4294901760
    %v3387 = vsub.f32 %v2317, %v3386
    %3388 = vmatpush.msra.mxu0 %v3387
    %v3389 = vand.u32 %v2316, 4294901760
    %v3390 = vsub.f32 %v2316, %v3389
    %3391 = vmatpush.msra.mxu0 %v3390
    %v3392 = vand.u32 %v2315, 4294901760
    %v3393 = vsub.f32 %v2315, %v3392
    %3394 = vmatpush.msra.mxu0 %v3393
    %v3395 = vand.u32 %v2314, 4294901760
    %v3396 = vsub.f32 %v2314, %v3395
    %3397 = vmatpush.msra.mxu0 %v3396
    %v3398 = vand.u32 %v2313, 4294901760
    %v3399 = vsub.f32 %v2313, %v3398
    %3400 = vmatpush.msra.mxu0 %v3399
    %v3401 = vand.u32 %v2312, 4294901760
    %v3402 = vsub.f32 %v2312, %v3401
    %3403 = vmatpush.msra.mxu0 %v3402
    %v3404 = vand.u32 %v2311, 4294901760
    %v3405 = vsub.f32 %v2311, %v3404
    %3406 = vmatpush.msra.mxu0 %v3405
    %v3407 = vand.u32 %v2717, 4294901760
    %v3408 = vsub.f32 %v2717, %v3407
    %3409 = vmatmul.f32.gmra.mxu0 %v3408
    %v3410 = vpop.f32.mrf.mxu0
    %v3411 = vadd.f32 %v3345, %v3410
    %v3412 = vand.u32 %v2721, 4294901760
    %v3413 = vsub.f32 %v2721, %v3412
    %3414 = vmatmul.f32.gmra.mxu0 %v3413
    %v3415 = vpop.f32.mrf.mxu0
    %v3416 = vadd.f32 %v3349, %v3415
    %v3417 = vand.u32 %v2725, 4294901760
    %v3418 = vsub.f32 %v2725, %v3417
    %3419 = vmatmul.f32.gmra.mxu0 %v3418
    %v3420 = vpop.f32.mrf.mxu0
    %v3421 = vadd.f32 %v3353, %v3420
    %v3422 = vand.u32 %v2729, 4294901760
    %v3423 = vsub.f32 %v2729, %v3422
    %3424 = vmatmul.f32.gmra.mxu0 %v3423
    %v3425 = vpop.f32.mrf.mxu0
    %v3426 = vadd.f32 %v3357, %v3425
    %3427 = vdwg.mxu0
    %v3428 = vand.u32 %v2326, 4294901760
    %3429 = vmatpush.msra.mxu0 %v3428
    %v3430 = vand.u32 %v2325, 4294901760
    %3431 = vmatpush.msra.mxu0 %v3430
    %v3432 = vand.u32 %v2324, 4294901760
    %3433 = vmatpush.msra.mxu0 %v3432
    %v3434 = vand.u32 %v2323, 4294901760
    %3435 = vmatpush.msra.mxu0 %v3434
    %v3436 = vand.u32 %v2322, 4294901760
    %3437 = vmatpush.msra.mxu0 %v3436
    %v3438 = vand.u32 %v2321, 4294901760
    %3439 = vmatpush.msra.mxu0 %v3438
    %v3440 = vand.u32 %v2320, 4294901760
    %3441 = vmatpush.msra.mxu0 %v3440
    %v3442 = vand.u32 %v2319, 4294901760
    %3443 = vmatpush.msra.mxu0 %v3442
    %v3444 = vand.u32 %v2318, 4294901760
    %3445 = vmatpush.msra.mxu0 %v3444
    %v3446 = vand.u32 %v2317, 4294901760
    %3447 = vmatpush.msra.mxu0 %v3446
    %v3448 = vand.u32 %v2316, 4294901760
    %3449 = vmatpush.msra.mxu0 %v3448
    %v3450 = vand.u32 %v2315, 4294901760
    %3451 = vmatpush.msra.mxu0 %v3450
    %v3452 = vand.u32 %v2314, 4294901760
    %3453 = vmatpush.msra.mxu0 %v3452
    %v3454 = vand.u32 %v2313, 4294901760
    %3455 = vmatpush.msra.mxu0 %v3454
    %v3456 = vand.u32 %v2312, 4294901760
    %3457 = vmatpush.msra.mxu0 %v3456
    %v3458 = vand.u32 %v2311, 4294901760
    %3459 = vmatpush.msra.mxu0 %v3458
    %v3460 = vand.u32 %v2717, 4294901760
    %v3461 = vsub.f32 %v2717, %v3460
    %v3462 = vand.u32 %v3461, 4294901760
    %3463 = vmatmul.f32.gmra.mxu0 %v3462
    %v3464 = vpop.f32.mrf.mxu0
    %v3465 = vadd.f32 %v3411, %v3464
    %v3466 = vand.u32 %v2721, 4294901760
    %v3467 = vsub.f32 %v2721, %v3466
    %v3468 = vand.u32 %v3467, 4294901760
    %3469 = vmatmul.f32.gmra.mxu0 %v3468
    %v3470 = vpop.f32.mrf.mxu0
    %v3471 = vadd.f32 %v3416, %v3470
    %v3472 = vand.u32 %v2725, 4294901760
    %v3473 = vsub.f32 %v2725, %v3472
    %v3474 = vand.u32 %v3473, 4294901760
    %3475 = vmatmul.f32.gmra.mxu0 %v3474
    %v3476 = vpop.f32.mrf.mxu0
    %v3477 = vadd.f32 %v3421, %v3476
    %v3478 = vand.u32 %v2729, 4294901760
    %v3479 = vsub.f32 %v2729, %v3478
    %v3480 = vand.u32 %v3479, 4294901760
    %3481 = vmatmul.f32.gmra.mxu0 %v3480
    %v3482 = vpop.f32.mrf.mxu0
    %v3483 = vadd.f32 %v3426, %v3482
    %3484 = vdwg.mxu0
    %v3485 = vand.u32 %v2326, 4294901760
    %v3486 = vsub.f32 %v2326, %v3485
    %v3487 = vand.u32 %v3486, 4294901760
    %3488 = vmatpush.msra.mxu0 %v3487
    %v3489 = vand.u32 %v2325, 4294901760
    %v3490 = vsub.f32 %v2325, %v3489
    %v3491 = vand.u32 %v3490, 4294901760
    %3492 = vmatpush.msra.mxu0 %v3491
    %v3493 = vand.u32 %v2324, 4294901760
    %v3494 = vsub.f32 %v2324, %v3493
    %v3495 = vand.u32 %v3494, 4294901760
    %3496 = vmatpush.msra.mxu0 %v3495
    %v3497 = vand.u32 %v2323, 4294901760
    %v3498 = vsub.f32 %v2323, %v3497
    %v3499 = vand.u32 %v3498, 4294901760
    %3500 = vmatpush.msra.mxu0 %v3499
    %v3501 = vand.u32 %v2322, 4294901760
    %v3502 = vsub.f32 %v2322, %v3501
    %v3503 = vand.u32 %v3502, 4294901760
    %3504 = vmatpush.msra.mxu0 %v3503
    %v3505 = vand.u32 %v2321, 4294901760
    %v3506 = vsub.f32 %v2321, %v3505
    %v3507 = vand.u32 %v3506, 4294901760
    %3508 = vmatpush.msra.mxu0 %v3507
    %v3509 = vand.u32 %v2320, 4294901760
    %v3510 = vsub.f32 %v2320, %v3509
    %v3511 = vand.u32 %v3510, 4294901760
    %3512 = vmatpush.msra.mxu0 %v3511
    %v3513 = vand.u32 %v2319, 4294901760
    %v3514 = vsub.f32 %v2319, %v3513
    %v3515 = vand.u32 %v3514, 4294901760
    %3516 = vmatpush.msra.mxu0 %v3515
    %v3517 = vand.u32 %v2318, 4294901760
    %v3518 = vsub.f32 %v2318, %v3517
    %v3519 = vand.u32 %v3518, 4294901760
    %3520 = vmatpush.msra.mxu0 %v3519
    %v3521 = vand.u32 %v2317, 4294901760
    %v3522 = vsub.f32 %v2317, %v3521
    %v3523 = vand.u32 %v3522, 4294901760
    %3524 = vmatpush.msra.mxu0 %v3523
    %v3525 = vand.u32 %v2316, 4294901760
    %v3526 = vsub.f32 %v2316, %v3525
    %v3527 = vand.u32 %v3526, 4294901760
    %3528 = vmatpush.msra.mxu0 %v3527
    %v3529 = vand.u32 %v2315, 4294901760
    %v3530 = vsub.f32 %v2315, %v3529
    %v3531 = vand.u32 %v3530, 4294901760
    %3532 = vmatpush.msra.mxu0 %v3531
    %v3533 = vand.u32 %v2314, 4294901760
    %v3534 = vsub.f32 %v2314, %v3533
    %v3535 = vand.u32 %v3534, 4294901760
    %3536 = vmatpush.msra.mxu0 %v3535
    %v3537 = vand.u32 %v2313, 4294901760
    %v3538 = vsub.f32 %v2313, %v3537
    %v3539 = vand.u32 %v3538, 4294901760
    %3540 = vmatpush.msra.mxu0 %v3539
    %v3541 = vand.u32 %v2312, 4294901760
    %v3542 = vsub.f32 %v2312, %v3541
    %v3543 = vand.u32 %v3542, 4294901760
    %3544 = vmatpush.msra.mxu0 %v3543
    %v3545 = vand.u32 %v2311, 4294901760
    %v3546 = vsub.f32 %v2311, %v3545
    %v3547 = vand.u32 %v3546, 4294901760
    %3548 = vmatpush.msra.mxu0 %v3547
    %v3549 = vand.u32 %v2717, 4294901760
    %3550 = vmatmul.f32.gmra.mxu0 %v3549
    %v3551 = vpop.f32.mrf.mxu0
    %v3552 = vadd.f32 %v3465, %v3551
    %v3553 = vand.u32 %v2721, 4294901760
    %3554 = vmatmul.f32.gmra.mxu0 %v3553
    %v3555 = vpop.f32.mrf.mxu0
    %v3556 = vadd.f32 %v3471, %v3555
    %v3557 = vand.u32 %v2725, 4294901760
    %3558 = vmatmul.f32.gmra.mxu0 %v3557
    %v3559 = vpop.f32.mrf.mxu0
    %v3560 = vadd.f32 %v3477, %v3559
    %v3561 = vand.u32 %v2729, 4294901760
    %3562 = vmatmul.f32.gmra.mxu0 %v3561
    %v3563 = vpop.f32.mrf.mxu0
    %v3564 = vadd.f32 %v3483, %v3563
    %3565 = vdwg.mxu0
    %v3566 = vand.u32 %v2326, 4294901760
    %3567 = vmatpush.msra.mxu0 %v3566
    %v3568 = vand.u32 %v2325, 4294901760
    %3569 = vmatpush.msra.mxu0 %v3568
    %v3570 = vand.u32 %v2324, 4294901760
    %3571 = vmatpush.msra.mxu0 %v3570
    %v3572 = vand.u32 %v2323, 4294901760
    %3573 = vmatpush.msra.mxu0 %v3572
    %v3574 = vand.u32 %v2322, 4294901760
    %3575 = vmatpush.msra.mxu0 %v3574
    %v3576 = vand.u32 %v2321, 4294901760
    %3577 = vmatpush.msra.mxu0 %v3576
    %v3578 = vand.u32 %v2320, 4294901760
    %3579 = vmatpush.msra.mxu0 %v3578
    %v3580 = vand.u32 %v2319, 4294901760
    %3581 = vmatpush.msra.mxu0 %v3580
    %v3582 = vand.u32 %v2318, 4294901760
    %3583 = vmatpush.msra.mxu0 %v3582
    %v3584 = vand.u32 %v2317, 4294901760
    %3585 = vmatpush.msra.mxu0 %v3584
    %v3586 = vand.u32 %v2316, 4294901760
    %3587 = vmatpush.msra.mxu0 %v3586
    %v3588 = vand.u32 %v2315, 4294901760
    %3589 = vmatpush.msra.mxu0 %v3588
    %v3590 = vand.u32 %v2314, 4294901760
    %3591 = vmatpush.msra.mxu0 %v3590
    %v3592 = vand.u32 %v2313, 4294901760
    %3593 = vmatpush.msra.mxu0 %v3592
    %v3594 = vand.u32 %v2312, 4294901760
    %3595 = vmatpush.msra.mxu0 %v3594
    %v3596 = vand.u32 %v2311, 4294901760
    %3597 = vmatpush.msra.mxu0 %v3596
    %v3598 = vand.u32 %v2717, 4294901760
    %3599 = vmatmul.f32.gmra.mxu0 %v3598
    %v3600 = vpop.f32.mrf.mxu0
    %v3601 = vadd.f32 %v3552, %v3600
    %v3602 = vand.u32 %v2721, 4294901760
    %3603 = vmatmul.f32.gmra.mxu0 %v3602
    %v3604 = vpop.f32.mrf.mxu0
    %v3605 = vadd.f32 %v3556, %v3604
    %v3606 = vand.u32 %v2725, 4294901760
    %3607 = vmatmul.f32.gmra.mxu0 %v3606
    %v3608 = vpop.f32.mrf.mxu0
    %v3609 = vadd.f32 %v3560, %v3608
    %v3610 = vand.u32 %v2729, 4294901760
    %3611 = vmatmul.f32.gmra.mxu0 %v3610
    %v3612 = vpop.f32.mrf.mxu0
    %v3613 = vadd.f32 %v3564, %v3612
    %3614 = vdwg.mxu0
    %v3615 = vand.u32 %v2342, 4294901760
    %3616 = vmatpush.msra.mxu0 %v3615
    %v3617 = vand.u32 %v2341, 4294901760
    %3618 = vmatpush.msra.mxu0 %v3617
    %v3619 = vand.u32 %v2340, 4294901760
    %3620 = vmatpush.msra.mxu0 %v3619
    %v3621 = vand.u32 %v2339, 4294901760
    %3622 = vmatpush.msra.mxu0 %v3621
    %v3623 = vand.u32 %v2338, 4294901760
    %3624 = vmatpush.msra.mxu0 %v3623
    %v3625 = vand.u32 %v2337, 4294901760
    %3626 = vmatpush.msra.mxu0 %v3625
    %v3627 = vand.u32 %v2336, 4294901760
    %3628 = vmatpush.msra.mxu0 %v3627
    %v3629 = vand.u32 %v2335, 4294901760
    %3630 = vmatpush.msra.mxu0 %v3629
    %v3631 = vand.u32 %v2334, 4294901760
    %3632 = vmatpush.msra.mxu0 %v3631
    %v3633 = vand.u32 %v2333, 4294901760
    %3634 = vmatpush.msra.mxu0 %v3633
    %v3635 = vand.u32 %v2332, 4294901760
    %3636 = vmatpush.msra.mxu0 %v3635
    %v3637 = vand.u32 %v2331, 4294901760
    %3638 = vmatpush.msra.mxu0 %v3637
    %v3639 = vand.u32 %v2330, 4294901760
    %3640 = vmatpush.msra.mxu0 %v3639
    %v3641 = vand.u32 %v2329, 4294901760
    %3642 = vmatpush.msra.mxu0 %v3641
    %v3643 = vand.u32 %v2328, 4294901760
    %3644 = vmatpush.msra.mxu0 %v3643
    %v3645 = vand.u32 %v2327, 4294901760
    %3646 = vmatpush.msra.mxu0 %v3645
    %v3647 = vand.u32 %v2733, 4294901760
    %v3648 = vsub.f32 %v2733, %v3647
    %v3649 = vand.u32 %v3648, 4294901760
    %v3650 = vsub.f32 %v3648, %v3649
    %v3651 = vand.u32 %v3650, 4294901760
    %3652 = vmatmul.f32.gmra.mxu0 %v3651
    %v3653 = vpop.f32.mrf.mxu0
    %v3654 = vadd.f32 %v3601, %v3653
    %v3655 = vand.u32 %v2737, 4294901760
    %v3656 = vsub.f32 %v2737, %v3655
    %v3657 = vand.u32 %v3656, 4294901760
    %v3658 = vsub.f32 %v3656, %v3657
    %v3659 = vand.u32 %v3658, 4294901760
    %3660 = vmatmul.f32.gmra.mxu0 %v3659
    %v3661 = vpop.f32.mrf.mxu0
    %v3662 = vadd.f32 %v3605, %v3661
    %v3663 = vand.u32 %v2741, 4294901760
    %v3664 = vsub.f32 %v2741, %v3663
    %v3665 = vand.u32 %v3664, 4294901760
    %v3666 = vsub.f32 %v3664, %v3665
    %v3667 = vand.u32 %v3666, 4294901760
    %3668 = vmatmul.f32.gmra.mxu0 %v3667
    %v3669 = vpop.f32.mrf.mxu0
    %v3670 = vadd.f32 %v3609, %v3669
    %v3671 = vand.u32 %v2745, 4294901760
    %v3672 = vsub.f32 %v2745, %v3671
    %v3673 = vand.u32 %v3672, 4294901760
    %v3674 = vsub.f32 %v3672, %v3673
    %v3675 = vand.u32 %v3674, 4294901760
    %3676 = vmatmul.f32.gmra.mxu0 %v3675
    %v3677 = vpop.f32.mrf.mxu0
    %v3678 = vadd.f32 %v3613, %v3677
    %3679 = vdwg.mxu0
    %v3680 = vand.u32 %v2342, 4294901760
    %v3681 = vsub.f32 %v2342, %v3680
    %v3682 = vand.u32 %v3681, 4294901760
    %v3683 = vsub.f32 %v3681, %v3682
    %v3684 = vand.u32 %v3683, 4294901760
    %3685 = vmatpush.msra.mxu0 %v3684
    %v3686 = vand.u32 %v2341, 4294901760
    %v3687 = vsub.f32 %v2341, %v3686
    %v3688 = vand.u32 %v3687, 4294901760
    %v3689 = vsub.f32 %v3687, %v3688
    %v3690 = vand.u32 %v3689, 4294901760
    %3691 = vmatpush.msra.mxu0 %v3690
    %v3692 = vand.u32 %v2340, 4294901760
    %v3693 = vsub.f32 %v2340, %v3692
    %v3694 = vand.u32 %v3693, 4294901760
    %v3695 = vsub.f32 %v3693, %v3694
    %v3696 = vand.u32 %v3695, 4294901760
    %3697 = vmatpush.msra.mxu0 %v3696
    %v3698 = vand.u32 %v2339, 4294901760
    %v3699 = vsub.f32 %v2339, %v3698
    %v3700 = vand.u32 %v3699, 4294901760
    %v3701 = vsub.f32 %v3699, %v3700
    %v3702 = vand.u32 %v3701, 4294901760
    %3703 = vmatpush.msra.mxu0 %v3702
    %v3704 = vand.u32 %v2338, 4294901760
    %v3705 = vsub.f32 %v2338, %v3704
    %v3706 = vand.u32 %v3705, 4294901760
    %v3707 = vsub.f32 %v3705, %v3706
    %v3708 = vand.u32 %v3707, 4294901760
    %3709 = vmatpush.msra.mxu0 %v3708
    %v3710 = vand.u32 %v2337, 4294901760
    %v3711 = vsub.f32 %v2337, %v3710
    %v3712 = vand.u32 %v3711, 4294901760
    %v3713 = vsub.f32 %v3711, %v3712
    %v3714 = vand.u32 %v3713, 4294901760
    %3715 = vmatpush.msra.mxu0 %v3714
    %v3716 = vand.u32 %v2336, 4294901760
    %v3717 = vsub.f32 %v2336, %v3716
    %v3718 = vand.u32 %v3717, 4294901760
    %v3719 = vsub.f32 %v3717, %v3718
    %v3720 = vand.u32 %v3719, 4294901760
    %3721 = vmatpush.msra.mxu0 %v3720
    %v3722 = vand.u32 %v2335, 4294901760
    %v3723 = vsub.f32 %v2335, %v3722
    %v3724 = vand.u32 %v3723, 4294901760
    %v3725 = vsub.f32 %v3723, %v3724
    %v3726 = vand.u32 %v3725, 4294901760
    %3727 = vmatpush.msra.mxu0 %v3726
    %v3728 = vand.u32 %v2334, 4294901760
    %v3729 = vsub.f32 %v2334, %v3728
    %v3730 = vand.u32 %v3729, 4294901760
    %v3731 = vsub.f32 %v3729, %v3730
    %v3732 = vand.u32 %v3731, 4294901760
    %3733 = vmatpush.msra.mxu0 %v3732
    %v3734 = vand.u32 %v2333, 4294901760
    %v3735 = vsub.f32 %v2333, %v3734
    %v3736 = vand.u32 %v3735, 4294901760
    %v3737 = vsub.f32 %v3735, %v3736
    %v3738 = vand.u32 %v3737, 4294901760
    %3739 = vmatpush.msra.mxu0 %v3738
    %v3740 = vand.u32 %v2332, 4294901760
    %v3741 = vsub.f32 %v2332, %v3740
    %v3742 = vand.u32 %v3741, 4294901760
    %v3743 = vsub.f32 %v3741, %v3742
    %v3744 = vand.u32 %v3743, 4294901760
    %3745 = vmatpush.msra.mxu0 %v3744
    %v3746 = vand.u32 %v2331, 4294901760
    %v3747 = vsub.f32 %v2331, %v3746
    %v3748 = vand.u32 %v3747, 4294901760
    %v3749 = vsub.f32 %v3747, %v3748
    %v3750 = vand.u32 %v3749, 4294901760
    %3751 = vmatpush.msra.mxu0 %v3750
    %v3752 = vand.u32 %v2330, 4294901760
    %v3753 = vsub.f32 %v2330, %v3752
    %v3754 = vand.u32 %v3753, 4294901760
    %v3755 = vsub.f32 %v3753, %v3754
    %v3756 = vand.u32 %v3755, 4294901760
    %3757 = vmatpush.msra.mxu0 %v3756
    %v3758 = vand.u32 %v2329, 4294901760
    %v3759 = vsub.f32 %v2329, %v3758
    %v3760 = vand.u32 %v3759, 4294901760
    %v3761 = vsub.f32 %v3759, %v3760
    %v3762 = vand.u32 %v3761, 4294901760
    %3763 = vmatpush.msra.mxu0 %v3762
    %v3764 = vand.u32 %v2328, 4294901760
    %v3765 = vsub.f32 %v2328, %v3764
    %v3766 = vand.u32 %v3765, 4294901760
    %v3767 = vsub.f32 %v3765, %v3766
    %v3768 = vand.u32 %v3767, 4294901760
    %3769 = vmatpush.msra.mxu0 %v3768
    %v3770 = vand.u32 %v2327, 4294901760
    %v3771 = vsub.f32 %v2327, %v3770
    %v3772 = vand.u32 %v3771, 4294901760
    %v3773 = vsub.f32 %v3771, %v3772
    %v3774 = vand.u32 %v3773, 4294901760
    %3775 = vmatpush.msra.mxu0 %v3774
    %v3776 = vand.u32 %v2733, 4294901760
    %3777 = vmatmul.f32.gmra.mxu0 %v3776
    %v3778 = vpop.f32.mrf.mxu0
    %v3779 = vadd.f32 %v3654, %v3778
    %v3780 = vand.u32 %v2737, 4294901760
    %3781 = vmatmul.f32.gmra.mxu0 %v3780
    %v3782 = vpop.f32.mrf.mxu0
    %v3783 = vadd.f32 %v3662, %v3782
    %v3784 = vand.u32 %v2741, 4294901760
    %3785 = vmatmul.f32.gmra.mxu0 %v3784
    %v3786 = vpop.f32.mrf.mxu0
    %v3787 = vadd.f32 %v3670, %v3786
    %v3788 = vand.u32 %v2745, 4294901760
    %3789 = vmatmul.f32.gmra.mxu0 %v3788
    %v3790 = vpop.f32.mrf.mxu0
    %v3791 = vadd.f32 %v3678, %v3790
    %3792 = vdwg.mxu0
    %v3793 = vand.u32 %v2342, 4294901760
    %v3794 = vsub.f32 %v2342, %v3793
    %3795 = vmatpush.msra.mxu0 %v3794
    %v3796 = vand.u32 %v2341, 4294901760
    %v3797 = vsub.f32 %v2341, %v3796
    %3798 = vmatpush.msra.mxu0 %v3797
    %v3799 = vand.u32 %v2340, 4294901760
    %v3800 = vsub.f32 %v2340, %v3799
    %3801 = vmatpush.msra.mxu0 %v3800
    %v3802 = vand.u32 %v2339, 4294901760
    %v3803 = vsub.f32 %v2339, %v3802
    %3804 = vmatpush.msra.mxu0 %v3803
    %v3805 = vand.u32 %v2338, 4294901760
    %v3806 = vsub.f32 %v2338, %v3805
    %3807 = vmatpush.msra.mxu0 %v3806
    %v3808 = vand.u32 %v2337, 4294901760
    %v3809 = vsub.f32 %v2337, %v3808
    %3810 = vmatpush.msra.mxu0 %v3809
    %v3811 = vand.u32 %v2336, 4294901760
    %v3812 = vsub.f32 %v2336, %v3811
    %3813 = vmatpush.msra.mxu0 %v3812
    %v3814 = vand.u32 %v2335, 4294901760
    %v3815 = vsub.f32 %v2335, %v3814
    %3816 = vmatpush.msra.mxu0 %v3815
    %v3817 = vand.u32 %v2334, 4294901760
    %v3818 = vsub.f32 %v2334, %v3817
    %3819 = vmatpush.msra.mxu0 %v3818
    %v3820 = vand.u32 %v2333, 4294901760
    %v3821 = vsub.f32 %v2333, %v3820
    %3822 = vmatpush.msra.mxu0 %v3821
    %v3823 = vand.u32 %v2332, 4294901760
    %v3824 = vsub.f32 %v2332, %v3823
    %3825 = vmatpush.msra.mxu0 %v3824
    %v3826 = vand.u32 %v2331, 4294901760
    %v3827 = vsub.f32 %v2331, %v3826
    %3828 = vmatpush.msra.mxu0 %v3827
    %v3829 = vand.u32 %v2330, 4294901760
    %v3830 = vsub.f32 %v2330, %v3829
    %3831 = vmatpush.msra.mxu0 %v3830
    %v3832 = vand.u32 %v2329, 4294901760
    %v3833 = vsub.f32 %v2329, %v3832
    %3834 = vmatpush.msra.mxu0 %v3833
    %v3835 = vand.u32 %v2328, 4294901760
    %v3836 = vsub.f32 %v2328, %v3835
    %3837 = vmatpush.msra.mxu0 %v3836
    %v3838 = vand.u32 %v2327, 4294901760
    %v3839 = vsub.f32 %v2327, %v3838
    %3840 = vmatpush.msra.mxu0 %v3839
    %v3841 = vand.u32 %v2733, 4294901760
    %v3842 = vsub.f32 %v2733, %v3841
    %3843 = vmatmul.f32.gmra.mxu0 %v3842
    %v3844 = vpop.f32.mrf.mxu0
    %v3845 = vadd.f32 %v3779, %v3844
    %v3846 = vand.u32 %v2737, 4294901760
    %v3847 = vsub.f32 %v2737, %v3846
    %3848 = vmatmul.f32.gmra.mxu0 %v3847
    %v3849 = vpop.f32.mrf.mxu0
    %v3850 = vadd.f32 %v3783, %v3849
    %v3851 = vand.u32 %v2741, 4294901760
    %v3852 = vsub.f32 %v2741, %v3851
    %3853 = vmatmul.f32.gmra.mxu0 %v3852
    %v3854 = vpop.f32.mrf.mxu0
    %v3855 = vadd.f32 %v3787, %v3854
    %v3856 = vand.u32 %v2745, 4294901760
    %v3857 = vsub.f32 %v2745, %v3856
    %3858 = vmatmul.f32.gmra.mxu0 %v3857
    %v3859 = vpop.f32.mrf.mxu0
    %v3860 = vadd.f32 %v3791, %v3859
    %3861 = vdwg.mxu0
    %v3862 = vand.u32 %v2342, 4294901760
    %3863 = vmatpush.msra.mxu0 %v3862
    %v3864 = vand.u32 %v2341, 4294901760
    %3865 = vmatpush.msra.mxu0 %v3864
    %v3866 = vand.u32 %v2340, 4294901760
    %3867 = vmatpush.msra.mxu0 %v3866
    %v3868 = vand.u32 %v2339, 4294901760
    %3869 = vmatpush.msra.mxu0 %v3868
    %v3870 = vand.u32 %v2338, 4294901760
    %3871 = vmatpush.msra.mxu0 %v3870
    %v3872 = vand.u32 %v2337, 4294901760
    %3873 = vmatpush.msra.mxu0 %v3872
    %v3874 = vand.u32 %v2336, 4294901760
    %3875 = vmatpush.msra.mxu0 %v3874
    %v3876 = vand.u32 %v2335, 4294901760
    %3877 = vmatpush.msra.mxu0 %v3876
    %v3878 = vand.u32 %v2334, 4294901760
    %3879 = vmatpush.msra.mxu0 %v3878
    %v3880 = vand.u32 %v2333, 4294901760
    %3881 = vmatpush.msra.mxu0 %v3880
    %v3882 = vand.u32 %v2332, 4294901760
    %3883 = vmatpush.msra.mxu0 %v3882
    %v3884 = vand.u32 %v2331, 4294901760
    %3885 = vmatpush.msra.mxu0 %v3884
    %v3886 = vand.u32 %v2330, 4294901760
    %3887 = vmatpush.msra.mxu0 %v3886
    %v3888 = vand.u32 %v2329, 4294901760
    %3889 = vmatpush.msra.mxu0 %v3888
    %v3890 = vand.u32 %v2328, 4294901760
    %3891 = vmatpush.msra.mxu0 %v3890
    %v3892 = vand.u32 %v2327, 4294901760
    %3893 = vmatpush.msra.mxu0 %v3892
    %v3894 = vand.u32 %v2733, 4294901760
    %v3895 = vsub.f32 %v2733, %v3894
    %v3896 = vand.u32 %v3895, 4294901760
    %3897 = vmatmul.f32.gmra.mxu0 %v3896
    %v3898 = vpop.f32.mrf.mxu0
    %v3899 = vadd.f32 %v3845, %v3898
    %v3900 = vand.u32 %v2737, 4294901760
    %v3901 = vsub.f32 %v2737, %v3900
    %v3902 = vand.u32 %v3901, 4294901760
    %3903 = vmatmul.f32.gmra.mxu0 %v3902
    %v3904 = vpop.f32.mrf.mxu0
    %v3905 = vadd.f32 %v3850, %v3904
    %v3906 = vand.u32 %v2741, 4294901760
    %v3907 = vsub.f32 %v2741, %v3906
    %v3908 = vand.u32 %v3907, 4294901760
    %3909 = vmatmul.f32.gmra.mxu0 %v3908
    %v3910 = vpop.f32.mrf.mxu0
    %v3911 = vadd.f32 %v3855, %v3910
    %v3912 = vand.u32 %v2745, 4294901760
    %v3913 = vsub.f32 %v2745, %v3912
    %v3914 = vand.u32 %v3913, 4294901760
    %3915 = vmatmul.f32.gmra.mxu0 %v3914
    %v3916 = vpop.f32.mrf.mxu0
    %v3917 = vadd.f32 %v3860, %v3916
    %3918 = vdwg.mxu0
    %v3919 = vand.u32 %v2342, 4294901760
    %v3920 = vsub.f32 %v2342, %v3919
    %v3921 = vand.u32 %v3920, 4294901760
    %3922 = vmatpush.msra.mxu0 %v3921
    %v3923 = vand.u32 %v2341, 4294901760
    %v3924 = vsub.f32 %v2341, %v3923
    %v3925 = vand.u32 %v3924, 4294901760
    %3926 = vmatpush.msra.mxu0 %v3925
    %v3927 = vand.u32 %v2340, 4294901760
    %v3928 = vsub.f32 %v2340, %v3927
    %v3929 = vand.u32 %v3928, 4294901760
    %3930 = vmatpush.msra.mxu0 %v3929
    %v3931 = vand.u32 %v2339, 4294901760
    %v3932 = vsub.f32 %v2339, %v3931
    %v3933 = vand.u32 %v3932, 4294901760
    %3934 = vmatpush.msra.mxu0 %v3933
    %v3935 = vand.u32 %v2338, 4294901760
    %v3936 = vsub.f32 %v2338, %v3935
    %v3937 = vand.u32 %v3936, 4294901760
    %3938 = vmatpush.msra.mxu0 %v3937
    %v3939 = vand.u32 %v2337, 4294901760
    %v3940 = vsub.f32 %v2337, %v3939
    %v3941 = vand.u32 %v3940, 4294901760
    %3942 = vmatpush.msra.mxu0 %v3941
    %v3943 = vand.u32 %v2336, 4294901760
    %v3944 = vsub.f32 %v2336, %v3943
    %v3945 = vand.u32 %v3944, 4294901760
    %3946 = vmatpush.msra.mxu0 %v3945
    %v3947 = vand.u32 %v2335, 4294901760
    %v3948 = vsub.f32 %v2335, %v3947
    %v3949 = vand.u32 %v3948, 4294901760
    %3950 = vmatpush.msra.mxu0 %v3949
    %v3951 = vand.u32 %v2334, 4294901760
    %v3952 = vsub.f32 %v2334, %v3951
    %v3953 = vand.u32 %v3952, 4294901760
    %3954 = vmatpush.msra.mxu0 %v3953
    %v3955 = vand.u32 %v2333, 4294901760
    %v3956 = vsub.f32 %v2333, %v3955
    %v3957 = vand.u32 %v3956, 4294901760
    %3958 = vmatpush.msra.mxu0 %v3957
    %v3959 = vand.u32 %v2332, 4294901760
    %v3960 = vsub.f32 %v2332, %v3959
    %v3961 = vand.u32 %v3960, 4294901760
    %3962 = vmatpush.msra.mxu0 %v3961
    %v3963 = vand.u32 %v2331, 4294901760
    %v3964 = vsub.f32 %v2331, %v3963
    %v3965 = vand.u32 %v3964, 4294901760
    %3966 = vmatpush.msra.mxu0 %v3965
    %v3967 = vand.u32 %v2330, 4294901760
    %v3968 = vsub.f32 %v2330, %v3967
    %v3969 = vand.u32 %v3968, 4294901760
    %3970 = vmatpush.msra.mxu0 %v3969
    %v3971 = vand.u32 %v2329, 4294901760
    %v3972 = vsub.f32 %v2329, %v3971
    %v3973 = vand.u32 %v3972, 4294901760
    %3974 = vmatpush.msra.mxu0 %v3973
    %v3975 = vand.u32 %v2328, 4294901760
    %v3976 = vsub.f32 %v2328, %v3975
    %v3977 = vand.u32 %v3976, 4294901760
    %3978 = vmatpush.msra.mxu0 %v3977
    %v3979 = vand.u32 %v2327, 4294901760
    %v3980 = vsub.f32 %v2327, %v3979
    %v3981 = vand.u32 %v3980, 4294901760
    %3982 = vmatpush.msra.mxu0 %v3981
    %v3983 = vand.u32 %v2733, 4294901760
    %3984 = vmatmul.f32.gmra.mxu0 %v3983
    %v3985 = vpop.f32.mrf.mxu0
    %v3986 = vadd.f32 %v3899, %v3985
    %v3987 = vand.u32 %v2737, 4294901760
    %3988 = vmatmul.f32.gmra.mxu0 %v3987
    %v3989 = vpop.f32.mrf.mxu0
    %v3990 = vadd.f32 %v3905, %v3989
    %v3991 = vand.u32 %v2741, 4294901760
    %3992 = vmatmul.f32.gmra.mxu0 %v3991
    %v3993 = vpop.f32.mrf.mxu0
    %v3994 = vadd.f32 %v3911, %v3993
    %v3995 = vand.u32 %v2745, 4294901760
    %3996 = vmatmul.f32.gmra.mxu0 %v3995
    %v3997 = vpop.f32.mrf.mxu0
    %v3998 = vadd.f32 %v3917, %v3997
    %3999 = vdwg.mxu0
    %v4000 = vand.u32 %v2342, 4294901760
    %4001 = vmatpush.msra.mxu0 %v4000
    %v4002 = vand.u32 %v2341, 4294901760
    %4003 = vmatpush.msra.mxu0 %v4002
    %v4004 = vand.u32 %v2340, 4294901760
    %4005 = vmatpush.msra.mxu0 %v4004
    %v4006 = vand.u32 %v2339, 4294901760
    %4007 = vmatpush.msra.mxu0 %v4006
    %v4008 = vand.u32 %v2338, 4294901760
    %4009 = vmatpush.msra.mxu0 %v4008
    %v4010 = vand.u32 %v2337, 4294901760
    %4011 = vmatpush.msra.mxu0 %v4010
    %v4012 = vand.u32 %v2336, 4294901760
    %4013 = vmatpush.msra.mxu0 %v4012
    %v4014 = vand.u32 %v2335, 4294901760
    %4015 = vmatpush.msra.mxu0 %v4014
    %v4016 = vand.u32 %v2334, 4294901760
    %4017 = vmatpush.msra.mxu0 %v4016
    %v4018 = vand.u32 %v2333, 4294901760
    %4019 = vmatpush.msra.mxu0 %v4018
    %v4020 = vand.u32 %v2332, 4294901760
    %4021 = vmatpush.msra.mxu0 %v4020
    %v4022 = vand.u32 %v2331, 4294901760
    %4023 = vmatpush.msra.mxu0 %v4022
    %v4024 = vand.u32 %v2330, 4294901760
    %4025 = vmatpush.msra.mxu0 %v4024
    %v4026 = vand.u32 %v2329, 4294901760
    %4027 = vmatpush.msra.mxu0 %v4026
    %v4028 = vand.u32 %v2328, 4294901760
    %4029 = vmatpush.msra.mxu0 %v4028
    %v4030 = vand.u32 %v2327, 4294901760
    %4031 = vmatpush.msra.mxu0 %v4030
    %v4032 = vand.u32 %v2733, 4294901760
    %4033 = vmatmul.f32.gmra.mxu0 %v4032
    %v4034 = vpop.f32.mrf.mxu0
    %v4035 = vadd.f32 %v3986, %v4034
    %v4036 = vand.u32 %v2737, 4294901760
    %4037 = vmatmul.f32.gmra.mxu0 %v4036
    %v4038 = vpop.f32.mrf.mxu0
    %v4039 = vadd.f32 %v3990, %v4038
    %v4040 = vand.u32 %v2741, 4294901760
    %4041 = vmatmul.f32.gmra.mxu0 %v4040
    %v4042 = vpop.f32.mrf.mxu0
    %v4043 = vadd.f32 %v3994, %v4042
    %v4044 = vand.u32 %v2745, 4294901760
    %4045 = vmatmul.f32.gmra.mxu0 %v4044
    %v4046 = vpop.f32.mrf.mxu0
    %v4047 = vadd.f32 %v3998, %v4046
    %4048 = vdwg.mxu0
    %v4049 = vadd.f32 %v4035, %v4039
    %v4050 = vadd.f32 %v4049, %v4043
    %v4051 = vadd.f32 %v4050, %v4047
    %v4052 = vrot.slane %v4051, 4
    %v4053 = vadd.f32 %v4051, %v4052
    %v4054 = vrot.slane %v4053, 2
    %v4055 = vadd.f32 %v4053, %v4054
    %v4056 = vrot.slane %v4055, 1
    %v4057 = vadd.f32 %v4055, %v4056
    %v4058 = vmul.f32 %v4035, %v4035
    %v4059 = vmul.f32 %v4039, %v4039
    %v4060 = vmul.f32 %v4043, %v4043
    %v4061 = vmul.f32 %v4047, %v4047
    %v4062 = vadd.f32 %v4058, %v4059
    %v4063 = vadd.f32 %v4062, %v4060
    %v4064 = vadd.f32 %v4063, %v4061
    %v4065 = vrot.slane %v4064, 4
    %v4066 = vadd.f32 %v4064, %v4065
    %v4067 = vrot.slane %v4066, 2
    %v4068 = vadd.f32 %v4066, %v4067
    %v4069 = vrot.slane %v4068, 1
    %v4070 = vadd.f32 %v4068, %v4069
    %v4071 = vsel %vm1909, %v4057, %v4070
    %v4072 = vand.u32 %v103, 4294901760
    %4073 = vmatpush.msra.mxu0 %v4072
    %v4074 = vand.u32 %v102, 4294901760
    %4075 = vmatpush.msra.mxu0 %v4074
    %v4076 = vand.u32 %v101, 4294901760
    %4077 = vmatpush.msra.mxu0 %v4076
    %v4078 = vand.u32 %v100, 4294901760
    %4079 = vmatpush.msra.mxu0 %v4078
    %v4080 = vand.u32 %v99, 4294901760
    %4081 = vmatpush.msra.mxu0 %v4080
    %v4082 = vand.u32 %v98, 4294901760
    %4083 = vmatpush.msra.mxu0 %v4082
    %v4084 = vand.u32 %v97, 4294901760
    %4085 = vmatpush.msra.mxu0 %v4084
    %v4086 = vand.u32 %v96, 4294901760
    %4087 = vmatpush.msra.mxu0 %v4086
    %v4088 = vand.u32 %v95, 4294901760
    %4089 = vmatpush.msra.mxu0 %v4088
    %v4090 = vand.u32 %v94, 4294901760
    %4091 = vmatpush.msra.mxu0 %v4090
    %v4092 = vand.u32 %v93, 4294901760
    %4093 = vmatpush.msra.mxu0 %v4092
    %v4094 = vand.u32 %v92, 4294901760
    %4095 = vmatpush.msra.mxu0 %v4094
    %v4096 = vand.u32 %v91, 4294901760
    %4097 = vmatpush.msra.mxu0 %v4096
    %v4098 = vand.u32 %v90, 4294901760
    %4099 = vmatpush.msra.mxu0 %v4098
    %v4100 = vand.u32 %v89, 4294901760
    %4101 = vmatpush.msra.mxu0 %v4100
    %v4102 = vand.u32 %v88, 4294901760
    %4103 = vmatpush.msra.mxu0 %v4102
    %v4104 = vand.u32 %v4071, 4294901760
    %v4105 = vsub.f32 %v4071, %v4104
    %v4106 = vand.u32 %v4105, 4294901760
    %v4107 = vsub.f32 %v4105, %v4106
    %v4108 = vand.u32 %v4107, 4294901760
    %4109 = vmatmul.f32.gmra.mxu0 %v4108
    %v4110 = vpop.f32.mrf.mxu0
    %v4111 = vadd.f32 0.0, %v4110
    %4112 = vdwg.mxu0
    %v4113 = vand.u32 %v103, 4294901760
    %v4114 = vsub.f32 %v103, %v4113
    %v4115 = vand.u32 %v4114, 4294901760
    %v4116 = vsub.f32 %v4114, %v4115
    %v4117 = vand.u32 %v4116, 4294901760
    %4118 = vmatpush.msra.mxu0 %v4117
    %v4119 = vand.u32 %v102, 4294901760
    %v4120 = vsub.f32 %v102, %v4119
    %v4121 = vand.u32 %v4120, 4294901760
    %v4122 = vsub.f32 %v4120, %v4121
    %v4123 = vand.u32 %v4122, 4294901760
    %4124 = vmatpush.msra.mxu0 %v4123
    %v4125 = vand.u32 %v101, 4294901760
    %v4126 = vsub.f32 %v101, %v4125
    %v4127 = vand.u32 %v4126, 4294901760
    %v4128 = vsub.f32 %v4126, %v4127
    %v4129 = vand.u32 %v4128, 4294901760
    %4130 = vmatpush.msra.mxu0 %v4129
    %v4131 = vand.u32 %v100, 4294901760
    %v4132 = vsub.f32 %v100, %v4131
    %v4133 = vand.u32 %v4132, 4294901760
    %v4134 = vsub.f32 %v4132, %v4133
    %v4135 = vand.u32 %v4134, 4294901760
    %4136 = vmatpush.msra.mxu0 %v4135
    %v4137 = vand.u32 %v99, 4294901760
    %v4138 = vsub.f32 %v99, %v4137
    %v4139 = vand.u32 %v4138, 4294901760
    %v4140 = vsub.f32 %v4138, %v4139
    %v4141 = vand.u32 %v4140, 4294901760
    %4142 = vmatpush.msra.mxu0 %v4141
    %v4143 = vand.u32 %v98, 4294901760
    %v4144 = vsub.f32 %v98, %v4143
    %v4145 = vand.u32 %v4144, 4294901760
    %v4146 = vsub.f32 %v4144, %v4145
    %v4147 = vand.u32 %v4146, 4294901760
    %4148 = vmatpush.msra.mxu0 %v4147
    %v4149 = vand.u32 %v97, 4294901760
    %v4150 = vsub.f32 %v97, %v4149
    %v4151 = vand.u32 %v4150, 4294901760
    %v4152 = vsub.f32 %v4150, %v4151
    %v4153 = vand.u32 %v4152, 4294901760
    %4154 = vmatpush.msra.mxu0 %v4153
    %v4155 = vand.u32 %v96, 4294901760
    %v4156 = vsub.f32 %v96, %v4155
    %v4157 = vand.u32 %v4156, 4294901760
    %v4158 = vsub.f32 %v4156, %v4157
    %v4159 = vand.u32 %v4158, 4294901760
    %4160 = vmatpush.msra.mxu0 %v4159
    %v4161 = vand.u32 %v95, 4294901760
    %v4162 = vsub.f32 %v95, %v4161
    %v4163 = vand.u32 %v4162, 4294901760
    %v4164 = vsub.f32 %v4162, %v4163
    %v4165 = vand.u32 %v4164, 4294901760
    %4166 = vmatpush.msra.mxu0 %v4165
    %v4167 = vand.u32 %v94, 4294901760
    %v4168 = vsub.f32 %v94, %v4167
    %v4169 = vand.u32 %v4168, 4294901760
    %v4170 = vsub.f32 %v4168, %v4169
    %v4171 = vand.u32 %v4170, 4294901760
    %4172 = vmatpush.msra.mxu0 %v4171
    %v4173 = vand.u32 %v93, 4294901760
    %v4174 = vsub.f32 %v93, %v4173
    %v4175 = vand.u32 %v4174, 4294901760
    %v4176 = vsub.f32 %v4174, %v4175
    %v4177 = vand.u32 %v4176, 4294901760
    %4178 = vmatpush.msra.mxu0 %v4177
    %v4179 = vand.u32 %v92, 4294901760
    %v4180 = vsub.f32 %v92, %v4179
    %v4181 = vand.u32 %v4180, 4294901760
    %v4182 = vsub.f32 %v4180, %v4181
    %v4183 = vand.u32 %v4182, 4294901760
    %4184 = vmatpush.msra.mxu0 %v4183
    %v4185 = vand.u32 %v91, 4294901760
    %v4186 = vsub.f32 %v91, %v4185
    %v4187 = vand.u32 %v4186, 4294901760
    %v4188 = vsub.f32 %v4186, %v4187
    %v4189 = vand.u32 %v4188, 4294901760
    %4190 = vmatpush.msra.mxu0 %v4189
    %v4191 = vand.u32 %v90, 4294901760
    %v4192 = vsub.f32 %v90, %v4191
    %v4193 = vand.u32 %v4192, 4294901760
    %v4194 = vsub.f32 %v4192, %v4193
    %v4195 = vand.u32 %v4194, 4294901760
    %4196 = vmatpush.msra.mxu0 %v4195
    %v4197 = vand.u32 %v89, 4294901760
    %v4198 = vsub.f32 %v89, %v4197
    %v4199 = vand.u32 %v4198, 4294901760
    %v4200 = vsub.f32 %v4198, %v4199
    %v4201 = vand.u32 %v4200, 4294901760
    %4202 = vmatpush.msra.mxu0 %v4201
    %v4203 = vand.u32 %v88, 4294901760
    %v4204 = vsub.f32 %v88, %v4203
    %v4205 = vand.u32 %v4204, 4294901760
    %v4206 = vsub.f32 %v4204, %v4205
    %v4207 = vand.u32 %v4206, 4294901760
    %4208 = vmatpush.msra.mxu0 %v4207
    %v4209 = vand.u32 %v4071, 4294901760
    %4210 = vmatmul.f32.gmra.mxu0 %v4209
    %v4211 = vpop.f32.mrf.mxu0
    %v4212 = vadd.f32 %v4111, %v4211
    %4213 = vdwg.mxu0
    %v4214 = vand.u32 %v103, 4294901760
    %v4215 = vsub.f32 %v103, %v4214
    %4216 = vmatpush.msra.mxu0 %v4215
    %v4217 = vand.u32 %v102, 4294901760
    %v4218 = vsub.f32 %v102, %v4217
    %4219 = vmatpush.msra.mxu0 %v4218
    %v4220 = vand.u32 %v101, 4294901760
    %v4221 = vsub.f32 %v101, %v4220
    %4222 = vmatpush.msra.mxu0 %v4221
    %v4223 = vand.u32 %v100, 4294901760
    %v4224 = vsub.f32 %v100, %v4223
    %4225 = vmatpush.msra.mxu0 %v4224
    %v4226 = vand.u32 %v99, 4294901760
    %v4227 = vsub.f32 %v99, %v4226
    %4228 = vmatpush.msra.mxu0 %v4227
    %v4229 = vand.u32 %v98, 4294901760
    %v4230 = vsub.f32 %v98, %v4229
    %4231 = vmatpush.msra.mxu0 %v4230
    %v4232 = vand.u32 %v97, 4294901760
    %v4233 = vsub.f32 %v97, %v4232
    %4234 = vmatpush.msra.mxu0 %v4233
    %v4235 = vand.u32 %v96, 4294901760
    %v4236 = vsub.f32 %v96, %v4235
    %4237 = vmatpush.msra.mxu0 %v4236
    %v4238 = vand.u32 %v95, 4294901760
    %v4239 = vsub.f32 %v95, %v4238
    %4240 = vmatpush.msra.mxu0 %v4239
    %v4241 = vand.u32 %v94, 4294901760
    %v4242 = vsub.f32 %v94, %v4241
    %4243 = vmatpush.msra.mxu0 %v4242
    %v4244 = vand.u32 %v93, 4294901760
    %v4245 = vsub.f32 %v93, %v4244
    %4246 = vmatpush.msra.mxu0 %v4245
    %v4247 = vand.u32 %v92, 4294901760
    %v4248 = vsub.f32 %v92, %v4247
    %4249 = vmatpush.msra.mxu0 %v4248
    %v4250 = vand.u32 %v91, 4294901760
    %v4251 = vsub.f32 %v91, %v4250
    %4252 = vmatpush.msra.mxu0 %v4251
    %v4253 = vand.u32 %v90, 4294901760
    %v4254 = vsub.f32 %v90, %v4253
    %4255 = vmatpush.msra.mxu0 %v4254
    %v4256 = vand.u32 %v89, 4294901760
    %v4257 = vsub.f32 %v89, %v4256
    %4258 = vmatpush.msra.mxu0 %v4257
    %v4259 = vand.u32 %v88, 4294901760
    %v4260 = vsub.f32 %v88, %v4259
    %4261 = vmatpush.msra.mxu0 %v4260
    %v4262 = vand.u32 %v4071, 4294901760
    %v4263 = vsub.f32 %v4071, %v4262
    %4264 = vmatmul.f32.gmra.mxu0 %v4263
    %v4265 = vpop.f32.mrf.mxu0
    %v4266 = vadd.f32 %v4212, %v4265
    %4267 = vdwg.mxu0
    %v4268 = vand.u32 %v103, 4294901760
    %4269 = vmatpush.msra.mxu0 %v4268
    %v4270 = vand.u32 %v102, 4294901760
    %4271 = vmatpush.msra.mxu0 %v4270
    %v4272 = vand.u32 %v101, 4294901760
    %4273 = vmatpush.msra.mxu0 %v4272
    %v4274 = vand.u32 %v100, 4294901760
    %4275 = vmatpush.msra.mxu0 %v4274
    %v4276 = vand.u32 %v99, 4294901760
    %4277 = vmatpush.msra.mxu0 %v4276
    %v4278 = vand.u32 %v98, 4294901760
    %4279 = vmatpush.msra.mxu0 %v4278
    %v4280 = vand.u32 %v97, 4294901760
    %4281 = vmatpush.msra.mxu0 %v4280
    %v4282 = vand.u32 %v96, 4294901760
    %4283 = vmatpush.msra.mxu0 %v4282
    %v4284 = vand.u32 %v95, 4294901760
    %4285 = vmatpush.msra.mxu0 %v4284
    %v4286 = vand.u32 %v94, 4294901760
    %4287 = vmatpush.msra.mxu0 %v4286
    %v4288 = vand.u32 %v93, 4294901760
    %4289 = vmatpush.msra.mxu0 %v4288
    %v4290 = vand.u32 %v92, 4294901760
    %4291 = vmatpush.msra.mxu0 %v4290
    %v4292 = vand.u32 %v91, 4294901760
    %4293 = vmatpush.msra.mxu0 %v4292
    %v4294 = vand.u32 %v90, 4294901760
    %4295 = vmatpush.msra.mxu0 %v4294
    %v4296 = vand.u32 %v89, 4294901760
    %4297 = vmatpush.msra.mxu0 %v4296
    %v4298 = vand.u32 %v88, 4294901760
    %4299 = vmatpush.msra.mxu0 %v4298
    %v4300 = vand.u32 %v4071, 4294901760
    %v4301 = vsub.f32 %v4071, %v4300
    %v4302 = vand.u32 %v4301, 4294901760
    %4303 = vmatmul.f32.gmra.mxu0 %v4302
    %v4304 = vpop.f32.mrf.mxu0
    %v4305 = vadd.f32 %v4266, %v4304
    %4306 = vdwg.mxu0
    %v4307 = vand.u32 %v103, 4294901760
    %v4308 = vsub.f32 %v103, %v4307
    %v4309 = vand.u32 %v4308, 4294901760
    %4310 = vmatpush.msra.mxu0 %v4309
    %v4311 = vand.u32 %v102, 4294901760
    %v4312 = vsub.f32 %v102, %v4311
    %v4313 = vand.u32 %v4312, 4294901760
    %4314 = vmatpush.msra.mxu0 %v4313
    %v4315 = vand.u32 %v101, 4294901760
    %v4316 = vsub.f32 %v101, %v4315
    %v4317 = vand.u32 %v4316, 4294901760
    %4318 = vmatpush.msra.mxu0 %v4317
    %v4319 = vand.u32 %v100, 4294901760
    %v4320 = vsub.f32 %v100, %v4319
    %v4321 = vand.u32 %v4320, 4294901760
    %4322 = vmatpush.msra.mxu0 %v4321
    %v4323 = vand.u32 %v99, 4294901760
    %v4324 = vsub.f32 %v99, %v4323
    %v4325 = vand.u32 %v4324, 4294901760
    %4326 = vmatpush.msra.mxu0 %v4325
    %v4327 = vand.u32 %v98, 4294901760
    %v4328 = vsub.f32 %v98, %v4327
    %v4329 = vand.u32 %v4328, 4294901760
    %4330 = vmatpush.msra.mxu0 %v4329
    %v4331 = vand.u32 %v97, 4294901760
    %v4332 = vsub.f32 %v97, %v4331
    %v4333 = vand.u32 %v4332, 4294901760
    %4334 = vmatpush.msra.mxu0 %v4333
    %v4335 = vand.u32 %v96, 4294901760
    %v4336 = vsub.f32 %v96, %v4335
    %v4337 = vand.u32 %v4336, 4294901760
    %4338 = vmatpush.msra.mxu0 %v4337
    %v4339 = vand.u32 %v95, 4294901760
    %v4340 = vsub.f32 %v95, %v4339
    %v4341 = vand.u32 %v4340, 4294901760
    %4342 = vmatpush.msra.mxu0 %v4341
    %v4343 = vand.u32 %v94, 4294901760
    %v4344 = vsub.f32 %v94, %v4343
    %v4345 = vand.u32 %v4344, 4294901760
    %4346 = vmatpush.msra.mxu0 %v4345
    %v4347 = vand.u32 %v93, 4294901760
    %v4348 = vsub.f32 %v93, %v4347
    %v4349 = vand.u32 %v4348, 4294901760
    %4350 = vmatpush.msra.mxu0 %v4349
    %v4351 = vand.u32 %v92, 4294901760
    %v4352 = vsub.f32 %v92, %v4351
    %v4353 = vand.u32 %v4352, 4294901760
    %4354 = vmatpush.msra.mxu0 %v4353
    %v4355 = vand.u32 %v91, 4294901760
    %v4356 = vsub.f32 %v91, %v4355
    %v4357 = vand.u32 %v4356, 4294901760
    %4358 = vmatpush.msra.mxu0 %v4357
    %v4359 = vand.u32 %v90, 4294901760
    %v4360 = vsub.f32 %v90, %v4359
    %v4361 = vand.u32 %v4360, 4294901760
    %4362 = vmatpush.msra.mxu0 %v4361
    %v4363 = vand.u32 %v89, 4294901760
    %v4364 = vsub.f32 %v89, %v4363
    %v4365 = vand.u32 %v4364, 4294901760
    %4366 = vmatpush.msra.mxu0 %v4365
    %v4367 = vand.u32 %v88, 4294901760
    %v4368 = vsub.f32 %v88, %v4367
    %v4369 = vand.u32 %v4368, 4294901760
    %4370 = vmatpush.msra.mxu0 %v4369
    %v4371 = vand.u32 %v4071, 4294901760
    %4372 = vmatmul.f32.gmra.mxu0 %v4371
    %v4373 = vpop.f32.mrf.mxu0
    %v4374 = vadd.f32 %v4305, %v4373
    %4375 = vdwg.mxu0
    %v4376 = vand.u32 %v103, 4294901760
    %4377 = vmatpush.msra.mxu0 %v4376
    %v4378 = vand.u32 %v102, 4294901760
    %4379 = vmatpush.msra.mxu0 %v4378
    %v4380 = vand.u32 %v101, 4294901760
    %4381 = vmatpush.msra.mxu0 %v4380
    %v4382 = vand.u32 %v100, 4294901760
    %4383 = vmatpush.msra.mxu0 %v4382
    %v4384 = vand.u32 %v99, 4294901760
    %4385 = vmatpush.msra.mxu0 %v4384
    %v4386 = vand.u32 %v98, 4294901760
    %4387 = vmatpush.msra.mxu0 %v4386
    %v4388 = vand.u32 %v97, 4294901760
    %4389 = vmatpush.msra.mxu0 %v4388
    %v4390 = vand.u32 %v96, 4294901760
    %4391 = vmatpush.msra.mxu0 %v4390
    %v4392 = vand.u32 %v95, 4294901760
    %4393 = vmatpush.msra.mxu0 %v4392
    %v4394 = vand.u32 %v94, 4294901760
    %4395 = vmatpush.msra.mxu0 %v4394
    %v4396 = vand.u32 %v93, 4294901760
    %4397 = vmatpush.msra.mxu0 %v4396
    %v4398 = vand.u32 %v92, 4294901760
    %4399 = vmatpush.msra.mxu0 %v4398
    %v4400 = vand.u32 %v91, 4294901760
    %4401 = vmatpush.msra.mxu0 %v4400
    %v4402 = vand.u32 %v90, 4294901760
    %4403 = vmatpush.msra.mxu0 %v4402
    %v4404 = vand.u32 %v89, 4294901760
    %4405 = vmatpush.msra.mxu0 %v4404
    %v4406 = vand.u32 %v88, 4294901760
    %4407 = vmatpush.msra.mxu0 %v4406
    %v4408 = vand.u32 %v4071, 4294901760
    %4409 = vmatmul.f32.gmra.mxu0 %v4408
    %v4410 = vpop.f32.mrf.mxu0
    %v4411 = vadd.f32 %v4374, %v4410
    %4412 = vdwg.mxu0
    %v4413 = vmul.f32 %v4411, %v4411
    %v4415 = vrot.slane %v4413, 7
    %v4417 = vsub.f32 %v4411, %v4415
    %v4418 = vmax.f32 %v4417, 0.0
    %v4419 = vadd.f32 %v4418, 1e-05
    %v4420 = vrsqrt.pop %v4419
    %v4421 = vmul.f32 %v4420, %v4419
    %v4422 = vmul.f32 %v4421, %v4420
    %v4423 = vmul.f32 0.5, %v4422
    %v4424 = vsub.f32 1.5, %v4423
    %v4425 = vmul.f32 %v4420, %v4424
    %vm4426 = vweird.f32 %v4419
    %vm4427 = vweird.f32 %v4420
    %vm4428 = vmor %vm4426, %vm4427
    %v4429 = vsel %vm4428, %v4420, %v4425
    %4431 = vst [vmem:[#allocation1] sm:$0xff] %v4429
    %s4432 = scalar_lea.vmem [#allocation1], 1
    %v4433 = vld [vmem:[%s4432] ss:$9 sm:$0xff]
    %v4435 = vmul.f32 %v2343, %v4433
    %v4436 = vmul.f32 %v4411, %v4435
    %v4437 = vsub.f32 %v2344, %v4436
    %v4439 = vperm.slane %v4435, 0
    %v4441 = vmul.f32 %v4035, %v4439
    %v4442 = vmul.f32 %v4039, %v4439
    %v4443 = vmul.f32 %v4043, %v4439
    %v4444 = vmul.f32 %v4047, %v4439
    %v4446 = vperm.slane %v4437, 0
    %v4448 = vadd.f32 %v4441, %v4446
    %v4449 = vadd.f32 %v4442, %v4446
    %v4450 = vadd.f32 %v4443, %v4446
    %v4451 = vadd.f32 %v4444, %v4446
    %v4452 = vmax.f32 %v4448, 0.0
    %v4453 = vmax.f32 %v4449, 0.0
    %v4454 = vmax.f32 %v4450, 0.0
    %v4455 = vmax.f32 %v4451, 0.0
    %4456 = vst [vmem:[#allocation8] sm:$0xff] %v4452
    %4457 = vst [vmem:[#allocation8 + $0x8] sm:$0xff] %v4453
    %4458 = vst [vmem:[#allocation8 + $0x10] sm:$0xff] %v4454
    %4459 = vst [vmem:[#allocation8 + $0x18] sm:$0xff] %v4455
    // Predicated region
    $region50: #{tpu_custom_call.1} parent=1 // pred_check
      _
    $region51: #{tpu_custom_call.1} parent=1 // pred_check_branch
      %4461 = sbr.rel (0) target = $region53
    $region52: #{tpu_custom_call.1} parent=1 // pred_region
      %4463 = vsyncadd [#allocation4], 0
      %s4464 = sshll.u32 [#allocation8], 4
      %s4465 = int_to_ptr.vmem [resolvable:$true] %s4464
      %s4466 = sshll.u32 %s9, 4
      %s4467 = int_to_ptr.hbm [resolvable:$true] %s4466
      %4472 = dma.vmem_to_hbm [thread:$0]  %s4465, 512, %s4467, [#allocation4], 128, 128, 8
    $region53: #{tpu_custom_call.1} parent=1 // pred_fallthru
      _
    // Predicated region
    $region54: #{tpu_custom_call.1} parent=1 // pred_check
      _
    $region55: #{tpu_custom_call.1} parent=1 // pred_check_branch
      %4474 = sbr.rel (0) target = $region57
    $region56: #{tpu_custom_call.1} parent=1 // pred_region
      %4476 = dma.done [#allocation4], 512
    $region57: #{tpu_custom_call.1} parent=1 // pred_fallthru
      _
    %4477 = vsyncpa [#allocation3], 1
    %4478 = vsyncpa [#allocation6], 1
    %4479 = vsyncpa [#allocation4], 1

</llo_original>
